<compile_context>
chip_gen: v7x
topology: tpu7x:2x2x1
jax: 0.10.0
libtpu: 0.0.40
codegen_flags: <defaults>
</compile_context>

<pallas_src>
import functools

import jax
import jax.numpy as jnp
from jax.experimental import pallas as pl
from jax.experimental.pallas import tpu as pltpu  # noqa: F401  (TPU backend)

EPS = 1e-5  # PyTorch BatchNorm1d default eps


# --------------------------------- kernel ------------------------------------

def fused_forward_kernel(nb_layers, seq_len, batch, hc, nb_patches, *refs):
    """Entire LSTMJigsaw forward in one kernel invocation (no grid).

    Ref order (inputs, then output):
      x        : (T*B, C*F)          time-major rows; channel mean folded into w1
      w1, s1   : (C*F, H), (1, H)    fc1 (+bn1) folded weight / shift
      per layer l: wih_l (H, 8*Hc), whh_l (2*Hc, 8*Hc) block-diag, b_l (1, 8*Hc)
      w2, s2   : (Hc, H), (1, H)     fc2 (+bn2) folded weight / shift
      w3, b3   : (P*H, NC), (1, NC)  fc3
      out      : (B // P, NC)
    """
    T, B, L, P = seq_len, batch, nb_layers, nb_patches
    H = 2 * hc          # hidden_size == bidirectional output width
    G = 8 * hc          # fused gate width (4 gates x 2 directions)
    f32 = jnp.float32

    x_ref, w1_ref, s1_ref = refs[0], refs[1], refs[2]
    lstm_refs = refs[3:3 + 3 * L]
    w2_ref, s2_ref, w3_ref, b3_ref, out_ref = refs[3 + 3 * L:]

    # Per-lane direction mask, built once.
    # Gate layout: [i_f i_b | f_f f_b | g_f g_b | o_f o_b].
    lane = jax.lax.broadcasted_iota(jnp.int32, (B, G), 1)
    fwd_lanes = (lane % H) < hc            # fwd-direction half of each gate block

    # ---- feature stage: mean over C + fc1 + bn1(eval) + tanh (all folded) ----
    seq = jnp.tanh(
        jnp.dot(x_ref[...], w1_ref[...], preferred_element_type=f32)
        + s1_ref[...])                                                # (T*B, H)

    # ---- stacked bidirectional LSTM ------------------------------------------
    last_fwd = None   # fwd hidden at time T-1 of the last layer
    last_bwd = None   # bwd hidden at time T-1 of the last layer (its 1st step)
    for l in range(L):
        wih = lstm_refs[3 * l][...]
        whh = lstm_refs[3 * l + 1][...]
        b = lstm_refs[3 * l + 2][...]
        is_last_layer = (l == L - 1)

        # Hoisted input projection: ONE 128-lane matmul for all T steps and
        # both directions.
        xg = jnp.dot(seq, wih, preferred_element_type=f32) + b        # (T*B, G)

        h = jnp.zeros((B, H), f32)        # [h_fwd | h_bwd]
        c = jnp.zeros((B, H), f32)        # [c_fwd | c_bwd]
        fwd_outs = [None] * T
        bwd_outs = [None] * T
        for s in range(T):                # static unroll (T small) -> static slices
            r = T - 1 - s                 # backward direction processes time r
            x_s = jnp.where(fwd_lanes,
                            xg[s * B:(s + 1) * B, :],
                            xg[r * B:(r + 1) * B, :])                 # (B, G)
            gates = x_s + jnp.dot(h, whh, preferred_element_type=f32)  # (B, G)
            i_g = jax.nn.sigmoid(gates[:, 0 * H:1 * H])
            f_g = jax.nn.sigmoid(gates[:, 1 * H:2 * H])
            g_g = jnp.tanh(gates[:, 2 * H:3 * H])
            o_g = jax.nn.sigmoid(gates[:, 3 * H:4 * H])
            c = f_g * c + i_g * g_g
            h = o_g * jnp.tanh(c)
            if is_last_layer:
                if s == 0:
                    last_bwd = h[:, hc:H]          # bwd output at time T-1
                if s == T - 1:
                    last_fwd = h[:, 0:hc]          # fwd output at time T-1
            else:
                fwd_outs[s] = h[:, 0:hc]           # fwd hidden @ time s
                bwd_outs[r] = h[:, hc:H]           # bwd hidden @ time r

        if not is_last_layer:
            # Re-assemble the layer output sequence (next layer's input) as a
            # value: time-major rows, columns [fwd | bwd].  Stays in vregs/VMEM.
            seq = jnp.concatenate(
                [jnp.concatenate([fwd_outs[t], bwd_outs[t]], axis=1)
                 for t in range(T)], axis=0)                           # (T*B, H)

    # ---- head: last_state = fwd_last + bwd_last; fc2 + bn2(eval) + relu ------
    last = last_fwd + last_bwd                                         # (B, Hc)
    h2 = jnp.maximum(
        jnp.dot(last, w2_ref[...], preferred_element_type=f32) + s2_ref[...],
        0.0)                                                           # (B, H)

    # ---- SiameseConcatView(P): (B, H) -> (B/P, P*H), then fc3 ----------------
    cat = jnp.concatenate(
        [jnp.concatenate([h2[j * P + p:j * P + p + 1, :] for p in range(P)],
                         axis=1)
         for j in range(B // P)], axis=0)                              # (B/P, P*H)
    out_ref[...] = (jnp.dot(cat, w3_ref[...], preferred_element_type=f32)
                    + b3_ref[...])


# ------------------------------ forward wrapper -------------------------------

def lstm_jigsaw_forward(x, prep, *, nb_layers, nb_patches):
    """Full LSTMJigsaw.forward as a single fused Pallas kernel call."""
    B, C, F, T = x.shape
    hc = prep["w2"].shape[0]
    nc = prep["w3"].shape[1]
    assert B % nb_patches == 0

    # 'b c f t' -> time-major rows '(t b) (c f)'; channel mean is folded into w1.
    x_tm = jnp.transpose(x, (3, 0, 1, 2)).reshape(T * B, C * F).astype(jnp.float32)

    args = [x_tm, prep["w1"], prep["s1"]]
    for l in range(nb_layers):
        args += [prep["wih"][l], prep["whh"][l], prep["b"][l]]
    args += [prep["w2"], prep["s2"], prep["w3"], prep["b3"]]

    kernel = functools.partial(fused_forward_kernel, nb_layers, T, B, hc, nb_patches)
    # Gridless call: every operand is a whole-array VMEM block (default specs);
    # the only HBM write is the (B/P, n_classes) result.
    return pl.pallas_call(
        kernel,
        out_shape=jax.ShapeDtypeStruct((B // nb_patches, nc), jnp.float32),
    )(*args)


# -------------------------------- parameters ----------------------------------

def init_params(key, n_mels, hidden, nb_layers, nb_patches, nb_classes):
    """Synthetic parameters mirroring the PyTorch module (weights stored as (in, out))."""
    hc = hidden // 2
    keys = iter(jax.random.split(key, 128))

    def rnd(shape, scale=0.1):
        return scale * jax.random.normal(next(keys), shape, dtype=jnp.float32)

    params = {
        "w1": rnd((n_mels, hidden)), "b1": rnd((1, hidden)),
        "g1": 1.0 + rnd((1, hidden)), "beta1": rnd((1, hidden)),
        "mu1": jnp.zeros((1, hidden), jnp.float32), "var1": jnp.ones((1, hidden), jnp.float32),
        "w2": rnd((hc, hidden)), "b2": rnd((1, hidden)),
        "g2": 1.0 + rnd((1, hidden)), "beta2": rnd((1, hidden)),
        "mu2": jnp.zeros((1, hidden), jnp.float32), "var2": jnp.ones((1, hidden), jnp.float32),
        "w3": rnd((hidden * nb_patches, nb_classes)), "b3": rnd((1, nb_classes)),
        "lstm": [],
    }
    for _ in range(nb_layers):
        din = hidden  # bidirectional: every layer's input width is 2*hc == hidden
        params["lstm"].append({
            # b_* holds b_ih + b_hh combined (PyTorch keeps them separate; sum is equivalent)
            "wih_f": rnd((din, 4 * hc)), "whh_f": rnd((hc, 4 * hc)), "b_f": rnd((1, 4 * hc)),
            "wih_b": rnd((din, 4 * hc)), "whh_b": rnd((hc, 4 * hc)), "b_b": rnd((1, 4 * hc)),
        })
    return params


def prepare_params(params, n_channels):
    """One-time host-side folding/fusing of parameters for the fused kernel."""
    hc = params["w2"].shape[0]

    def fold_linear_bn(w, b, g, beta, mu, var):
        scale = g / jnp.sqrt(var + EPS)                       # (1, H)
        return w * scale, (b - mu) * scale + beta

    def interleave_gates(mf, mb):  # per-gate [fwd | bwd] column layout, gates i,f,g,o
        parts = []
        for k in range(4):
            parts.append(mf[:, k * hc:(k + 1) * hc])
            parts.append(mb[:, k * hc:(k + 1) * hc])
        return jnp.concatenate(parts, axis=1)

    # fc1: fold channel mean (tile / C) and bn1(eval) into one weight + shift.
    w1m = jnp.tile(params["w1"], (n_channels, 1)) / n_channels
    w1, s1 = fold_linear_bn(w1m, params["b1"], params["g1"], params["beta1"],
                            params["mu1"], params["var1"])
    # fc2 + bn2(eval).
    w2, s2 = fold_linear_bn(params["w2"], params["b2"], params["g2"], params["beta2"],
                            params["mu2"], params["var2"])

    wih, whh, bias = [], [], []
    for lw in params["lstm"]:
        wih.append(interleave_gates(lw["wih_f"], lw["wih_b"]))
        bias.append(interleave_gates(lw["b_f"], lw["b_b"]))
        whh_l = jnp.zeros((2 * hc, 8 * hc), jnp.float32)      # block-diagonal per direction
        for k in range(4):
            whh_l = whh_l.at[:hc, k * 2 * hc:k * 2 * hc + hc].set(
                lw["whh_f"][:, k * hc:(k + 1) * hc])
            whh_l = whh_l.at[hc:, k * 2 * hc + hc:(k + 1) * 2 * hc].set(
                lw["whh_b"][:, k * hc:(k + 1) * hc])
        whh.append(whh_l)

    return {"w1": w1, "s1": s1, "wih": wih, "whh": whh, "b": bias,
            "w2": w2, "s2": s2, "w3": params["w3"], "b3": params["b3"]}


# ----------------------------------- main --------------------------------------

if __name__ == "__main__":
    hparams = {
        "dims": (4, 16, 8),
        "n_mels": 16,
        "hidden_size": 32,
        "nb_layers": 2,
        "nb_patches": 2,
        "nb_classes": 6,
    }
    B, C, F, T = 4, 4, hparams["n_mels"], 8   # B divisible by nb_patches

    key = jax.random.PRNGKey(0)
    kx, kp = jax.random.split(key)
    x = jax.random.normal(kx, (B, C, F, T), dtype=jnp.float32)
    raw = init_params(kp, hparams["n_mels"], hparams["hidden_size"],
                      hparams["nb_layers"], hparams["nb_patches"], hparams["nb_classes"])
    prep = prepare_params(raw, C)   # folded/fused once, outside the jitted forward

    fwd_fn = jax.jit(functools.partial(lstm_jigsaw_forward,
                                       nb_layers=hparams["nb_layers"],
                                       nb_patches=hparams["nb_patches"]))
    out = fwd_fn(x, prep)
    jax.block_until_ready(out)

    assert out.shape == (B // hparams["nb_patches"], hparams["nb_classes"]), out.shape
    assert bool(jnp.all(jnp.isfinite(out)))
    print("KERNEL_OK")
</pallas_src>

<mosaic_0001>
module attributes {stable_mosaic.version = 11 : i64} {
  func.func @fused_forward_kernel(%arg0: memref<32x64xf32, #tpu.memory_space<vmem>>, %arg1: memref<64x32xf32, #tpu.memory_space<vmem>>, %arg2: memref<1x32xf32, #tpu.memory_space<vmem>>, %arg3: memref<32x128xf32, #tpu.memory_space<vmem>>, %arg4: memref<32x128xf32, #tpu.memory_space<vmem>>, %arg5: memref<1x128xf32, #tpu.memory_space<vmem>>, %arg6: memref<32x128xf32, #tpu.memory_space<vmem>>, %arg7: memref<32x128xf32, #tpu.memory_space<vmem>>, %arg8: memref<1x128xf32, #tpu.memory_space<vmem>>, %arg9: memref<16x32xf32, #tpu.memory_space<vmem>>, %arg10: memref<1x32xf32, #tpu.memory_space<vmem>>, %arg11: memref<64x6xf32, #tpu.memory_space<vmem>>, %arg12: memref<1x6xf32, #tpu.memory_space<vmem>>, %arg13: memref<2x6xf32, #tpu.memory_space<vmem>>) attributes {dimension_semantics = [], scalar_prefetch = 0 : i64, scratch_operands = 0 : i64, tpu.core_type = #tpu.core_type<tc>} {
    %0 = tpu.iota {dimensions = array<i32: 1>} : vector<4x128xi32>
    %c32_i32 = arith.constant 32 : i32
    %c0_i32 = arith.constant 0 : i32
    %1 = arith.cmpi eq, %c32_i32, %c0_i32 : i32
    %c1_i32 = arith.constant 1 : i32
    %2 = arith.select %1, %c1_i32, %c32_i32 : i32
    %3 = vector.broadcast %2 : i32 to vector<4x128xi32>
    %4 = arith.remsi %0, %3 : vector<4x128xi32>
    %c0_i32_0 = arith.constant 0 : i32
    %5 = vector.broadcast %c0_i32_0 : i32 to vector<4x128xi32>
    %6 = arith.cmpi ne, %4, %5 : vector<4x128xi32>
    %c0_i32_1 = arith.constant 0 : i32
    %7 = vector.broadcast %c0_i32_1 : i32 to vector<4x128xi32>
    %8 = arith.cmpi slt, %4, %7 : vector<4x128xi32>
    %c0_i32_2 = arith.constant 0 : i32
    %9 = arith.cmpi slt, %2, %c0_i32_2 : i32
    %10 = vector.broadcast %9 : i1 to vector<4x128xi1>
    %11 = vector.broadcast %10 : vector<4x128xi1> to vector<4x128xi1>
    %12 = arith.xori %8, %11 : vector<4x128xi1>
    %13 = arith.andi %12, %6 : vector<4x128xi1>
    %14 = vector.broadcast %2 : i32 to vector<4x128xi32>
    %15 = arith.addi %4, %14 : vector<4x128xi32>
    %16 = arith.select %13, %15, %4 : vector<4x128xi1>, vector<4x128xi32>
    %c16_i32 = arith.constant 16 : i32
    %17 = vector.broadcast %c16_i32 : i32 to vector<4x128xi32>
    %18 = arith.cmpi slt, %16, %17 : vector<4x128xi32>
    %c0 = arith.constant 0 : index
    %c0_3 = arith.constant 0 : index
    %19 = vector.load %arg0[%c0, %c0_3] : memref<32x64xf32, #tpu.memory_space<vmem>>, vector<32x64xf32>
    %c0_4 = arith.constant 0 : index
    %c0_5 = arith.constant 0 : index
    %20 = vector.load %arg1[%c0_4, %c0_5] : memref<64x32xf32, #tpu.memory_space<vmem>>, vector<64x32xf32>
    %cst = arith.constant dense<0.000000e+00> : vector<32x32xf32>
    %21 = tpu.matmul %19, %20, %cst {dimension_numbers = #tpu.dot_dimension_numbers<[1], [0], [0], [1], [0, 0, 1, 1], [], []>} : vector<32x64xf32>, vector<64x32xf32>, vector<32x32xf32> -> vector<32x32xf32>
    %c0_6 = arith.constant 0 : index
    %c0_7 = arith.constant 0 : index
    %22 = vector.load %arg2[%c0_6, %c0_7] : memref<1x32xf32, #tpu.memory_space<vmem>>, vector<1x32xf32>
    %23 = vector.broadcast %22 : vector<1x32xf32> to vector<32x32xf32>
    %24 = arith.addf %21, %23 : vector<32x32xf32>
    %25 = math.tanh %24 : vector<32x32xf32>
    %c0_8 = arith.constant 0 : index
    %c0_9 = arith.constant 0 : index
    %26 = vector.load %arg3[%c0_8, %c0_9] : memref<32x128xf32, #tpu.memory_space<vmem>>, vector<32x128xf32>
    %c0_10 = arith.constant 0 : index
    %c0_11 = arith.constant 0 : index
    %27 = vector.load %arg4[%c0_10, %c0_11] : memref<32x128xf32, #tpu.memory_space<vmem>>, vector<32x128xf32>
    %c0_12 = arith.constant 0 : index
    %c0_13 = arith.constant 0 : index
    %28 = vector.load %arg5[%c0_12, %c0_13] : memref<1x128xf32, #tpu.memory_space<vmem>>, vector<1x128xf32>
    %cst_14 = arith.constant dense<0.000000e+00> : vector<32x128xf32>
    %29 = tpu.matmul %25, %26, %cst_14 {dimension_numbers = #tpu.dot_dimension_numbers<[1], [0], [0], [1], [0, 0, 1, 1], [], []>} : vector<32x32xf32>, vector<32x128xf32>, vector<32x128xf32> -> vector<32x128xf32>
    %30 = vector.broadcast %28 : vector<1x128xf32> to vector<32x128xf32>
    %31 = arith.addf %29, %30 : vector<32x128xf32>
    %cst_15 = arith.constant 0.000000e+00 : f32
    %32 = vector.broadcast %cst_15 : f32 to vector<4x32xf32>
    %cst_16 = arith.constant 0.000000e+00 : f32
    %33 = vector.broadcast %cst_16 : f32 to vector<4x32xf32>
    %34 = vector.extract_strided_slice %31 {offsets = [0, 0], sizes = [4, 128], strides = [1, 1]} : vector<32x128xf32> to vector<4x128xf32>
    %35 = vector.extract_strided_slice %31 {offsets = [28, 0], sizes = [4, 128], strides = [1, 1]} : vector<32x128xf32> to vector<4x128xf32>
    %36 = arith.select %18, %34, %35 : vector<4x128xi1>, vector<4x128xf32>
    %cst_17 = arith.constant dense<0.000000e+00> : vector<4x128xf32>
    %37 = tpu.matmul %32, %27, %cst_17 {dimension_numbers = #tpu.dot_dimension_numbers<[1], [0], [0], [1], [0, 0, 1, 1], [], []>} : vector<4x32xf32>, vector<32x128xf32>, vector<4x128xf32> -> vector<4x128xf32>
    %38 = arith.addf %36, %37 : vector<4x128xf32>
    %39 = vector.extract_strided_slice %38 {offsets = [0, 0], sizes = [4, 32], strides = [1, 1]} : vector<4x128xf32> to vector<4x32xf32>
    %40 = arith.negf %39 : vector<4x32xf32>
    %41 = math.exp %40 : vector<4x32xf32>
    %cst_18 = arith.constant 1.000000e+00 : f32
    %42 = vector.broadcast %cst_18 : f32 to vector<4x32xf32>
    %43 = arith.addf %42, %41 : vector<4x32xf32>
    %44 = arith.divf %42, %43 : vector<4x32xf32>
    %45 = vector.extract_strided_slice %38 {offsets = [0, 32], sizes = [4, 32], strides = [1, 1]} : vector<4x128xf32> to vector<4x32xf32>
    %46 = arith.negf %45 : vector<4x32xf32>
    %47 = math.exp %46 : vector<4x32xf32>
    %cst_19 = arith.constant 1.000000e+00 : f32
    %48 = vector.broadcast %cst_19 : f32 to vector<4x32xf32>
    %49 = arith.addf %48, %47 : vector<4x32xf32>
    %50 = arith.divf %48, %49 : vector<4x32xf32>
    %51 = vector.extract_strided_slice %38 {offsets = [0, 64], sizes = [4, 32], strides = [1, 1]} : vector<4x128xf32> to vector<4x32xf32>
    %52 = math.tanh %51 : vector<4x32xf32>
    %53 = vector.extract_strided_slice %38 {offsets = [0, 96], sizes = [4, 32], strides = [1, 1]} : vector<4x128xf32> to vector<4x32xf32>
    %54 = arith.negf %53 : vector<4x32xf32>
    %55 = math.exp %54 : vector<4x32xf32>
    %cst_20 = arith.constant 1.000000e+00 : f32
    %56 = vector.broadcast %cst_20 : f32 to vector<4x32xf32>
    %57 = arith.addf %56, %55 : vector<4x32xf32>
    %58 = arith.divf %56, %57 : vector<4x32xf32>
    %59 = arith.mulf %50, %33 : vector<4x32xf32>
    %60 = arith.mulf %44, %52 : vector<4x32xf32>
    %61 = arith.addf %59, %60 : vector<4x32xf32>
    %62 = math.tanh %61 : vector<4x32xf32>
    %63 = arith.mulf %58, %62 : vector<4x32xf32>
    %64 = vector.extract_strided_slice %63 {offsets = [0, 0], sizes = [4, 16], strides = [1, 1]} : vector<4x32xf32> to vector<4x16xf32>
    %65 = vector.extract_strided_slice %63 {offsets = [0, 16], sizes = [4, 16], strides = [1, 1]} : vector<4x32xf32> to vector<4x16xf32>
    %66 = vector.extract_strided_slice %31 {offsets = [4, 0], sizes = [4, 128], strides = [1, 1]} : vector<32x128xf32> to vector<4x128xf32>
    %67 = vector.extract_strided_slice %31 {offsets = [24, 0], sizes = [4, 128], strides = [1, 1]} : vector<32x128xf32> to vector<4x128xf32>
    %68 = arith.select %18, %66, %67 : vector<4x128xi1>, vector<4x128xf32>
    %cst_21 = arith.constant dense<0.000000e+00> : vector<4x128xf32>
    %69 = tpu.matmul %63, %27, %cst_21 {dimension_numbers = #tpu.dot_dimension_numbers<[1], [0], [0], [1], [0, 0, 1, 1], [], []>} : vector<4x32xf32>, vector<32x128xf32>, vector<4x128xf32> -> vector<4x128xf32>
    %70 = arith.addf %68, %69 : vector<4x128xf32>
    %71 = vector.extract_strided_slice %70 {offsets = [0, 0], sizes = [4, 32], strides = [1, 1]} : vector<4x128xf32> to vector<4x32xf32>
    %72 = arith.negf %71 : vector<4x32xf32>
    %73 = math.exp %72 : vector<4x32xf32>
    %cst_22 = arith.constant 1.000000e+00 : f32
    %74 = vector.broadcast %cst_22 : f32 to vector<4x32xf32>
    %75 = arith.addf %74, %73 : vector<4x32xf32>
    %76 = arith.divf %74, %75 : vector<4x32xf32>
    %77 = vector.extract_strided_slice %70 {offsets = [0, 32], sizes = [4, 32], strides = [1, 1]} : vector<4x128xf32> to vector<4x32xf32>
    %78 = arith.negf %77 : vector<4x32xf32>
    %79 = math.exp %78 : vector<4x32xf32>
    %cst_23 = arith.constant 1.000000e+00 : f32
    %80 = vector.broadcast %cst_23 : f32 to vector<4x32xf32>
    %81 = arith.addf %80, %79 : vector<4x32xf32>
    %82 = arith.divf %80, %81 : vector<4x32xf32>
    %83 = vector.extract_strided_slice %70 {offsets = [0, 64], sizes = [4, 32], strides = [1, 1]} : vector<4x128xf32> to vector<4x32xf32>
    %84 = math.tanh %83 : vector<4x32xf32>
    %85 = vector.extract_strided_slice %70 {offsets = [0, 96], sizes = [4, 32], strides = [1, 1]} : vector<4x128xf32> to vector<4x32xf32>
    %86 = arith.negf %85 : vector<4x32xf32>
    %87 = math.exp %86 : vector<4x32xf32>
    %cst_24 = arith.constant 1.000000e+00 : f32
    %88 = vector.broadcast %cst_24 : f32 to vector<4x32xf32>
    %89 = arith.addf %88, %87 : vector<4x32xf32>
    %90 = arith.divf %88, %89 : vector<4x32xf32>
    %91 = arith.mulf %82, %61 : vector<4x32xf32>
    %92 = arith.mulf %76, %84 : vector<4x32xf32>
    %93 = arith.addf %91, %92 : vector<4x32xf32>
    %94 = math.tanh %93 : vector<4x32xf32>
    %95 = arith.mulf %90, %94 : vector<4x32xf32>
    %96 = vector.extract_strided_slice %95 {offsets = [0, 0], sizes = [4, 16], strides = [1, 1]} : vector<4x32xf32> to vector<4x16xf32>
    %97 = vector.extract_strided_slice %95 {offsets = [0, 16], sizes = [4, 16], strides = [1, 1]} : vector<4x32xf32> to vector<4x16xf32>
    %98 = vector.extract_strided_slice %31 {offsets = [8, 0], sizes = [4, 128], strides = [1, 1]} : vector<32x128xf32> to vector<4x128xf32>
    %99 = vector.extract_strided_slice %31 {offsets = [20, 0], sizes = [4, 128], strides = [1, 1]} : vector<32x128xf32> to vector<4x128xf32>
    %100 = arith.select %18, %98, %99 : vector<4x128xi1>, vector<4x128xf32>
    %cst_25 = arith.constant dense<0.000000e+00> : vector<4x128xf32>
    %101 = tpu.matmul %95, %27, %cst_25 {dimension_numbers = #tpu.dot_dimension_numbers<[1], [0], [0], [1], [0, 0, 1, 1], [], []>} : vector<4x32xf32>, vector<32x128xf32>, vector<4x128xf32> -> vector<4x128xf32>
    %102 = arith.addf %100, %101 : vector<4x128xf32>
    %103 = vector.extract_strided_slice %102 {offsets = [0, 0], sizes = [4, 32], strides = [1, 1]} : vector<4x128xf32> to vector<4x32xf32>
    %104 = arith.negf %103 : vector<4x32xf32>
    %105 = math.exp %104 : vector<4x32xf32>
    %cst_26 = arith.constant 1.000000e+00 : f32
    %106 = vector.broadcast %cst_26 : f32 to vector<4x32xf32>
    %107 = arith.addf %106, %105 : vector<4x32xf32>
    %108 = arith.divf %106, %107 : vector<4x32xf32>
    %109 = vector.extract_strided_slice %102 {offsets = [0, 32], sizes = [4, 32], strides = [1, 1]} : vector<4x128xf32> to vector<4x32xf32>
    %110 = arith.negf %109 : vector<4x32xf32>
    %111 = math.exp %110 : vector<4x32xf32>
    %cst_27 = arith.constant 1.000000e+00 : f32
    %112 = vector.broadcast %cst_27 : f32 to vector<4x32xf32>
    %113 = arith.addf %112, %111 : vector<4x32xf32>
    %114 = arith.divf %112, %113 : vector<4x32xf32>
    %115 = vector.extract_strided_slice %102 {offsets = [0, 64], sizes = [4, 32], strides = [1, 1]} : vector<4x128xf32> to vector<4x32xf32>
    %116 = math.tanh %115 : vector<4x32xf32>
    %117 = vector.extract_strided_slice %102 {offsets = [0, 96], sizes = [4, 32], strides = [1, 1]} : vector<4x128xf32> to vector<4x32xf32>
    %118 = arith.negf %117 : vector<4x32xf32>
    %119 = math.exp %118 : vector<4x32xf32>
    %cst_28 = arith.constant 1.000000e+00 : f32
    %120 = vector.broadcast %cst_28 : f32 to vector<4x32xf32>
    %121 = arith.addf %120, %119 : vector<4x32xf32>
    %122 = arith.divf %120, %121 : vector<4x32xf32>
    %123 = arith.mulf %114, %93 : vector<4x32xf32>
    %124 = arith.mulf %108, %116 : vector<4x32xf32>
    %125 = arith.addf %123, %124 : vector<4x32xf32>
    %126 = math.tanh %125 : vector<4x32xf32>
    %127 = arith.mulf %122, %126 : vector<4x32xf32>
    %128 = vector.extract_strided_slice %127 {offsets = [0, 0], sizes = [4, 16], strides = [1, 1]} : vector<4x32xf32> to vector<4x16xf32>
    %129 = vector.extract_strided_slice %127 {offsets = [0, 16], sizes = [4, 16], strides = [1, 1]} : vector<4x32xf32> to vector<4x16xf32>
    %130 = vector.extract_strided_slice %31 {offsets = [12, 0], sizes = [4, 128], strides = [1, 1]} : vector<32x128xf32> to vector<4x128xf32>
    %131 = vector.extract_strided_slice %31 {offsets = [16, 0], sizes = [4, 128], strides = [1, 1]} : vector<32x128xf32> to vector<4x128xf32>
    %132 = arith.select %18, %130, %131 : vector<4x128xi1>, vector<4x128xf32>
    %cst_29 = arith.constant dense<0.000000e+00> : vector<4x128xf32>
    %133 = tpu.matmul %127, %27, %cst_29 {dimension_numbers = #tpu.dot_dimension_numbers<[1], [0], [0], [1], [0, 0, 1, 1], [], []>} : vector<4x32xf32>, vector<32x128xf32>, vector<4x128xf32> -> vector<4x128xf32>
    %134 = arith.addf %132, %133 : vector<4x128xf32>
    %135 = vector.extract_strided_slice %134 {offsets = [0, 0], sizes = [4, 32], strides = [1, 1]} : vector<4x128xf32> to vector<4x32xf32>
    %136 = arith.negf %135 : vector<4x32xf32>
    %137 = math.exp %136 : vector<4x32xf32>
    %cst_30 = arith.constant 1.000000e+00 : f32
    %138 = vector.broadcast %cst_30 : f32 to vector<4x32xf32>
    %139 = arith.addf %138, %137 : vector<4x32xf32>
    %140 = arith.divf %138, %139 : vector<4x32xf32>
    %141 = vector.extract_strided_slice %134 {offsets = [0, 32], sizes = [4, 32], strides = [1, 1]} : vector<4x128xf32> to vector<4x32xf32>
    %142 = arith.negf %141 : vector<4x32xf32>
    %143 = math.exp %142 : vector<4x32xf32>
    %cst_31 = arith.constant 1.000000e+00 : f32
    %144 = vector.broadcast %cst_31 : f32 to vector<4x32xf32>
    %145 = arith.addf %144, %143 : vector<4x32xf32>
    %146 = arith.divf %144, %145 : vector<4x32xf32>
    %147 = vector.extract_strided_slice %134 {offsets = [0, 64], sizes = [4, 32], strides = [1, 1]} : vector<4x128xf32> to vector<4x32xf32>
    %148 = math.tanh %147 : vector<4x32xf32>
    %149 = vector.extract_strided_slice %134 {offsets = [0, 96], sizes = [4, 32], strides = [1, 1]} : vector<4x128xf32> to vector<4x32xf32>
    %150 = arith.negf %149 : vector<4x32xf32>
    %151 = math.exp %150 : vector<4x32xf32>
    %cst_32 = arith.constant 1.000000e+00 : f32
    %152 = vector.broadcast %cst_32 : f32 to vector<4x32xf32>
    %153 = arith.addf %152, %151 : vector<4x32xf32>
    %154 = arith.divf %152, %153 : vector<4x32xf32>
    %155 = arith.mulf %146, %125 : vector<4x32xf32>
    %156 = arith.mulf %140, %148 : vector<4x32xf32>
    %157 = arith.addf %155, %156 : vector<4x32xf32>
    %158 = math.tanh %157 : vector<4x32xf32>
    %159 = arith.mulf %154, %158 : vector<4x32xf32>
    %160 = vector.extract_strided_slice %159 {offsets = [0, 0], sizes = [4, 16], strides = [1, 1]} : vector<4x32xf32> to vector<4x16xf32>
    %161 = vector.extract_strided_slice %159 {offsets = [0, 16], sizes = [4, 16], strides = [1, 1]} : vector<4x32xf32> to vector<4x16xf32>
    %162 = vector.extract_strided_slice %31 {offsets = [16, 0], sizes = [4, 128], strides = [1, 1]} : vector<32x128xf32> to vector<4x128xf32>
    %163 = vector.extract_strided_slice %31 {offsets = [12, 0], sizes = [4, 128], strides = [1, 1]} : vector<32x128xf32> to vector<4x128xf32>
    %164 = arith.select %18, %162, %163 : vector<4x128xi1>, vector<4x128xf32>
    %cst_33 = arith.constant dense<0.000000e+00> : vector<4x128xf32>
    %165 = tpu.matmul %159, %27, %cst_33 {dimension_numbers = #tpu.dot_dimension_numbers<[1], [0], [0], [1], [0, 0, 1, 1], [], []>} : vector<4x32xf32>, vector<32x128xf32>, vector<4x128xf32> -> vector<4x128xf32>
    %166 = arith.addf %164, %165 : vector<4x128xf32>
    %167 = vector.extract_strided_slice %166 {offsets = [0, 0], sizes = [4, 32], strides = [1, 1]} : vector<4x128xf32> to vector<4x32xf32>
    %168 = arith.negf %167 : vector<4x32xf32>
    %169 = math.exp %168 : vector<4x32xf32>
    %cst_34 = arith.constant 1.000000e+00 : f32
    %170 = vector.broadcast %cst_34 : f32 to vector<4x32xf32>
    %171 = arith.addf %170, %169 : vector<4x32xf32>
    %172 = arith.divf %170, %171 : vector<4x32xf32>
    %173 = vector.extract_strided_slice %166 {offsets = [0, 32], sizes = [4, 32], strides = [1, 1]} : vector<4x128xf32> to vector<4x32xf32>
    %174 = arith.negf %173 : vector<4x32xf32>
    %175 = math.exp %174 : vector<4x32xf32>
    %cst_35 = arith.constant 1.000000e+00 : f32
    %176 = vector.broadcast %cst_35 : f32 to vector<4x32xf32>
    %177 = arith.addf %176, %175 : vector<4x32xf32>
    %178 = arith.divf %176, %177 : vector<4x32xf32>
    %179 = vector.extract_strided_slice %166 {offsets = [0, 64], sizes = [4, 32], strides = [1, 1]} : vector<4x128xf32> to vector<4x32xf32>
    %180 = math.tanh %179 : vector<4x32xf32>
    %181 = vector.extract_strided_slice %166 {offsets = [0, 96], sizes = [4, 32], strides = [1, 1]} : vector<4x128xf32> to vector<4x32xf32>
    %182 = arith.negf %181 : vector<4x32xf32>
    %183 = math.exp %182 : vector<4x32xf32>
    %cst_36 = arith.constant 1.000000e+00 : f32
    %184 = vector.broadcast %cst_36 : f32 to vector<4x32xf32>
    %185 = arith.addf %184, %183 : vector<4x32xf32>
    %186 = arith.divf %184, %185 : vector<4x32xf32>
    %187 = arith.mulf %178, %157 : vector<4x32xf32>
    %188 = arith.mulf %172, %180 : vector<4x32xf32>
    %189 = arith.addf %187, %188 : vector<4x32xf32>
    %190 = math.tanh %189 : vector<4x32xf32>
    %191 = arith.mulf %186, %190 : vector<4x32xf32>
    %192 = vector.extract_strided_slice %191 {offsets = [0, 0], sizes = [4, 16], strides = [1, 1]} : vector<4x32xf32> to vector<4x16xf32>
    %193 = vector.extract_strided_slice %191 {offsets = [0, 16], sizes = [4, 16], strides = [1, 1]} : vector<4x32xf32> to vector<4x16xf32>
    %194 = vector.extract_strided_slice %31 {offsets = [20, 0], sizes = [4, 128], strides = [1, 1]} : vector<32x128xf32> to vector<4x128xf32>
    %195 = vector.extract_strided_slice %31 {offsets = [8, 0], sizes = [4, 128], strides = [1, 1]} : vector<32x128xf32> to vector<4x128xf32>
    %196 = arith.select %18, %194, %195 : vector<4x128xi1>, vector<4x128xf32>
    %cst_37 = arith.constant dense<0.000000e+00> : vector<4x128xf32>
    %197 = tpu.matmul %191, %27, %cst_37 {dimension_numbers = #tpu.dot_dimension_numbers<[1], [0], [0], [1], [0, 0, 1, 1], [], []>} : vector<4x32xf32>, vector<32x128xf32>, vector<4x128xf32> -> vector<4x128xf32>
    %198 = arith.addf %196, %197 : vector<4x128xf32>
    %199 = vector.extract_strided_slice %198 {offsets = [0, 0], sizes = [4, 32], strides = [1, 1]} : vector<4x128xf32> to vector<4x32xf32>
    %200 = arith.negf %199 : vector<4x32xf32>
    %201 = math.exp %200 : vector<4x32xf32>
    %cst_38 = arith.constant 1.000000e+00 : f32
    %202 = vector.broadcast %cst_38 : f32 to vector<4x32xf32>
    %203 = arith.addf %202, %201 : vector<4x32xf32>
    %204 = arith.divf %202, %203 : vector<4x32xf32>
    %205 = vector.extract_strided_slice %198 {offsets = [0, 32], sizes = [4, 32], strides = [1, 1]} : vector<4x128xf32> to vector<4x32xf32>
    %206 = arith.negf %205 : vector<4x32xf32>
    %207 = math.exp %206 : vector<4x32xf32>
    %cst_39 = arith.constant 1.000000e+00 : f32
    %208 = vector.broadcast %cst_39 : f32 to vector<4x32xf32>
    %209 = arith.addf %208, %207 : vector<4x32xf32>
    %210 = arith.divf %208, %209 : vector<4x32xf32>
    %211 = vector.extract_strided_slice %198 {offsets = [0, 64], sizes = [4, 32], strides = [1, 1]} : vector<4x128xf32> to vector<4x32xf32>
    %212 = math.tanh %211 : vector<4x32xf32>
    %213 = vector.extract_strided_slice %198 {offsets = [0, 96], sizes = [4, 32], strides = [1, 1]} : vector<4x128xf32> to vector<4x32xf32>
    %214 = arith.negf %213 : vector<4x32xf32>
    %215 = math.exp %214 : vector<4x32xf32>
    %cst_40 = arith.constant 1.000000e+00 : f32
    %216 = vector.broadcast %cst_40 : f32 to vector<4x32xf32>
    %217 = arith.addf %216, %215 : vector<4x32xf32>
    %218 = arith.divf %216, %217 : vector<4x32xf32>
    %219 = arith.mulf %210, %189 : vector<4x32xf32>
    %220 = arith.mulf %204, %212 : vector<4x32xf32>
    %221 = arith.addf %219, %220 : vector<4x32xf32>
    %222 = math.tanh %221 : vector<4x32xf32>
    %223 = arith.mulf %218, %222 : vector<4x32xf32>
    %224 = vector.extract_strided_slice %223 {offsets = [0, 0], sizes = [4, 16], strides = [1, 1]} : vector<4x32xf32> to vector<4x16xf32>
    %225 = vector.extract_strided_slice %223 {offsets = [0, 16], sizes = [4, 16], strides = [1, 1]} : vector<4x32xf32> to vector<4x16xf32>
    %226 = vector.extract_strided_slice %31 {offsets = [24, 0], sizes = [4, 128], strides = [1, 1]} : vector<32x128xf32> to vector<4x128xf32>
    %227 = vector.extract_strided_slice %31 {offsets = [4, 0], sizes = [4, 128], strides = [1, 1]} : vector<32x128xf32> to vector<4x128xf32>
    %228 = arith.select %18, %226, %227 : vector<4x128xi1>, vector<4x128xf32>
    %cst_41 = arith.constant dense<0.000000e+00> : vector<4x128xf32>
    %229 = tpu.matmul %223, %27, %cst_41 {dimension_numbers = #tpu.dot_dimension_numbers<[1], [0], [0], [1], [0, 0, 1, 1], [], []>} : vector<4x32xf32>, vector<32x128xf32>, vector<4x128xf32> -> vector<4x128xf32>
    %230 = arith.addf %228, %229 : vector<4x128xf32>
    %231 = vector.extract_strided_slice %230 {offsets = [0, 0], sizes = [4, 32], strides = [1, 1]} : vector<4x128xf32> to vector<4x32xf32>
    %232 = arith.negf %231 : vector<4x32xf32>
    %233 = math.exp %232 : vector<4x32xf32>
    %cst_42 = arith.constant 1.000000e+00 : f32
    %234 = vector.broadcast %cst_42 : f32 to vector<4x32xf32>
    %235 = arith.addf %234, %233 : vector<4x32xf32>
    %236 = arith.divf %234, %235 : vector<4x32xf32>
    %237 = vector.extract_strided_slice %230 {offsets = [0, 32], sizes = [4, 32], strides = [1, 1]} : vector<4x128xf32> to vector<4x32xf32>
    %238 = arith.negf %237 : vector<4x32xf32>
    %239 = math.exp %238 : vector<4x32xf32>
    %cst_43 = arith.constant 1.000000e+00 : f32
    %240 = vector.broadcast %cst_43 : f32 to vector<4x32xf32>
    %241 = arith.addf %240, %239 : vector<4x32xf32>
    %242 = arith.divf %240, %241 : vector<4x32xf32>
    %243 = vector.extract_strided_slice %230 {offsets = [0, 64], sizes = [4, 32], strides = [1, 1]} : vector<4x128xf32> to vector<4x32xf32>
    %244 = math.tanh %243 : vector<4x32xf32>
    %245 = vector.extract_strided_slice %230 {offsets = [0, 96], sizes = [4, 32], strides = [1, 1]} : vector<4x128xf32> to vector<4x32xf32>
    %246 = arith.negf %245 : vector<4x32xf32>
    %247 = math.exp %246 : vector<4x32xf32>
    %cst_44 = arith.constant 1.000000e+00 : f32
    %248 = vector.broadcast %cst_44 : f32 to vector<4x32xf32>
    %249 = arith.addf %248, %247 : vector<4x32xf32>
    %250 = arith.divf %248, %249 : vector<4x32xf32>
    %251 = arith.mulf %242, %221 : vector<4x32xf32>
    %252 = arith.mulf %236, %244 : vector<4x32xf32>
    %253 = arith.addf %251, %252 : vector<4x32xf32>
    %254 = math.tanh %253 : vector<4x32xf32>
    %255 = arith.mulf %250, %254 : vector<4x32xf32>
    %256 = vector.extract_strided_slice %255 {offsets = [0, 0], sizes = [4, 16], strides = [1, 1]} : vector<4x32xf32> to vector<4x16xf32>
    %257 = vector.extract_strided_slice %255 {offsets = [0, 16], sizes = [4, 16], strides = [1, 1]} : vector<4x32xf32> to vector<4x16xf32>
    %258 = vector.extract_strided_slice %31 {offsets = [28, 0], sizes = [4, 128], strides = [1, 1]} : vector<32x128xf32> to vector<4x128xf32>
    %259 = vector.extract_strided_slice %31 {offsets = [0, 0], sizes = [4, 128], strides = [1, 1]} : vector<32x128xf32> to vector<4x128xf32>
    %260 = arith.select %18, %258, %259 : vector<4x128xi1>, vector<4x128xf32>
    %cst_45 = arith.constant dense<0.000000e+00> : vector<4x128xf32>
    %261 = tpu.matmul %255, %27, %cst_45 {dimension_numbers = #tpu.dot_dimension_numbers<[1], [0], [0], [1], [0, 0, 1, 1], [], []>} : vector<4x32xf32>, vector<32x128xf32>, vector<4x128xf32> -> vector<4x128xf32>
    %262 = arith.addf %260, %261 : vector<4x128xf32>
    %263 = vector.extract_strided_slice %262 {offsets = [0, 0], sizes = [4, 32], strides = [1, 1]} : vector<4x128xf32> to vector<4x32xf32>
    %264 = arith.negf %263 : vector<4x32xf32>
    %265 = math.exp %264 : vector<4x32xf32>
    %cst_46 = arith.constant 1.000000e+00 : f32
    %266 = vector.broadcast %cst_46 : f32 to vector<4x32xf32>
    %267 = arith.addf %266, %265 : vector<4x32xf32>
    %268 = arith.divf %266, %267 : vector<4x32xf32>
    %269 = vector.extract_strided_slice %262 {offsets = [0, 32], sizes = [4, 32], strides = [1, 1]} : vector<4x128xf32> to vector<4x32xf32>
    %270 = arith.negf %269 : vector<4x32xf32>
    %271 = math.exp %270 : vector<4x32xf32>
    %cst_47 = arith.constant 1.000000e+00 : f32
    %272 = vector.broadcast %cst_47 : f32 to vector<4x32xf32>
    %273 = arith.addf %272, %271 : vector<4x32xf32>
    %274 = arith.divf %272, %273 : vector<4x32xf32>
    %275 = vector.extract_strided_slice %262 {offsets = [0, 64], sizes = [4, 32], strides = [1, 1]} : vector<4x128xf32> to vector<4x32xf32>
    %276 = math.tanh %275 : vector<4x32xf32>
    %277 = vector.extract_strided_slice %262 {offsets = [0, 96], sizes = [4, 32], strides = [1, 1]} : vector<4x128xf32> to vector<4x32xf32>
    %278 = arith.negf %277 : vector<4x32xf32>
    %279 = math.exp %278 : vector<4x32xf32>
    %cst_48 = arith.constant 1.000000e+00 : f32
    %280 = vector.broadcast %cst_48 : f32 to vector<4x32xf32>
    %281 = arith.addf %280, %279 : vector<4x32xf32>
    %282 = arith.divf %280, %281 : vector<4x32xf32>
    %283 = arith.mulf %274, %253 : vector<4x32xf32>
    %284 = arith.mulf %268, %276 : vector<4x32xf32>
    %285 = arith.addf %283, %284 : vector<4x32xf32>
    %286 = math.tanh %285 : vector<4x32xf32>
    %287 = arith.mulf %282, %286 : vector<4x32xf32>
    %288 = vector.extract_strided_slice %287 {offsets = [0, 0], sizes = [4, 16], strides = [1, 1]} : vector<4x32xf32> to vector<4x16xf32>
    %289 = vector.extract_strided_slice %287 {offsets = [0, 16], sizes = [4, 16], strides = [1, 1]} : vector<4x32xf32> to vector<4x16xf32>
    %290 = tpu.concatenate %64, %289 in 1 : vector<4x16xf32>, vector<4x16xf32> -> vector<4x32xf32>
    %291 = tpu.concatenate %96, %257 in 1 : vector<4x16xf32>, vector<4x16xf32> -> vector<4x32xf32>
    %292 = tpu.concatenate %128, %225 in 1 : vector<4x16xf32>, vector<4x16xf32> -> vector<4x32xf32>
    %293 = tpu.concatenate %160, %193 in 1 : vector<4x16xf32>, vector<4x16xf32> -> vector<4x32xf32>
    %294 = tpu.concatenate %192, %161 in 1 : vector<4x16xf32>, vector<4x16xf32> -> vector<4x32xf32>
    %295 = tpu.concatenate %224, %129 in 1 : vector<4x16xf32>, vector<4x16xf32> -> vector<4x32xf32>
    %296 = tpu.concatenate %256, %97 in 1 : vector<4x16xf32>, vector<4x16xf32> -> vector<4x32xf32>
    %297 = tpu.concatenate %288, %65 in 1 : vector<4x16xf32>, vector<4x16xf32> -> vector<4x32xf32>
    %298 = tpu.concatenate %290, %291, %292, %293, %294, %295, %296, %297 in 0 : vector<4x32xf32>, vector<4x32xf32>, vector<4x32xf32>, vector<4x32xf32>, vector<4x32xf32>, vector<4x32xf32>, vector<4x32xf32>, vector<4x32xf32> -> vector<32x32xf32>
    %c0_49 = arith.constant 0 : index
    %c0_50 = arith.constant 0 : index
    %299 = vector.load %arg6[%c0_49, %c0_50] : memref<32x128xf32, #tpu.memory_space<vmem>>, vector<32x128xf32>
    %c0_51 = arith.constant 0 : index
    %c0_52 = arith.constant 0 : index
    %300 = vector.load %arg7[%c0_51, %c0_52] : memref<32x128xf32, #tpu.memory_space<vmem>>, vector<32x128xf32>
    %c0_53 = arith.constant 0 : index
    %c0_54 = arith.constant 0 : index
    %301 = vector.load %arg8[%c0_53, %c0_54] : memref<1x128xf32, #tpu.memory_space<vmem>>, vector<1x128xf32>
    %cst_55 = arith.constant dense<0.000000e+00> : vector<32x128xf32>
    %302 = tpu.matmul %298, %299, %cst_55 {dimension_numbers = #tpu.dot_dimension_numbers<[1], [0], [0], [1], [0, 0, 1, 1], [], []>} : vector<32x32xf32>, vector<32x128xf32>, vector<32x128xf32> -> vector<32x128xf32>
    %303 = vector.broadcast %301 : vector<1x128xf32> to vector<32x128xf32>
    %304 = arith.addf %302, %303 : vector<32x128xf32>
    %cst_56 = arith.constant 0.000000e+00 : f32
    %305 = vector.broadcast %cst_56 : f32 to vector<4x32xf32>
    %cst_57 = arith.constant 0.000000e+00 : f32
    %306 = vector.broadcast %cst_57 : f32 to vector<4x32xf32>
    %307 = vector.extract_strided_slice %304 {offsets = [0, 0], sizes = [4, 128], strides = [1, 1]} : vector<32x128xf32> to vector<4x128xf32>
    %308 = vector.extract_strided_slice %304 {offsets = [28, 0], sizes = [4, 128], strides = [1, 1]} : vector<32x128xf32> to vector<4x128xf32>
    %309 = arith.select %18, %307, %308 : vector<4x128xi1>, vector<4x128xf32>
    %cst_58 = arith.constant dense<0.000000e+00> : vector<4x128xf32>
    %310 = tpu.matmul %305, %300, %cst_58 {dimension_numbers = #tpu.dot_dimension_numbers<[1], [0], [0], [1], [0, 0, 1, 1], [], []>} : vector<4x32xf32>, vector<32x128xf32>, vector<4x128xf32> -> vector<4x128xf32>
    %311 = arith.addf %309, %310 : vector<4x128xf32>
    %312 = vector.extract_strided_slice %311 {offsets = [0, 0], sizes = [4, 32], strides = [1, 1]} : vector<4x128xf32> to vector<4x32xf32>
    %313 = arith.negf %312 : vector<4x32xf32>
    %314 = math.exp %313 : vector<4x32xf32>
    %cst_59 = arith.constant 1.000000e+00 : f32
    %315 = vector.broadcast %cst_59 : f32 to vector<4x32xf32>
    %316 = arith.addf %315, %314 : vector<4x32xf32>
    %317 = arith.divf %315, %316 : vector<4x32xf32>
    %318 = vector.extract_strided_slice %311 {offsets = [0, 32], sizes = [4, 32], strides = [1, 1]} : vector<4x128xf32> to vector<4x32xf32>
    %319 = arith.negf %318 : vector<4x32xf32>
    %320 = math.exp %319 : vector<4x32xf32>
    %cst_60 = arith.constant 1.000000e+00 : f32
    %321 = vector.broadcast %cst_60 : f32 to vector<4x32xf32>
    %322 = arith.addf %321, %320 : vector<4x32xf32>
    %323 = arith.divf %321, %322 : vector<4x32xf32>
    %324 = vector.extract_strided_slice %311 {offsets = [0, 64], sizes = [4, 32], strides = [1, 1]} : vector<4x128xf32> to vector<4x32xf32>
    %325 = math.tanh %324 : vector<4x32xf32>
    %326 = vector.extract_strided_slice %311 {offsets = [0, 96], sizes = [4, 32], strides = [1, 1]} : vector<4x128xf32> to vector<4x32xf32>
    %327 = arith.negf %326 : vector<4x32xf32>
    %328 = math.exp %327 : vector<4x32xf32>
    %cst_61 = arith.constant 1.000000e+00 : f32
    %329 = vector.broadcast %cst_61 : f32 to vector<4x32xf32>
    %330 = arith.addf %329, %328 : vector<4x32xf32>
    %331 = arith.divf %329, %330 : vector<4x32xf32>
    %332 = arith.mulf %323, %306 : vector<4x32xf32>
    %333 = arith.mulf %317, %325 : vector<4x32xf32>
    %334 = arith.addf %332, %333 : vector<4x32xf32>
    %335 = math.tanh %334 : vector<4x32xf32>
    %336 = arith.mulf %331, %335 : vector<4x32xf32>
    %337 = vector.extract_strided_slice %336 {offsets = [0, 16], sizes = [4, 16], strides = [1, 1]} : vector<4x32xf32> to vector<4x16xf32>
    %338 = vector.extract_strided_slice %304 {offsets = [4, 0], sizes = [4, 128], strides = [1, 1]} : vector<32x128xf32> to vector<4x128xf32>
    %339 = vector.extract_strided_slice %304 {offsets = [24, 0], sizes = [4, 128], strides = [1, 1]} : vector<32x128xf32> to vector<4x128xf32>
    %340 = arith.select %18, %338, %339 : vector<4x128xi1>, vector<4x128xf32>
    %cst_62 = arith.constant dense<0.000000e+00> : vector<4x128xf32>
    %341 = tpu.matmul %336, %300, %cst_62 {dimension_numbers = #tpu.dot_dimension_numbers<[1], [0], [0], [1], [0, 0, 1, 1], [], []>} : vector<4x32xf32>, vector<32x128xf32>, vector<4x128xf32> -> vector<4x128xf32>
    %342 = arith.addf %340, %341 : vector<4x128xf32>
    %343 = vector.extract_strided_slice %342 {offsets = [0, 0], sizes = [4, 32], strides = [1, 1]} : vector<4x128xf32> to vector<4x32xf32>
    %344 = arith.negf %343 : vector<4x32xf32>
    %345 = math.exp %344 : vector<4x32xf32>
    %cst_63 = arith.constant 1.000000e+00 : f32
    %346 = vector.broadcast %cst_63 : f32 to vector<4x32xf32>
    %347 = arith.addf %346, %345 : vector<4x32xf32>
    %348 = arith.divf %346, %347 : vector<4x32xf32>
    %349 = vector.extract_strided_slice %342 {offsets = [0, 32], sizes = [4, 32], strides = [1, 1]} : vector<4x128xf32> to vector<4x32xf32>
    %350 = arith.negf %349 : vector<4x32xf32>
    %351 = math.exp %350 : vector<4x32xf32>
    %cst_64 = arith.constant 1.000000e+00 : f32
    %352 = vector.broadcast %cst_64 : f32 to vector<4x32xf32>
    %353 = arith.addf %352, %351 : vector<4x32xf32>
    %354 = arith.divf %352, %353 : vector<4x32xf32>
    %355 = vector.extract_strided_slice %342 {offsets = [0, 64], sizes = [4, 32], strides = [1, 1]} : vector<4x128xf32> to vector<4x32xf32>
    %356 = math.tanh %355 : vector<4x32xf32>
    %357 = vector.extract_strided_slice %342 {offsets = [0, 96], sizes = [4, 32], strides = [1, 1]} : vector<4x128xf32> to vector<4x32xf32>
    %358 = arith.negf %357 : vector<4x32xf32>
    %359 = math.exp %358 : vector<4x32xf32>
    %cst_65 = arith.constant 1.000000e+00 : f32
    %360 = vector.broadcast %cst_65 : f32 to vector<4x32xf32>
    %361 = arith.addf %360, %359 : vector<4x32xf32>
    %362 = arith.divf %360, %361 : vector<4x32xf32>
    %363 = arith.mulf %354, %334 : vector<4x32xf32>
    %364 = arith.mulf %348, %356 : vector<4x32xf32>
    %365 = arith.addf %363, %364 : vector<4x32xf32>
    %366 = math.tanh %365 : vector<4x32xf32>
    %367 = arith.mulf %362, %366 : vector<4x32xf32>
    %368 = vector.extract_strided_slice %304 {offsets = [8, 0], sizes = [4, 128], strides = [1, 1]} : vector<32x128xf32> to vector<4x128xf32>
    %369 = vector.extract_strided_slice %304 {offsets = [20, 0], sizes = [4, 128], strides = [1, 1]} : vector<32x128xf32> to vector<4x128xf32>
    %370 = arith.select %18, %368, %369 : vector<4x128xi1>, vector<4x128xf32>
    %cst_66 = arith.constant dense<0.000000e+00> : vector<4x128xf32>
    %371 = tpu.matmul %367, %300, %cst_66 {dimension_numbers = #tpu.dot_dimension_numbers<[1], [0], [0], [1], [0, 0, 1, 1], [], []>} : vector<4x32xf32>, vector<32x128xf32>, vector<4x128xf32> -> vector<4x128xf32>
    %372 = arith.addf %370, %371 : vector<4x128xf32>
    %373 = vector.extract_strided_slice %372 {offsets = [0, 0], sizes = [4, 32], strides = [1, 1]} : vector<4x128xf32> to vector<4x32xf32>
    %374 = arith.negf %373 : vector<4x32xf32>
    %375 = math.exp %374 : vector<4x32xf32>
    %cst_67 = arith.constant 1.000000e+00 : f32
    %376 = vector.broadcast %cst_67 : f32 to vector<4x32xf32>
    %377 = arith.addf %376, %375 : vector<4x32xf32>
    %378 = arith.divf %376, %377 : vector<4x32xf32>
    %379 = vector.extract_strided_slice %372 {offsets = [0, 32], sizes = [4, 32], strides = [1, 1]} : vector<4x128xf32> to vector<4x32xf32>
    %380 = arith.negf %379 : vector<4x32xf32>
    %381 = math.exp %380 : vector<4x32xf32>
    %cst_68 = arith.constant 1.000000e+00 : f32
    %382 = vector.broadcast %cst_68 : f32 to vector<4x32xf32>
    %383 = arith.addf %382, %381 : vector<4x32xf32>
    %384 = arith.divf %382, %383 : vector<4x32xf32>
    %385 = vector.extract_strided_slice %372 {offsets = [0, 64], sizes = [4, 32], strides = [1, 1]} : vector<4x128xf32> to vector<4x32xf32>
    %386 = math.tanh %385 : vector<4x32xf32>
    %387 = vector.extract_strided_slice %372 {offsets = [0, 96], sizes = [4, 32], strides = [1, 1]} : vector<4x128xf32> to vector<4x32xf32>
    %388 = arith.negf %387 : vector<4x32xf32>
    %389 = math.exp %388 : vector<4x32xf32>
    %cst_69 = arith.constant 1.000000e+00 : f32
    %390 = vector.broadcast %cst_69 : f32 to vector<4x32xf32>
    %391 = arith.addf %390, %389 : vector<4x32xf32>
    %392 = arith.divf %390, %391 : vector<4x32xf32>
    %393 = arith.mulf %384, %365 : vector<4x32xf32>
    %394 = arith.mulf %378, %386 : vector<4x32xf32>
    %395 = arith.addf %393, %394 : vector<4x32xf32>
    %396 = math.tanh %395 : vector<4x32xf32>
    %397 = arith.mulf %392, %396 : vector<4x32xf32>
    %398 = vector.extract_strided_slice %304 {offsets = [12, 0], sizes = [4, 128], strides = [1, 1]} : vector<32x128xf32> to vector<4x128xf32>
    %399 = vector.extract_strided_slice %304 {offsets = [16, 0], sizes = [4, 128], strides = [1, 1]} : vector<32x128xf32> to vector<4x128xf32>
    %400 = arith.select %18, %398, %399 : vector<4x128xi1>, vector<4x128xf32>
    %cst_70 = arith.constant dense<0.000000e+00> : vector<4x128xf32>
    %401 = tpu.matmul %397, %300, %cst_70 {dimension_numbers = #tpu.dot_dimension_numbers<[1], [0], [0], [1], [0, 0, 1, 1], [], []>} : vector<4x32xf32>, vector<32x128xf32>, vector<4x128xf32> -> vector<4x128xf32>
    %402 = arith.addf %400, %401 : vector<4x128xf32>
    %403 = vector.extract_strided_slice %402 {offsets = [0, 0], sizes = [4, 32], strides = [1, 1]} : vector<4x128xf32> to vector<4x32xf32>
    %404 = arith.negf %403 : vector<4x32xf32>
    %405 = math.exp %404 : vector<4x32xf32>
    %cst_71 = arith.constant 1.000000e+00 : f32
    %406 = vector.broadcast %cst_71 : f32 to vector<4x32xf32>
    %407 = arith.addf %406, %405 : vector<4x32xf32>
    %408 = arith.divf %406, %407 : vector<4x32xf32>
    %409 = vector.extract_strided_slice %402 {offsets = [0, 32], sizes = [4, 32], strides = [1, 1]} : vector<4x128xf32> to vector<4x32xf32>
    %410 = arith.negf %409 : vector<4x32xf32>
    %411 = math.exp %410 : vector<4x32xf32>
    %cst_72 = arith.constant 1.000000e+00 : f32
    %412 = vector.broadcast %cst_72 : f32 to vector<4x32xf32>
    %413 = arith.addf %412, %411 : vector<4x32xf32>
    %414 = arith.divf %412, %413 : vector<4x32xf32>
    %415 = vector.extract_strided_slice %402 {offsets = [0, 64], sizes = [4, 32], strides = [1, 1]} : vector<4x128xf32> to vector<4x32xf32>
    %416 = math.tanh %415 : vector<4x32xf32>
    %417 = vector.extract_strided_slice %402 {offsets = [0, 96], sizes = [4, 32], strides = [1, 1]} : vector<4x128xf32> to vector<4x32xf32>
    %418 = arith.negf %417 : vector<4x32xf32>
    %419 = math.exp %418 : vector<4x32xf32>
    %cst_73 = arith.constant 1.000000e+00 : f32
    %420 = vector.broadcast %cst_73 : f32 to vector<4x32xf32>
    %421 = arith.addf %420, %419 : vector<4x32xf32>
    %422 = arith.divf %420, %421 : vector<4x32xf32>
    %423 = arith.mulf %414, %395 : vector<4x32xf32>
    %424 = arith.mulf %408, %416 : vector<4x32xf32>
    %425 = arith.addf %423, %424 : vector<4x32xf32>
    %426 = math.tanh %425 : vector<4x32xf32>
    %427 = arith.mulf %422, %426 : vector<4x32xf32>
    %428 = vector.extract_strided_slice %304 {offsets = [16, 0], sizes = [4, 128], strides = [1, 1]} : vector<32x128xf32> to vector<4x128xf32>
    %429 = vector.extract_strided_slice %304 {offsets = [12, 0], sizes = [4, 128], strides = [1, 1]} : vector<32x128xf32> to vector<4x128xf32>
    %430 = arith.select %18, %428, %429 : vector<4x128xi1>, vector<4x128xf32>
    %cst_74 = arith.constant dense<0.000000e+00> : vector<4x128xf32>
    %431 = tpu.matmul %427, %300, %cst_74 {dimension_numbers = #tpu.dot_dimension_numbers<[1], [0], [0], [1], [0, 0, 1, 1], [], []>} : vector<4x32xf32>, vector<32x128xf32>, vector<4x128xf32> -> vector<4x128xf32>
    %432 = arith.addf %430, %431 : vector<4x128xf32>
    %433 = vector.extract_strided_slice %432 {offsets = [0, 0], sizes = [4, 32], strides = [1, 1]} : vector<4x128xf32> to vector<4x32xf32>
    %434 = arith.negf %433 : vector<4x32xf32>
    %435 = math.exp %434 : vector<4x32xf32>
    %cst_75 = arith.constant 1.000000e+00 : f32
    %436 = vector.broadcast %cst_75 : f32 to vector<4x32xf32>
    %437 = arith.addf %436, %435 : vector<4x32xf32>
    %438 = arith.divf %436, %437 : vector<4x32xf32>
    %439 = vector.extract_strided_slice %432 {offsets = [0, 32], sizes = [4, 32], strides = [1, 1]} : vector<4x128xf32> to vector<4x32xf32>
    %440 = arith.negf %439 : vector<4x32xf32>
    %441 = math.exp %440 : vector<4x32xf32>
    %cst_76 = arith.constant 1.000000e+00 : f32
    %442 = vector.broadcast %cst_76 : f32 to vector<4x32xf32>
    %443 = arith.addf %442, %441 : vector<4x32xf32>
    %444 = arith.divf %442, %443 : vector<4x32xf32>
    %445 = vector.extract_strided_slice %432 {offsets = [0, 64], sizes = [4, 32], strides = [1, 1]} : vector<4x128xf32> to vector<4x32xf32>
    %446 = math.tanh %445 : vector<4x32xf32>
    %447 = vector.extract_strided_slice %432 {offsets = [0, 96], sizes = [4, 32], strides = [1, 1]} : vector<4x128xf32> to vector<4x32xf32>
    %448 = arith.negf %447 : vector<4x32xf32>
    %449 = math.exp %448 : vector<4x32xf32>
    %cst_77 = arith.constant 1.000000e+00 : f32
    %450 = vector.broadcast %cst_77 : f32 to vector<4x32xf32>
    %451 = arith.addf %450, %449 : vector<4x32xf32>
    %452 = arith.divf %450, %451 : vector<4x32xf32>
    %453 = arith.mulf %444, %425 : vector<4x32xf32>
    %454 = arith.mulf %438, %446 : vector<4x32xf32>
    %455 = arith.addf %453, %454 : vector<4x32xf32>
    %456 = math.tanh %455 : vector<4x32xf32>
    %457 = arith.mulf %452, %456 : vector<4x32xf32>
    %458 = vector.extract_strided_slice %304 {offsets = [20, 0], sizes = [4, 128], strides = [1, 1]} : vector<32x128xf32> to vector<4x128xf32>
    %459 = vector.extract_strided_slice %304 {offsets = [8, 0], sizes = [4, 128], strides = [1, 1]} : vector<32x128xf32> to vector<4x128xf32>
    %460 = arith.select %18, %458, %459 : vector<4x128xi1>, vector<4x128xf32>
    %cst_78 = arith.constant dense<0.000000e+00> : vector<4x128xf32>
    %461 = tpu.matmul %457, %300, %cst_78 {dimension_numbers = #tpu.dot_dimension_numbers<[1], [0], [0], [1], [0, 0, 1, 1], [], []>} : vector<4x32xf32>, vector<32x128xf32>, vector<4x128xf32> -> vector<4x128xf32>
    %462 = arith.addf %460, %461 : vector<4x128xf32>
    %463 = vector.extract_strided_slice %462 {offsets = [0, 0], sizes = [4, 32], strides = [1, 1]} : vector<4x128xf32> to vector<4x32xf32>
    %464 = arith.negf %463 : vector<4x32xf32>
    %465 = math.exp %464 : vector<4x32xf32>
    %cst_79 = arith.constant 1.000000e+00 : f32
    %466 = vector.broadcast %cst_79 : f32 to vector<4x32xf32>
    %467 = arith.addf %466, %465 : vector<4x32xf32>
    %468 = arith.divf %466, %467 : vector<4x32xf32>
    %469 = vector.extract_strided_slice %462 {offsets = [0, 32], sizes = [4, 32], strides = [1, 1]} : vector<4x128xf32> to vector<4x32xf32>
    %470 = arith.negf %469 : vector<4x32xf32>
    %471 = math.exp %470 : vector<4x32xf32>
    %cst_80 = arith.constant 1.000000e+00 : f32
    %472 = vector.broadcast %cst_80 : f32 to vector<4x32xf32>
    %473 = arith.addf %472, %471 : vector<4x32xf32>
    %474 = arith.divf %472, %473 : vector<4x32xf32>
    %475 = vector.extract_strided_slice %462 {offsets = [0, 64], sizes = [4, 32], strides = [1, 1]} : vector<4x128xf32> to vector<4x32xf32>
    %476 = math.tanh %475 : vector<4x32xf32>
    %477 = vector.extract_strided_slice %462 {offsets = [0, 96], sizes = [4, 32], strides = [1, 1]} : vector<4x128xf32> to vector<4x32xf32>
    %478 = arith.negf %477 : vector<4x32xf32>
    %479 = math.exp %478 : vector<4x32xf32>
    %cst_81 = arith.constant 1.000000e+00 : f32
    %480 = vector.broadcast %cst_81 : f32 to vector<4x32xf32>
    %481 = arith.addf %480, %479 : vector<4x32xf32>
    %482 = arith.divf %480, %481 : vector<4x32xf32>
    %483 = arith.mulf %474, %455 : vector<4x32xf32>
    %484 = arith.mulf %468, %476 : vector<4x32xf32>
    %485 = arith.addf %483, %484 : vector<4x32xf32>
    %486 = math.tanh %485 : vector<4x32xf32>
    %487 = arith.mulf %482, %486 : vector<4x32xf32>
    %488 = vector.extract_strided_slice %304 {offsets = [24, 0], sizes = [4, 128], strides = [1, 1]} : vector<32x128xf32> to vector<4x128xf32>
    %489 = vector.extract_strided_slice %304 {offsets = [4, 0], sizes = [4, 128], strides = [1, 1]} : vector<32x128xf32> to vector<4x128xf32>
    %490 = arith.select %18, %488, %489 : vector<4x128xi1>, vector<4x128xf32>
    %cst_82 = arith.constant dense<0.000000e+00> : vector<4x128xf32>
    %491 = tpu.matmul %487, %300, %cst_82 {dimension_numbers = #tpu.dot_dimension_numbers<[1], [0], [0], [1], [0, 0, 1, 1], [], []>} : vector<4x32xf32>, vector<32x128xf32>, vector<4x128xf32> -> vector<4x128xf32>
    %492 = arith.addf %490, %491 : vector<4x128xf32>
    %493 = vector.extract_strided_slice %492 {offsets = [0, 0], sizes = [4, 32], strides = [1, 1]} : vector<4x128xf32> to vector<4x32xf32>
    %494 = arith.negf %493 : vector<4x32xf32>
    %495 = math.exp %494 : vector<4x32xf32>
    %cst_83 = arith.constant 1.000000e+00 : f32
    %496 = vector.broadcast %cst_83 : f32 to vector<4x32xf32>
    %497 = arith.addf %496, %495 : vector<4x32xf32>
    %498 = arith.divf %496, %497 : vector<4x32xf32>
    %499 = vector.extract_strided_slice %492 {offsets = [0, 32], sizes = [4, 32], strides = [1, 1]} : vector<4x128xf32> to vector<4x32xf32>
    %500 = arith.negf %499 : vector<4x32xf32>
    %501 = math.exp %500 : vector<4x32xf32>
    %cst_84 = arith.constant 1.000000e+00 : f32
    %502 = vector.broadcast %cst_84 : f32 to vector<4x32xf32>
    %503 = arith.addf %502, %501 : vector<4x32xf32>
    %504 = arith.divf %502, %503 : vector<4x32xf32>
    %505 = vector.extract_strided_slice %492 {offsets = [0, 64], sizes = [4, 32], strides = [1, 1]} : vector<4x128xf32> to vector<4x32xf32>
    %506 = math.tanh %505 : vector<4x32xf32>
    %507 = vector.extract_strided_slice %492 {offsets = [0, 96], sizes = [4, 32], strides = [1, 1]} : vector<4x128xf32> to vector<4x32xf32>
    %508 = arith.negf %507 : vector<4x32xf32>
    %509 = math.exp %508 : vector<4x32xf32>
    %cst_85 = arith.constant 1.000000e+00 : f32
    %510 = vector.broadcast %cst_85 : f32 to vector<4x32xf32>
    %511 = arith.addf %510, %509 : vector<4x32xf32>
    %512 = arith.divf %510, %511 : vector<4x32xf32>
    %513 = arith.mulf %504, %485 : vector<4x32xf32>
    %514 = arith.mulf %498, %506 : vector<4x32xf32>
    %515 = arith.addf %513, %514 : vector<4x32xf32>
    %516 = math.tanh %515 : vector<4x32xf32>
    %517 = arith.mulf %512, %516 : vector<4x32xf32>
    %518 = vector.extract_strided_slice %304 {offsets = [28, 0], sizes = [4, 128], strides = [1, 1]} : vector<32x128xf32> to vector<4x128xf32>
    %519 = vector.extract_strided_slice %304 {offsets = [0, 0], sizes = [4, 128], strides = [1, 1]} : vector<32x128xf32> to vector<4x128xf32>
    %520 = arith.select %18, %518, %519 : vector<4x128xi1>, vector<4x128xf32>
    %cst_86 = arith.constant dense<0.000000e+00> : vector<4x128xf32>
    %521 = tpu.matmul %517, %300, %cst_86 {dimension_numbers = #tpu.dot_dimension_numbers<[1], [0], [0], [1], [0, 0, 1, 1], [], []>} : vector<4x32xf32>, vector<32x128xf32>, vector<4x128xf32> -> vector<4x128xf32>
    %522 = arith.addf %520, %521 : vector<4x128xf32>
    %523 = vector.extract_strided_slice %522 {offsets = [0, 0], sizes = [4, 32], strides = [1, 1]} : vector<4x128xf32> to vector<4x32xf32>
    %524 = arith.negf %523 : vector<4x32xf32>
    %525 = math.exp %524 : vector<4x32xf32>
    %cst_87 = arith.constant 1.000000e+00 : f32
    %526 = vector.broadcast %cst_87 : f32 to vector<4x32xf32>
    %527 = arith.addf %526, %525 : vector<4x32xf32>
    %528 = arith.divf %526, %527 : vector<4x32xf32>
    %529 = vector.extract_strided_slice %522 {offsets = [0, 32], sizes = [4, 32], strides = [1, 1]} : vector<4x128xf32> to vector<4x32xf32>
    %530 = arith.negf %529 : vector<4x32xf32>
    %531 = math.exp %530 : vector<4x32xf32>
    %cst_88 = arith.constant 1.000000e+00 : f32
    %532 = vector.broadcast %cst_88 : f32 to vector<4x32xf32>
    %533 = arith.addf %532, %531 : vector<4x32xf32>
    %534 = arith.divf %532, %533 : vector<4x32xf32>
    %535 = vector.extract_strided_slice %522 {offsets = [0, 64], sizes = [4, 32], strides = [1, 1]} : vector<4x128xf32> to vector<4x32xf32>
    %536 = math.tanh %535 : vector<4x32xf32>
    %537 = vector.extract_strided_slice %522 {offsets = [0, 96], sizes = [4, 32], strides = [1, 1]} : vector<4x128xf32> to vector<4x32xf32>
    %538 = arith.negf %537 : vector<4x32xf32>
    %539 = math.exp %538 : vector<4x32xf32>
    %cst_89 = arith.constant 1.000000e+00 : f32
    %540 = vector.broadcast %cst_89 : f32 to vector<4x32xf32>
    %541 = arith.addf %540, %539 : vector<4x32xf32>
    %542 = arith.divf %540, %541 : vector<4x32xf32>
    %543 = arith.mulf %534, %515 : vector<4x32xf32>
    %544 = arith.mulf %528, %536 : vector<4x32xf32>
    %545 = arith.addf %543, %544 : vector<4x32xf32>
    %546 = math.tanh %545 : vector<4x32xf32>
    %547 = arith.mulf %542, %546 : vector<4x32xf32>
    %548 = vector.extract_strided_slice %547 {offsets = [0, 0], sizes = [4, 16], strides = [1, 1]} : vector<4x32xf32> to vector<4x16xf32>
    %549 = arith.addf %548, %337 : vector<4x16xf32>
    %c0_90 = arith.constant 0 : index
    %c0_91 = arith.constant 0 : index
    %550 = vector.load %arg9[%c0_90, %c0_91] : memref<16x32xf32, #tpu.memory_space<vmem>>, vector<16x32xf32>
    %cst_92 = arith.constant dense<0.000000e+00> : vector<4x32xf32>
    %551 = tpu.matmul %549, %550, %cst_92 {dimension_numbers = #tpu.dot_dimension_numbers<[1], [0], [0], [1], [0, 0, 1, 1], [], []>} : vector<4x16xf32>, vector<16x32xf32>, vector<4x32xf32> -> vector<4x32xf32>
    %c0_93 = arith.constant 0 : index
    %c0_94 = arith.constant 0 : index
    %552 = vector.load %arg10[%c0_93, %c0_94] : memref<1x32xf32, #tpu.memory_space<vmem>>, vector<1x32xf32>
    %553 = vector.broadcast %552 : vector<1x32xf32> to vector<4x32xf32>
    %554 = arith.addf %551, %553 : vector<4x32xf32>
    %cst_95 = arith.constant 0.000000e+00 : f32
    %555 = vector.broadcast %cst_95 : f32 to vector<4x32xf32>
    %556 = arith.maximumf %554, %555 : vector<4x32xf32>
    %557 = vector.extract_strided_slice %556 {offsets = [0, 0], sizes = [1, 32], strides = [1, 1]} : vector<4x32xf32> to vector<1x32xf32>
    %558 = vector.extract_strided_slice %556 {offsets = [1, 0], sizes = [1, 32], strides = [1, 1]} : vector<4x32xf32> to vector<1x32xf32>
    %559 = tpu.concatenate %557, %558 in 1 : vector<1x32xf32>, vector<1x32xf32> -> vector<1x64xf32>
    %560 = vector.extract_strided_slice %556 {offsets = [2, 0], sizes = [1, 32], strides = [1, 1]} : vector<4x32xf32> to vector<1x32xf32>
    %561 = vector.extract_strided_slice %556 {offsets = [3, 0], sizes = [1, 32], strides = [1, 1]} : vector<4x32xf32> to vector<1x32xf32>
    %562 = tpu.concatenate %560, %561 in 1 : vector<1x32xf32>, vector<1x32xf32> -> vector<1x64xf32>
    %563 = tpu.concatenate %559, %562 in 0 : vector<1x64xf32>, vector<1x64xf32> -> vector<2x64xf32>
    %c0_96 = arith.constant 0 : index
    %c0_97 = arith.constant 0 : index
    %564 = vector.load %arg11[%c0_96, %c0_97] : memref<64x6xf32, #tpu.memory_space<vmem>>, vector<64x6xf32>
    %cst_98 = arith.constant dense<0.000000e+00> : vector<2x6xf32>
    %565 = tpu.matmul %563, %564, %cst_98 {dimension_numbers = #tpu.dot_dimension_numbers<[1], [0], [0], [1], [0, 0, 1, 1], [], []>} : vector<2x64xf32>, vector<64x6xf32>, vector<2x6xf32> -> vector<2x6xf32>
    %c0_99 = arith.constant 0 : index
    %c0_100 = arith.constant 0 : index
    %566 = vector.load %arg12[%c0_99, %c0_100] : memref<1x6xf32, #tpu.memory_space<vmem>>, vector<1x6xf32>
    %567 = vector.broadcast %566 : vector<1x6xf32> to vector<2x6xf32>
    %568 = arith.addf %565, %567 : vector<2x6xf32>
    %c0_101 = arith.constant 0 : index
    %c0_102 = arith.constant 0 : index
    %569 = vector.load %arg13[%c0_101, %c0_102] : memref<2x6xf32, #tpu.memory_space<vmem>>, vector<2x6xf32>
    tpu.vector_store %arg13[%c0_101, %c0_102], %568 {strides = array<i32>} : memref<2x6xf32, #tpu.memory_space<vmem>>, vector<2x6xf32>,
    return
  }
}

</mosaic_0001>

<llo_original>
// kernel: lstm_jigsaw_forward.1
$region0: #{lstm_jigsaw_forward.1}
  #allocation0 [shape = 'u32[]', space=smem, size = 0x4, offset = 0x4, fixed_abs, tag = 'smem constant byte address 0x4 - core index']
  #allocation1 [shape = 'u32[144,128]{1,0:T(1,128)}', space=vmem, size = 0x12000, scoped, tag = 'internal scratch']
  %s0 = inlined_call_operand.vmem [shape: f32[32,64], index: 0, kind: input, shape index: {}]
  %s1 = inlined_call_operand.vmem [shape: f32[64,32], index: 1, kind: input, shape index: {}]
  %s2 = inlined_call_operand.vmem [shape: f32[1,32], index: 2, kind: input, shape index: {}]
  %s3 = inlined_call_operand.vmem [shape: f32[32,128], index: 3, kind: input, shape index: {}]
  %s4 = inlined_call_operand.vmem [shape: f32[32,128], index: 4, kind: input, shape index: {}]
  %s5 = inlined_call_operand.vmem [shape: f32[1,128], index: 5, kind: input, shape index: {}]
  %s6 = inlined_call_operand.vmem [shape: f32[32,128], index: 6, kind: input, shape index: {}]
  %s7 = inlined_call_operand.vmem [shape: f32[32,128], index: 7, kind: input, shape index: {}]
  %s8 = inlined_call_operand.vmem [shape: f32[1,128], index: 8, kind: input, shape index: {}]
  %s9 = inlined_call_operand.vmem [shape: f32[16,32], index: 9, kind: input, shape index: {}]
  %s10 = inlined_call_operand.vmem [shape: f32[1,32], index: 10, kind: input, shape index: {}]
  %s11 = inlined_call_operand.vmem [shape: f32[64,6], index: 11, kind: input, shape index: {}]
  %s12 = inlined_call_operand.vmem [shape: f32[1,6], index: 12, kind: input, shape index: {}]
  %s13 = inlined_call_operand.hbm [shape: f32[2,6], index: 13, kind: output, shape index: {}]
  %s14 = sld [smem:[#allocation0]]
  $region62: #{lstm_jigsaw_forward.1} parent=0
    _
  %s16 = ssub.s32 1, %s14
  %s17 = scalar_select 0, %s16, %s14
  $region1: #{lstm_jigsaw_forward.1} parent=0
    #allocation2 [shape = 'u8[1024]{0}', space=vmem, size = 0x400, scoped, tag = 'output window, operand 0, single buffered']
    #allocation3 [shape = 's32[1]{0}', space=sflag, size = 0x4, scoped, tag = 'scoped memory for lstm_jigsaw_forward.1']
    %18 = vsyncpa [#allocation3], 0
    // Predicated region
    $region2: #{lstm_jigsaw_forward.1} parent=1 // pred_check
      _
    $region3: #{lstm_jigsaw_forward.1} parent=1 // pred_check_branch
      %20 = sbr.rel (0) target = $region5
    $region4: #{lstm_jigsaw_forward.1} parent=1 // pred_region
      _
    $region5: #{lstm_jigsaw_forward.1} parent=1 // pred_fallthru
      _
    // Predicated region
    $region6: #{lstm_jigsaw_forward.1} parent=1 // pred_check
      _
    $region7: #{lstm_jigsaw_forward.1} parent=1 // pred_check_branch
      %22 = sbr.rel (0) target = $region9
    $region8: #{lstm_jigsaw_forward.1} parent=1 // pred_region
      _
    $region9: #{lstm_jigsaw_forward.1} parent=1 // pred_fallthru
      _
    // Predicated region
    $region10: #{lstm_jigsaw_forward.1} parent=1 // pred_check
      _
    $region11: #{lstm_jigsaw_forward.1} parent=1 // pred_check_branch
      %24 = sbr.rel (0) target = $region13
    $region12: #{lstm_jigsaw_forward.1} parent=1 // pred_region
      _
    $region13: #{lstm_jigsaw_forward.1} parent=1 // pred_fallthru
      _
    // Predicated region
    $region14: #{lstm_jigsaw_forward.1} parent=1 // pred_check
      _
    $region15: #{lstm_jigsaw_forward.1} parent=1 // pred_check_branch
      %26 = sbr.rel (0) target = $region17
    $region16: #{lstm_jigsaw_forward.1} parent=1 // pred_region
      _
    $region17: #{lstm_jigsaw_forward.1} parent=1 // pred_fallthru
      _
    // Predicated region
    $region18: #{lstm_jigsaw_forward.1} parent=1 // pred_check
      _
    $region19: #{lstm_jigsaw_forward.1} parent=1 // pred_check_branch
      %28 = sbr.rel (0) target = $region21
    $region20: #{lstm_jigsaw_forward.1} parent=1 // pred_region
      _
    $region21: #{lstm_jigsaw_forward.1} parent=1 // pred_fallthru
      _
    // Predicated region
    $region22: #{lstm_jigsaw_forward.1} parent=1 // pred_check
      _
    $region23: #{lstm_jigsaw_forward.1} parent=1 // pred_check_branch
      %30 = sbr.rel (0) target = $region25
    $region24: #{lstm_jigsaw_forward.1} parent=1 // pred_region
      _
    $region25: #{lstm_jigsaw_forward.1} parent=1 // pred_fallthru
      _
    // Predicated region
    $region26: #{lstm_jigsaw_forward.1} parent=1 // pred_check
      _
    $region27: #{lstm_jigsaw_forward.1} parent=1 // pred_check_branch
      %32 = sbr.rel (0) target = $region29
    $region28: #{lstm_jigsaw_forward.1} parent=1 // pred_region
      _
    $region29: #{lstm_jigsaw_forward.1} parent=1 // pred_fallthru
      _
    // Predicated region
    $region30: #{lstm_jigsaw_forward.1} parent=1 // pred_check
      _
    $region31: #{lstm_jigsaw_forward.1} parent=1 // pred_check_branch
      %34 = sbr.rel (0) target = $region33
    $region32: #{lstm_jigsaw_forward.1} parent=1 // pred_region
      _
    $region33: #{lstm_jigsaw_forward.1} parent=1 // pred_fallthru
      _
    // Predicated region
    $region34: #{lstm_jigsaw_forward.1} parent=1 // pred_check
      _
    $region35: #{lstm_jigsaw_forward.1} parent=1 // pred_check_branch
      %36 = sbr.rel (0) target = $region37
    $region36: #{lstm_jigsaw_forward.1} parent=1 // pred_region
      _
    $region37: #{lstm_jigsaw_forward.1} parent=1 // pred_fallthru
      _
    // Predicated region
    $region38: #{lstm_jigsaw_forward.1} parent=1 // pred_check
      _
    $region39: #{lstm_jigsaw_forward.1} parent=1 // pred_check_branch
      %38 = sbr.rel (0) target = $region41
    $region40: #{lstm_jigsaw_forward.1} parent=1 // pred_region
      _
    $region41: #{lstm_jigsaw_forward.1} parent=1 // pred_fallthru
      _
    // Predicated region
    $region42: #{lstm_jigsaw_forward.1} parent=1 // pred_check
      _
    $region43: #{lstm_jigsaw_forward.1} parent=1 // pred_check_branch
      %40 = sbr.rel (0) target = $region45
    $region44: #{lstm_jigsaw_forward.1} parent=1 // pred_region
      _
    $region45: #{lstm_jigsaw_forward.1} parent=1 // pred_fallthru
      _
    // Predicated region
    $region46: #{lstm_jigsaw_forward.1} parent=1 // pred_check
      _
    $region47: #{lstm_jigsaw_forward.1} parent=1 // pred_check_branch
      %42 = sbr.rel (0) target = $region49
    $region48: #{lstm_jigsaw_forward.1} parent=1 // pred_region
      _
    $region49: #{lstm_jigsaw_forward.1} parent=1 // pred_fallthru
      _
    // Predicated region
    $region50: #{lstm_jigsaw_forward.1} parent=1 // pred_check
      _
    $region51: #{lstm_jigsaw_forward.1} parent=1 // pred_check_branch
      %44 = sbr.rel (0) target = $region53
    $region52: #{lstm_jigsaw_forward.1} parent=1 // pred_region
      _
    $region53: #{lstm_jigsaw_forward.1} parent=1 // pred_fallthru
      _
    %v45 = vlaneseq
    %v46 = vand.u32 %v45, 127
    %vm47 = vcmp.lt.s32.totalorder %v46, 0
    %v48 = vsub.s32 0, %v46
    %v49 = vsel %vm47, %v48, %v46
    %v50 = vshrl.u32 %v49, 5
    %v51 = vand.u32 %v49, 31
    %v52 = vsub.s32 0, %v51
    %v53 = vsel %vm47, %v52, %v51
    %vm54 = vcmp.ne.s32.totalorder %v53, 0
    %vm55 = vcmp.lt.s32.totalorder %v53, 0
    %vm56 = vmand %vm55, %vm54
    %v57 = vadd.s32 %v53, 32
    %v58 = vsel %vm56, %v57, %v53
    %vm59 = vcmp.lt.s32.totalorder %v58, 16
    %v60 = vld [vmem:[%s0] sm:$0xff]
    %v61 = vld [vmem:[%s0 + $0x8] sm:$0xff]
    %v62 = vld [vmem:[%s0 + $0x10] sm:$0xff]
    %v63 = vld [vmem:[%s0 + $0x18] sm:$0xff]
    %v64 = vld [vmem:[%s1] sm:$0xff]
    %v65 = vld [vmem:[%s1 + $0x8] sm:$0xff]
    %v66 = vld [vmem:[%s1 + $0x10] sm:$0xff]
    %v67 = vld [vmem:[%s1 + $0x18] sm:$0xff]
    %v68 = vld [vmem:[%s1 + $0x20] sm:$0xff]
    %v69 = vld [vmem:[%s1 + $0x28] sm:$0xff]
    %v70 = vld [vmem:[%s1 + $0x30] sm:$0xff]
    %v71 = vld [vmem:[%s1 + $0x38] sm:$0xff]
    %v72 = vld [vmem:[%s2] sm:$0x1]
    %v74 = vlaneseq
    %v75 = vshrl.u32 %v74, 7
    %v76 = vsub.s32 0, %v75
    %v77 = vrot.slane %v72, %v76
    %vm79 = vcmask 523264
    %v81 = vsel %vm79, %v60, 0
    %v84 = vsel %vm79, %v61, 0
    %v87 = vsel %vm79, %v62, 0
    %v90 = vsel %vm79, %v63, 0
    %92 = vmatprep.subr.mxu0 0.0
    %93 = vmatpush1.msra.mxu0 %v64
    %94 = vmatprep.subr.mxu0 0.0
    %95 = vmatpush1.msra.mxu0 %v65
    %96 = vmatprep.subr.mxu0 0.0
    %97 = vmatpush1.msra.mxu0 %v66
    %98 = vmatprep.subr.mxu0 0.0
    %99 = vmatpush1.msra.mxu0 %v67
    %100 = vmatprep.subr.mxu0 0.0
    %101 = vmatpush1.msra.mxu0 %v68
    %102 = vmatprep.subr.mxu0 0.0
    %103 = vmatpush1.msra.mxu0 %v69
    %104 = vmatprep.subr.mxu0 0.0
    %105 = vmatpush1.msra.mxu0 %v70
    %106 = vmatprep.subr.mxu0 0.0
    %107 = vmatpush1.msra.mxu0 %v71
    %108 = vmatprep.subr.mxu0 0.0
    %109 = vmatpush1.msra.mxu0 0.0
    %110 = vmatprep.subr.mxu0 0.0
    %111 = vmatpush1.msra.mxu0 0.0
    %112 = vmatprep.subr.mxu0 0.0
    %113 = vmatpush1.msra.mxu0 0.0
    %114 = vmatprep.subr.mxu0 0.0
    %115 = vmatpush1.msra.mxu0 0.0
    %116 = vmatprep.subr.mxu0 0.0
    %117 = vmatpush1.msra.mxu0 0.0
    %118 = vmatprep.subr.mxu0 0.0
    %119 = vmatpush1.msra.mxu0 0.0
    %120 = vmatprep.subr.mxu0 0.0
    %121 = vmatpush1.msra.mxu0 0.0
    %122 = vmatprep.subr.mxu0 0.0
    %123 = vmatpush1.msra.mxu0 0.0
    %124 = vmatprep.subr.mxu0 0.0
    %125 = vmatpush1.msra.mxu0 0.0
    %126 = vmatprep.subr.mxu0 0.0
    %127 = vmatpush1.msra.mxu0 0.0
    %128 = vmatprep.subr.mxu0 0.0
    %129 = vmatpush1.msra.mxu0 0.0
    %130 = vmatprep.subr.mxu0 0.0
    %131 = vmatpush1.msra.mxu0 0.0
    %132 = vmatprep.subr.mxu0 0.0
    %133 = vmatpush1.msra.mxu0 0.0
    %134 = vmatprep.subr.mxu0 0.0
    %135 = vmatpush1.msra.mxu0 0.0
    %136 = vmatprep.subr.mxu0 0.0
    %137 = vmatpush1.msra.mxu0 0.0
    %138 = vmatprep.subr.mxu0 0.0
    %139 = vmatpush1.msra.mxu0 0.0
    %140 = vmatprep.subr.mxu0 0.0
    %141 = vmatpush1.msra.mxu0 0.0
    %142 = vmatprep.subr.mxu0 0.0
    %143 = vmatpush1.msra.mxu0 0.0
    %144 = vmatprep.subr.mxu0 0.0
    %145 = vmatpush1.msra.mxu0 0.0
    %146 = vmatprep.subr.mxu0 0.0
    %147 = vmatpush1.msra.mxu0 0.0
    %148 = vmatprep.subr.mxu0 0.0
    %149 = vmatpush1.msra.mxu0 0.0
    %150 = vmatprep.subr.mxu0 0.0
    %151 = vmatpush1.msra.mxu0 0.0
    %152 = vmatprep.subr.mxu0 0.0
    %153 = vmatpush1.msra.mxu0 0.0
    %154 = vmatprep.subr.mxu0 0.0
    %155 = vmatpush1.msra.mxu0 0.0
    %156 = vmatprep.mubr.f32.mxu0 0.0
    %157 = vmatmul.mubr.f32.gmra.mrb[0].mxu0 %v81
    %v158 = vpop.f32.mrb[0].mxu0
    %v159 = vadd.f32 %v77, %v158
    %v160 = vpop.f32.mrb[0].mxu0
    %161 = vmatprep.mubr.f32.mxu0 0.0
    %162 = vmatmul.mubr.f32.gmra.mrb[0].mxu0 %v84
    %v163 = vpop.f32.mrb[0].mxu0
    %v164 = vadd.f32 %v77, %v163
    %v165 = vpop.f32.mrb[0].mxu0
    %166 = vmatprep.mubr.f32.mxu0 0.0
    %167 = vmatmul.mubr.f32.gmra.mrb[0].mxu0 %v87
    %v168 = vpop.f32.mrb[0].mxu0
    %v169 = vadd.f32 %v77, %v168
    %v170 = vpop.f32.mrb[0].mxu0
    %171 = vmatprep.mubr.f32.mxu0 0.0
    %172 = vmatmul.mubr.f32.gmra.mrb[0].mxu0 %v90
    %v173 = vpop.f32.mrb[0].mxu0
    %v174 = vadd.f32 %v77, %v173
    %v175 = vpop.f32.mrb[0].mxu0
    %176 = vdwg.mxu0
    %v177 = vtanh.pop %v159
    %v178 = vtanh.pop %v164
    %v179 = vtanh.pop %v169
    %v180 = vtanh.pop %v174
    %v181 = vld [vmem:[%s3] sm:$0xff]
    %v182 = vld [vmem:[%s3 + $0x8] sm:$0xff]
    %v183 = vld [vmem:[%s3 + $0x10] sm:$0xff]
    %v184 = vld [vmem:[%s3 + $0x18] sm:$0xff]
    %v185 = vld [vmem:[%s4] sm:$0xff]
    %v186 = vld [vmem:[%s4 + $0x8] sm:$0xff]
    %v187 = vld [vmem:[%s4 + $0x10] sm:$0xff]
    %v188 = vld [vmem:[%s4 + $0x18] sm:$0xff]
    %v189 = vld [vmem:[%s5] sm:$0x1]
    %v191 = vlaneseq
    %v192 = vshrl.u32 %v191, 7
    %v193 = vsub.s32 0, %v192
    %v194 = vrot.slane %v189, %v193
    %vm196 = vcmask 261120
    %v198 = vsel %vm196, %v177, 0
    %v201 = vsel %vm196, %v178, 0
    %v204 = vsel %vm196, %v179, 0
    %v207 = vsel %vm196, %v180, 0
    %209 = vmatprep.subr.mxu0 0.0
    %210 = vmatpush1.msra.mxu0 %v181
    %211 = vmatprep.subr.mxu0 0.0
    %212 = vmatpush1.msra.mxu0 %v182
    %213 = vmatprep.subr.mxu0 0.0
    %214 = vmatpush1.msra.mxu0 %v183
    %215 = vmatprep.subr.mxu0 0.0
    %216 = vmatpush1.msra.mxu0 %v184
    %217 = vmatprep.subr.mxu0 0.0
    %218 = vmatpush1.msra.mxu0 0.0
    %219 = vmatprep.subr.mxu0 0.0
    %220 = vmatpush1.msra.mxu0 0.0
    %221 = vmatprep.subr.mxu0 0.0
    %222 = vmatpush1.msra.mxu0 0.0
    %223 = vmatprep.subr.mxu0 0.0
    %224 = vmatpush1.msra.mxu0 0.0
    %225 = vmatprep.subr.mxu0 0.0
    %226 = vmatpush1.msra.mxu0 0.0
    %227 = vmatprep.subr.mxu0 0.0
    %228 = vmatpush1.msra.mxu0 0.0
    %229 = vmatprep.subr.mxu0 0.0
    %230 = vmatpush1.msra.mxu0 0.0
    %231 = vmatprep.subr.mxu0 0.0
    %232 = vmatpush1.msra.mxu0 0.0
    %233 = vmatprep.subr.mxu0 0.0
    %234 = vmatpush1.msra.mxu0 0.0
    %235 = vmatprep.subr.mxu0 0.0
    %236 = vmatpush1.msra.mxu0 0.0
    %237 = vmatprep.subr.mxu0 0.0
    %238 = vmatpush1.msra.mxu0 0.0
    %239 = vmatprep.subr.mxu0 0.0
    %240 = vmatpush1.msra.mxu0 0.0
    %241 = vmatprep.subr.mxu0 0.0
    %242 = vmatpush1.msra.mxu0 0.0
    %243 = vmatprep.subr.mxu0 0.0
    %244 = vmatpush1.msra.mxu0 0.0
    %245 = vmatprep.subr.mxu0 0.0
    %246 = vmatpush1.msra.mxu0 0.0
    %247 = vmatprep.subr.mxu0 0.0
    %248 = vmatpush1.msra.mxu0 0.0
    %249 = vmatprep.subr.mxu0 0.0
    %250 = vmatpush1.msra.mxu0 0.0
    %251 = vmatprep.subr.mxu0 0.0
    %252 = vmatpush1.msra.mxu0 0.0
    %253 = vmatprep.subr.mxu0 0.0
    %254 = vmatpush1.msra.mxu0 0.0
    %255 = vmatprep.subr.mxu0 0.0
    %256 = vmatpush1.msra.mxu0 0.0
    %257 = vmatprep.subr.mxu0 0.0
    %258 = vmatpush1.msra.mxu0 0.0
    %259 = vmatprep.subr.mxu0 0.0
    %260 = vmatpush1.msra.mxu0 0.0
    %261 = vmatprep.subr.mxu0 0.0
    %262 = vmatpush1.msra.mxu0 0.0
    %263 = vmatprep.subr.mxu0 0.0
    %264 = vmatpush1.msra.mxu0 0.0
    %265 = vmatprep.subr.mxu0 0.0
    %266 = vmatpush1.msra.mxu0 0.0
    %267 = vmatprep.subr.mxu0 0.0
    %268 = vmatpush1.msra.mxu0 0.0
    %269 = vmatprep.subr.mxu0 0.0
    %270 = vmatpush1.msra.mxu0 0.0
    %271 = vmatprep.subr.mxu0 0.0
    %272 = vmatpush1.msra.mxu0 0.0
    %273 = vmatprep.mubr.f32.mxu0 0.0
    %274 = vmatmul.mubr.f32.gmra.mrb[0].mxu0 %v198
    %v275 = vpop.f32.mrb[0].mxu0
    %v276 = vadd.f32 %v194, %v275
    %v277 = vpop.f32.mrb[0].mxu0
    %278 = vmatprep.mubr.f32.mxu0 0.0
    %279 = vmatmul.mubr.f32.gmra.mrb[0].mxu0 %v201
    %v280 = vpop.f32.mrb[0].mxu0
    %v281 = vadd.f32 %v194, %v280
    %v282 = vpop.f32.mrb[0].mxu0
    %283 = vmatprep.mubr.f32.mxu0 0.0
    %284 = vmatmul.mubr.f32.gmra.mrb[0].mxu0 %v204
    %v285 = vpop.f32.mrb[0].mxu0
    %v286 = vadd.f32 %v194, %v285
    %v287 = vpop.f32.mrb[0].mxu0
    %288 = vmatprep.mubr.f32.mxu0 0.0
    %289 = vmatmul.mubr.f32.gmra.mrb[0].mxu0 %v207
    %v290 = vpop.f32.mrb[0].mxu0
    %v291 = vadd.f32 %v194, %v290
    %v292 = vpop.f32.mrb[0].mxu0
    %293 = vdwg.mxu0
    %v295 = vrot.slane %v291, 4
    %v297 = vsel %vm59, %v276, %v295
    %v299 = vsel %vm196, 0.0, 0
    %301 = vmatprep.subr.mxu0 0.0
    %302 = vmatpush1.msra.mxu0 %v185
    %303 = vmatprep.subr.mxu0 0.0
    %304 = vmatpush1.msra.mxu0 %v186
    %305 = vmatprep.subr.mxu0 0.0
    %306 = vmatpush1.msra.mxu0 %v187
    %307 = vmatprep.subr.mxu0 0.0
    %308 = vmatpush1.msra.mxu0 %v188
    %309 = vmatprep.subr.mxu0 0.0
    %310 = vmatpush1.msra.mxu0 0.0
    %311 = vmatprep.subr.mxu0 0.0
    %312 = vmatpush1.msra.mxu0 0.0
    %313 = vmatprep.subr.mxu0 0.0
    %314 = vmatpush1.msra.mxu0 0.0
    %315 = vmatprep.subr.mxu0 0.0
    %316 = vmatpush1.msra.mxu0 0.0
    %317 = vmatprep.subr.mxu0 0.0
    %318 = vmatpush1.msra.mxu0 0.0
    %319 = vmatprep.subr.mxu0 0.0
    %320 = vmatpush1.msra.mxu0 0.0
    %321 = vmatprep.subr.mxu0 0.0
    %322 = vmatpush1.msra.mxu0 0.0
    %323 = vmatprep.subr.mxu0 0.0
    %324 = vmatpush1.msra.mxu0 0.0
    %325 = vmatprep.subr.mxu0 0.0
    %326 = vmatpush1.msra.mxu0 0.0
    %327 = vmatprep.subr.mxu0 0.0
    %328 = vmatpush1.msra.mxu0 0.0
    %329 = vmatprep.subr.mxu0 0.0
    %330 = vmatpush1.msra.mxu0 0.0
    %331 = vmatprep.subr.mxu0 0.0
    %332 = vmatpush1.msra.mxu0 0.0
    %333 = vmatprep.subr.mxu0 0.0
    %334 = vmatpush1.msra.mxu0 0.0
    %335 = vmatprep.subr.mxu0 0.0
    %336 = vmatpush1.msra.mxu0 0.0
    %337 = vmatprep.subr.mxu0 0.0
    %338 = vmatpush1.msra.mxu0 0.0
    %339 = vmatprep.subr.mxu0 0.0
    %340 = vmatpush1.msra.mxu0 0.0
    %341 = vmatprep.subr.mxu0 0.0
    %342 = vmatpush1.msra.mxu0 0.0
    %343 = vmatprep.subr.mxu0 0.0
    %344 = vmatpush1.msra.mxu0 0.0
    %345 = vmatprep.subr.mxu0 0.0
    %346 = vmatpush1.msra.mxu0 0.0
    %347 = vmatprep.subr.mxu0 0.0
    %348 = vmatpush1.msra.mxu0 0.0
    %349 = vmatprep.subr.mxu0 0.0
    %350 = vmatpush1.msra.mxu0 0.0
    %351 = vmatprep.subr.mxu0 0.0
    %352 = vmatpush1.msra.mxu0 0.0
    %353 = vmatprep.subr.mxu0 0.0
    %354 = vmatpush1.msra.mxu0 0.0
    %355 = vmatprep.subr.mxu0 0.0
    %356 = vmatpush1.msra.mxu0 0.0
    %357 = vmatprep.subr.mxu0 0.0
    %358 = vmatpush1.msra.mxu0 0.0
    %359 = vmatprep.subr.mxu0 0.0
    %360 = vmatpush1.msra.mxu0 0.0
    %361 = vmatprep.subr.mxu0 0.0
    %362 = vmatpush1.msra.mxu0 0.0
    %363 = vmatprep.subr.mxu0 0.0
    %364 = vmatpush1.msra.mxu0 0.0
    %365 = vmatprep.mubr.f32.mxu0 0.0
    %366 = vmatmul.mubr.f32.gmra.mrb[0].mxu0 %v299
    %v367 = vpop.f32.mrb[0].mxu0
    %v368 = vadd.f32 0.0, %v367
    %v369 = vpop.f32.mrb[0].mxu0
    %370 = vdwg.mxu0
    %v371 = vadd.f32 %v297, %v368
    %v372 = vxor.u32 %v371, 2147483648
    %v373 = vmul.f32 %v372, 1.442695
    %v374 = vpow.pop %v373
    %v375 = vadd.f32 %v374, 1.0
    %v376 = vrcp.pop %v375
    %v377 = vmul.f32 1.0, %v376
    %v378 = vtanh.pop %v371
    %v379 = vmul.f32 %v377, 0.0
    %381 = vrot.lane.b32.xlu0 %v378, 64
    %v382 = vpop.permute.xlu0 %381
    %v384 = vmul.f32 %v377, %v382
    %386 = vrot.lane.b32.xlu0 %v384, 32
    %v387 = vpop.permute.xlu0 %386
    %v389 = vadd.f32 %v379, %v387
    %v390 = vtanh.pop %v389
    %392 = vrot.lane.b32.xlu0 %v390, 64
    %v393 = vpop.permute.xlu0 %392
    %v395 = vmul.f32 %v377, %v393
    %397 = vrot.lane.b32.xlu0 %v395, 32
    %v398 = vpop.permute.xlu0 %397
    %v399 = vsel %vm196, %v398, 0
    %401 = vmatprep.subr.mxu0 0.0
    %402 = vmatpush1.msra.mxu0 %v185
    %403 = vmatprep.subr.mxu0 0.0
    %404 = vmatpush1.msra.mxu0 %v186
    %405 = vmatprep.subr.mxu0 0.0
    %406 = vmatpush1.msra.mxu0 %v187
    %407 = vmatprep.subr.mxu0 0.0
    %408 = vmatpush1.msra.mxu0 %v188
    %409 = vmatprep.subr.mxu0 0.0
    %410 = vmatpush1.msra.mxu0 0.0
    %411 = vmatprep.subr.mxu0 0.0
    %412 = vmatpush1.msra.mxu0 0.0
    %413 = vmatprep.subr.mxu0 0.0
    %414 = vmatpush1.msra.mxu0 0.0
    %415 = vmatprep.subr.mxu0 0.0
    %416 = vmatpush1.msra.mxu0 0.0
    %417 = vmatprep.subr.mxu0 0.0
    %418 = vmatpush1.msra.mxu0 0.0
    %419 = vmatprep.subr.mxu0 0.0
    %420 = vmatpush1.msra.mxu0 0.0
    %421 = vmatprep.subr.mxu0 0.0
    %422 = vmatpush1.msra.mxu0 0.0
    %423 = vmatprep.subr.mxu0 0.0
    %424 = vmatpush1.msra.mxu0 0.0
    %425 = vmatprep.subr.mxu0 0.0
    %426 = vmatpush1.msra.mxu0 0.0
    %427 = vmatprep.subr.mxu0 0.0
    %428 = vmatpush1.msra.mxu0 0.0
    %429 = vmatprep.subr.mxu0 0.0
    %430 = vmatpush1.msra.mxu0 0.0
    %431 = vmatprep.subr.mxu0 0.0
    %432 = vmatpush1.msra.mxu0 0.0
    %433 = vmatprep.subr.mxu0 0.0
    %434 = vmatpush1.msra.mxu0 0.0
    %435 = vmatprep.subr.mxu0 0.0
    %436 = vmatpush1.msra.mxu0 0.0
    %437 = vmatprep.subr.mxu0 0.0
    %438 = vmatpush1.msra.mxu0 0.0
    %439 = vmatprep.subr.mxu0 0.0
    %440 = vmatpush1.msra.mxu0 0.0
    %441 = vmatprep.subr.mxu0 0.0
    %442 = vmatpush1.msra.mxu0 0.0
    %443 = vmatprep.subr.mxu0 0.0
    %444 = vmatpush1.msra.mxu0 0.0
    %445 = vmatprep.subr.mxu0 0.0
    %446 = vmatpush1.msra.mxu0 0.0
    %447 = vmatprep.subr.mxu0 0.0
    %448 = vmatpush1.msra.mxu0 0.0
    %449 = vmatprep.subr.mxu0 0.0
    %450 = vmatpush1.msra.mxu0 0.0
    %451 = vmatprep.subr.mxu0 0.0
    %452 = vmatpush1.msra.mxu0 0.0
    %453 = vmatprep.subr.mxu0 0.0
    %454 = vmatpush1.msra.mxu0 0.0
    %455 = vmatprep.subr.mxu0 0.0
    %456 = vmatpush1.msra.mxu0 0.0
    %457 = vmatprep.subr.mxu0 0.0
    %458 = vmatpush1.msra.mxu0 0.0
    %459 = vmatprep.subr.mxu0 0.0
    %460 = vmatpush1.msra.mxu0 0.0
    %461 = vmatprep.subr.mxu0 0.0
    %462 = vmatpush1.msra.mxu0 0.0
    %463 = vmatprep.subr.mxu0 0.0
    %464 = vmatpush1.msra.mxu0 0.0
    %465 = vmatprep.mubr.f32.mxu0 0.0
    %466 = vmatmul.mubr.f32.gmra.mrb[0].mxu0 %v399
    %v467 = vpop.f32.mrb[0].mxu0
    %v468 = vadd.f32 0.0, %v467
    %v469 = vpop.f32.mrb[0].mxu0
    %470 = vdwg.mxu0
    %v472 = vrot.slane %v468, 4
    %v474 = vadd.f32 %v297, %v472
    %v475 = vxor.u32 %v474, 2147483648
    %v476 = vmul.f32 %v475, 1.442695
    %v477 = vpow.pop %v476
    %v478 = vadd.f32 %v477, 1.0
    %v479 = vrcp.pop %v478
    %v480 = vmul.f32 1.0, %v479
    %v481 = vtanh.pop %v474
    %v483 = vrot.slane %v389, 4
    %v485 = vmul.f32 %v480, %v483
    %487 = vrot.lane.b32.xlu0 %v481, 64
    %v488 = vpop.permute.xlu0 %487
    %v490 = vmul.f32 %v480, %v488
    %492 = vrot.lane.b32.xlu0 %v490, 32
    %v493 = vpop.permute.xlu0 %492
    %v495 = vadd.f32 %v485, %v493
    %v496 = vtanh.pop %v495
    %498 = vrot.lane.b32.xlu0 %v496, 64
    %v499 = vpop.permute.xlu0 %498
    %v501 = vmul.f32 %v480, %v499
    %v503 = vrot.slane %v286, 4
    %v505 = vsel %vm59, %v281, %v503
    %v507 = vrot.slane %v501, 4
    %508 = vrot.lane.b32.xlu0 %v507, 32
    %v509 = vpop.permute.xlu0 %508
    %v510 = vsel %vm196, %v509, 0
    %512 = vmatprep.subr.mxu0 0.0
    %513 = vmatpush1.msra.mxu0 %v185
    %514 = vmatprep.subr.mxu0 0.0
    %515 = vmatpush1.msra.mxu0 %v186
    %516 = vmatprep.subr.mxu0 0.0
    %517 = vmatpush1.msra.mxu0 %v187
    %518 = vmatprep.subr.mxu0 0.0
    %519 = vmatpush1.msra.mxu0 %v188
    %520 = vmatprep.subr.mxu0 0.0
    %521 = vmatpush1.msra.mxu0 0.0
    %522 = vmatprep.subr.mxu0 0.0
    %523 = vmatpush1.msra.mxu0 0.0
    %524 = vmatprep.subr.mxu0 0.0
    %525 = vmatpush1.msra.mxu0 0.0
    %526 = vmatprep.subr.mxu0 0.0
    %527 = vmatpush1.msra.mxu0 0.0
    %528 = vmatprep.subr.mxu0 0.0
    %529 = vmatpush1.msra.mxu0 0.0
    %530 = vmatprep.subr.mxu0 0.0
    %531 = vmatpush1.msra.mxu0 0.0
    %532 = vmatprep.subr.mxu0 0.0
    %533 = vmatpush1.msra.mxu0 0.0
    %534 = vmatprep.subr.mxu0 0.0
    %535 = vmatpush1.msra.mxu0 0.0
    %536 = vmatprep.subr.mxu0 0.0
    %537 = vmatpush1.msra.mxu0 0.0
    %538 = vmatprep.subr.mxu0 0.0
    %539 = vmatpush1.msra.mxu0 0.0
    %540 = vmatprep.subr.mxu0 0.0
    %541 = vmatpush1.msra.mxu0 0.0
    %542 = vmatprep.subr.mxu0 0.0
    %543 = vmatpush1.msra.mxu0 0.0
    %544 = vmatprep.subr.mxu0 0.0
    %545 = vmatpush1.msra.mxu0 0.0
    %546 = vmatprep.subr.mxu0 0.0
    %547 = vmatpush1.msra.mxu0 0.0
    %548 = vmatprep.subr.mxu0 0.0
    %549 = vmatpush1.msra.mxu0 0.0
    %550 = vmatprep.subr.mxu0 0.0
    %551 = vmatpush1.msra.mxu0 0.0
    %552 = vmatprep.subr.mxu0 0.0
    %553 = vmatpush1.msra.mxu0 0.0
    %554 = vmatprep.subr.mxu0 0.0
    %555 = vmatpush1.msra.mxu0 0.0
    %556 = vmatprep.subr.mxu0 0.0
    %557 = vmatpush1.msra.mxu0 0.0
    %558 = vmatprep.subr.mxu0 0.0
    %559 = vmatpush1.msra.mxu0 0.0
    %560 = vmatprep.subr.mxu0 0.0
    %561 = vmatpush1.msra.mxu0 0.0
    %562 = vmatprep.subr.mxu0 0.0
    %563 = vmatpush1.msra.mxu0 0.0
    %564 = vmatprep.subr.mxu0 0.0
    %565 = vmatpush1.msra.mxu0 0.0
    %566 = vmatprep.subr.mxu0 0.0
    %567 = vmatpush1.msra.mxu0 0.0
    %568 = vmatprep.subr.mxu0 0.0
    %569 = vmatpush1.msra.mxu0 0.0
    %570 = vmatprep.subr.mxu0 0.0
    %571 = vmatpush1.msra.mxu0 0.0
    %572 = vmatprep.subr.mxu0 0.0
    %573 = vmatpush1.msra.mxu0 0.0
    %574 = vmatprep.subr.mxu0 0.0
    %575 = vmatpush1.msra.mxu0 0.0
    %576 = vmatprep.mubr.f32.mxu0 0.0
    %577 = vmatmul.mubr.f32.gmra.mrb[0].mxu0 %v510
    %v578 = vpop.f32.mrb[0].mxu0
    %v579 = vadd.f32 0.0, %v578
    %v580 = vpop.f32.mrb[0].mxu0
    %581 = vdwg.mxu0
    %v582 = vadd.f32 %v505, %v579
    %v583 = vxor.u32 %v582, 2147483648
    %v584 = vmul.f32 %v583, 1.442695
    %v585 = vpow.pop %v584
    %v586 = vadd.f32 %v585, 1.0
    %v587 = vrcp.pop %v586
    %v588 = vmul.f32 1.0, %v587
    %v589 = vtanh.pop %v582
    %v591 = vrot.slane %v495, 4
    %v593 = vmul.f32 %v588, %v591
    %595 = vrot.lane.b32.xlu0 %v589, 64
    %v596 = vpop.permute.xlu0 %595
    %v598 = vmul.f32 %v588, %v596
    %600 = vrot.lane.b32.xlu0 %v598, 32
    %v601 = vpop.permute.xlu0 %600
    %v603 = vadd.f32 %v593, %v601
    %v604 = vtanh.pop %v603
    %606 = vrot.lane.b32.xlu0 %v604, 64
    %v607 = vpop.permute.xlu0 %606
    %v609 = vmul.f32 %v588, %v607
    %611 = vrot.lane.b32.xlu0 %v609, 32
    %v612 = vpop.permute.xlu0 %611
    %v613 = vsel %vm196, %v612, 0
    %615 = vmatprep.subr.mxu0 0.0
    %616 = vmatpush1.msra.mxu0 %v185
    %617 = vmatprep.subr.mxu0 0.0
    %618 = vmatpush1.msra.mxu0 %v186
    %619 = vmatprep.subr.mxu0 0.0
    %620 = vmatpush1.msra.mxu0 %v187
    %621 = vmatprep.subr.mxu0 0.0
    %622 = vmatpush1.msra.mxu0 %v188
    %623 = vmatprep.subr.mxu0 0.0
    %624 = vmatpush1.msra.mxu0 0.0
    %625 = vmatprep.subr.mxu0 0.0
    %626 = vmatpush1.msra.mxu0 0.0
    %627 = vmatprep.subr.mxu0 0.0
    %628 = vmatpush1.msra.mxu0 0.0
    %629 = vmatprep.subr.mxu0 0.0
    %630 = vmatpush1.msra.mxu0 0.0
    %631 = vmatprep.subr.mxu0 0.0
    %632 = vmatpush1.msra.mxu0 0.0
    %633 = vmatprep.subr.mxu0 0.0
    %634 = vmatpush1.msra.mxu0 0.0
    %635 = vmatprep.subr.mxu0 0.0
    %636 = vmatpush1.msra.mxu0 0.0
    %637 = vmatprep.subr.mxu0 0.0
    %638 = vmatpush1.msra.mxu0 0.0
    %639 = vmatprep.subr.mxu0 0.0
    %640 = vmatpush1.msra.mxu0 0.0
    %641 = vmatprep.subr.mxu0 0.0
    %642 = vmatpush1.msra.mxu0 0.0
    %643 = vmatprep.subr.mxu0 0.0
    %644 = vmatpush1.msra.mxu0 0.0
    %645 = vmatprep.subr.mxu0 0.0
    %646 = vmatpush1.msra.mxu0 0.0
    %647 = vmatprep.subr.mxu0 0.0
    %648 = vmatpush1.msra.mxu0 0.0
    %649 = vmatprep.subr.mxu0 0.0
    %650 = vmatpush1.msra.mxu0 0.0
    %651 = vmatprep.subr.mxu0 0.0
    %652 = vmatpush1.msra.mxu0 0.0
    %653 = vmatprep.subr.mxu0 0.0
    %654 = vmatpush1.msra.mxu0 0.0
    %655 = vmatprep.subr.mxu0 0.0
    %656 = vmatpush1.msra.mxu0 0.0
    %657 = vmatprep.subr.mxu0 0.0
    %658 = vmatpush1.msra.mxu0 0.0
    %659 = vmatprep.subr.mxu0 0.0
    %660 = vmatpush1.msra.mxu0 0.0
    %661 = vmatprep.subr.mxu0 0.0
    %662 = vmatpush1.msra.mxu0 0.0
    %663 = vmatprep.subr.mxu0 0.0
    %664 = vmatpush1.msra.mxu0 0.0
    %665 = vmatprep.subr.mxu0 0.0
    %666 = vmatpush1.msra.mxu0 0.0
    %667 = vmatprep.subr.mxu0 0.0
    %668 = vmatpush1.msra.mxu0 0.0
    %669 = vmatprep.subr.mxu0 0.0
    %670 = vmatpush1.msra.mxu0 0.0
    %671 = vmatprep.subr.mxu0 0.0
    %672 = vmatpush1.msra.mxu0 0.0
    %673 = vmatprep.subr.mxu0 0.0
    %674 = vmatpush1.msra.mxu0 0.0
    %675 = vmatprep.subr.mxu0 0.0
    %676 = vmatpush1.msra.mxu0 0.0
    %677 = vmatprep.subr.mxu0 0.0
    %678 = vmatpush1.msra.mxu0 0.0
    %679 = vmatprep.mubr.f32.mxu0 0.0
    %680 = vmatmul.mubr.f32.gmra.mrb[0].mxu0 %v613
    %v681 = vpop.f32.mrb[0].mxu0
    %v682 = vadd.f32 0.0, %v681
    %v683 = vpop.f32.mrb[0].mxu0
    %684 = vdwg.mxu0
    %v686 = vrot.slane %v682, 4
    %v688 = vadd.f32 %v505, %v686
    %v689 = vxor.u32 %v688, 2147483648
    %v690 = vmul.f32 %v689, 1.442695
    %v691 = vpow.pop %v690
    %v692 = vadd.f32 %v691, 1.0
    %v693 = vrcp.pop %v692
    %v694 = vmul.f32 1.0, %v693
    %v695 = vtanh.pop %v688
    %v697 = vrot.slane %v603, 4
    %v699 = vmul.f32 %v694, %v697
    %701 = vrot.lane.b32.xlu0 %v695, 64
    %v702 = vpop.permute.xlu0 %701
    %v704 = vmul.f32 %v694, %v702
    %706 = vrot.lane.b32.xlu0 %v704, 32
    %v707 = vpop.permute.xlu0 %706
    %v709 = vadd.f32 %v699, %v707
    %v710 = vtanh.pop %v709
    %712 = vrot.lane.b32.xlu0 %v710, 64
    %v713 = vpop.permute.xlu0 %712
    %v715 = vmul.f32 %v694, %v713
    %v717 = vrot.slane %v281, 4
    %v719 = vsel %vm59, %v286, %v717
    %v721 = vrot.slane %v715, 4
    %722 = vrot.lane.b32.xlu0 %v721, 32
    %v723 = vpop.permute.xlu0 %722
    %v724 = vsel %vm196, %v723, 0
    %726 = vmatprep.subr.mxu0 0.0
    %727 = vmatpush1.msra.mxu0 %v185
    %728 = vmatprep.subr.mxu0 0.0
    %729 = vmatpush1.msra.mxu0 %v186
    %730 = vmatprep.subr.mxu0 0.0
    %731 = vmatpush1.msra.mxu0 %v187
    %732 = vmatprep.subr.mxu0 0.0
    %733 = vmatpush1.msra.mxu0 %v188
    %734 = vmatprep.subr.mxu0 0.0
    %735 = vmatpush1.msra.mxu0 0.0
    %736 = vmatprep.subr.mxu0 0.0
    %737 = vmatpush1.msra.mxu0 0.0
    %738 = vmatprep.subr.mxu0 0.0
    %739 = vmatpush1.msra.mxu0 0.0
    %740 = vmatprep.subr.mxu0 0.0
    %741 = vmatpush1.msra.mxu0 0.0
    %742 = vmatprep.subr.mxu0 0.0
    %743 = vmatpush1.msra.mxu0 0.0
    %744 = vmatprep.subr.mxu0 0.0
    %745 = vmatpush1.msra.mxu0 0.0
    %746 = vmatprep.subr.mxu0 0.0
    %747 = vmatpush1.msra.mxu0 0.0
    %748 = vmatprep.subr.mxu0 0.0
    %749 = vmatpush1.msra.mxu0 0.0
    %750 = vmatprep.subr.mxu0 0.0
    %751 = vmatpush1.msra.mxu0 0.0
    %752 = vmatprep.subr.mxu0 0.0
    %753 = vmatpush1.msra.mxu0 0.0
    %754 = vmatprep.subr.mxu0 0.0
    %755 = vmatpush1.msra.mxu0 0.0
    %756 = vmatprep.subr.mxu0 0.0
    %757 = vmatpush1.msra.mxu0 0.0
    %758 = vmatprep.subr.mxu0 0.0
    %759 = vmatpush1.msra.mxu0 0.0
    %760 = vmatprep.subr.mxu0 0.0
    %761 = vmatpush1.msra.mxu0 0.0
    %762 = vmatprep.subr.mxu0 0.0
    %763 = vmatpush1.msra.mxu0 0.0
    %764 = vmatprep.subr.mxu0 0.0
    %765 = vmatpush1.msra.mxu0 0.0
    %766 = vmatprep.subr.mxu0 0.0
    %767 = vmatpush1.msra.mxu0 0.0
    %768 = vmatprep.subr.mxu0 0.0
    %769 = vmatpush1.msra.mxu0 0.0
    %770 = vmatprep.subr.mxu0 0.0
    %771 = vmatpush1.msra.mxu0 0.0
    %772 = vmatprep.subr.mxu0 0.0
    %773 = vmatpush1.msra.mxu0 0.0
    %774 = vmatprep.subr.mxu0 0.0
    %775 = vmatpush1.msra.mxu0 0.0
    %776 = vmatprep.subr.mxu0 0.0
    %777 = vmatpush1.msra.mxu0 0.0
    %778 = vmatprep.subr.mxu0 0.0
    %779 = vmatpush1.msra.mxu0 0.0
    %780 = vmatprep.subr.mxu0 0.0
    %781 = vmatpush1.msra.mxu0 0.0
    %782 = vmatprep.subr.mxu0 0.0
    %783 = vmatpush1.msra.mxu0 0.0
    %784 = vmatprep.subr.mxu0 0.0
    %785 = vmatpush1.msra.mxu0 0.0
    %786 = vmatprep.subr.mxu0 0.0
    %787 = vmatpush1.msra.mxu0 0.0
    %788 = vmatprep.subr.mxu0 0.0
    %789 = vmatpush1.msra.mxu0 0.0
    %790 = vmatprep.mubr.f32.mxu0 0.0
    %791 = vmatmul.mubr.f32.gmra.mrb[0].mxu0 %v724
    %v792 = vpop.f32.mrb[0].mxu0
    %v793 = vadd.f32 0.0, %v792
    %v794 = vpop.f32.mrb[0].mxu0
    %795 = vdwg.mxu0
    %v796 = vadd.f32 %v719, %v793
    %v797 = vxor.u32 %v796, 2147483648
    %v798 = vmul.f32 %v797, 1.442695
    %v799 = vpow.pop %v798
    %v800 = vadd.f32 %v799, 1.0
    %v801 = vrcp.pop %v800
    %v802 = vmul.f32 1.0, %v801
    %v803 = vtanh.pop %v796
    %v805 = vrot.slane %v709, 4
    %v807 = vmul.f32 %v802, %v805
    %809 = vrot.lane.b32.xlu0 %v803, 64
    %v810 = vpop.permute.xlu0 %809
    %v812 = vmul.f32 %v802, %v810
    %814 = vrot.lane.b32.xlu0 %v812, 32
    %v815 = vpop.permute.xlu0 %814
    %v817 = vadd.f32 %v807, %v815
    %v818 = vtanh.pop %v817
    %820 = vrot.lane.b32.xlu0 %v818, 64
    %v821 = vpop.permute.xlu0 %820
    %v823 = vmul.f32 %v802, %v821
    %825 = vrot.lane.b32.xlu0 %v823, 32
    %v826 = vpop.permute.xlu0 %825
    %v827 = vsel %vm196, %v826, 0
    %829 = vmatprep.subr.mxu0 0.0
    %830 = vmatpush1.msra.mxu0 %v185
    %831 = vmatprep.subr.mxu0 0.0
    %832 = vmatpush1.msra.mxu0 %v186
    %833 = vmatprep.subr.mxu0 0.0
    %834 = vmatpush1.msra.mxu0 %v187
    %835 = vmatprep.subr.mxu0 0.0
    %836 = vmatpush1.msra.mxu0 %v188
    %837 = vmatprep.subr.mxu0 0.0
    %838 = vmatpush1.msra.mxu0 0.0
    %839 = vmatprep.subr.mxu0 0.0
    %840 = vmatpush1.msra.mxu0 0.0
    %841 = vmatprep.subr.mxu0 0.0
    %842 = vmatpush1.msra.mxu0 0.0
    %843 = vmatprep.subr.mxu0 0.0
    %844 = vmatpush1.msra.mxu0 0.0
    %845 = vmatprep.subr.mxu0 0.0
    %846 = vmatpush1.msra.mxu0 0.0
    %847 = vmatprep.subr.mxu0 0.0
    %848 = vmatpush1.msra.mxu0 0.0
    %849 = vmatprep.subr.mxu0 0.0
    %850 = vmatpush1.msra.mxu0 0.0
    %851 = vmatprep.subr.mxu0 0.0
    %852 = vmatpush1.msra.mxu0 0.0
    %853 = vmatprep.subr.mxu0 0.0
    %854 = vmatpush1.msra.mxu0 0.0
    %855 = vmatprep.subr.mxu0 0.0
    %856 = vmatpush1.msra.mxu0 0.0
    %857 = vmatprep.subr.mxu0 0.0
    %858 = vmatpush1.msra.mxu0 0.0
    %859 = vmatprep.subr.mxu0 0.0
    %860 = vmatpush1.msra.mxu0 0.0
    %861 = vmatprep.subr.mxu0 0.0
    %862 = vmatpush1.msra.mxu0 0.0
    %863 = vmatprep.subr.mxu0 0.0
    %864 = vmatpush1.msra.mxu0 0.0
    %865 = vmatprep.subr.mxu0 0.0
    %866 = vmatpush1.msra.mxu0 0.0
    %867 = vmatprep.subr.mxu0 0.0
    %868 = vmatpush1.msra.mxu0 0.0
    %869 = vmatprep.subr.mxu0 0.0
    %870 = vmatpush1.msra.mxu0 0.0
    %871 = vmatprep.subr.mxu0 0.0
    %872 = vmatpush1.msra.mxu0 0.0
    %873 = vmatprep.subr.mxu0 0.0
    %874 = vmatpush1.msra.mxu0 0.0
    %875 = vmatprep.subr.mxu0 0.0
    %876 = vmatpush1.msra.mxu0 0.0
    %877 = vmatprep.subr.mxu0 0.0
    %878 = vmatpush1.msra.mxu0 0.0
    %879 = vmatprep.subr.mxu0 0.0
    %880 = vmatpush1.msra.mxu0 0.0
    %881 = vmatprep.subr.mxu0 0.0
    %882 = vmatpush1.msra.mxu0 0.0
    %883 = vmatprep.subr.mxu0 0.0
    %884 = vmatpush1.msra.mxu0 0.0
    %885 = vmatprep.subr.mxu0 0.0
    %886 = vmatpush1.msra.mxu0 0.0
    %887 = vmatprep.subr.mxu0 0.0
    %888 = vmatpush1.msra.mxu0 0.0
    %889 = vmatprep.subr.mxu0 0.0
    %890 = vmatpush1.msra.mxu0 0.0
    %891 = vmatprep.subr.mxu0 0.0
    %892 = vmatpush1.msra.mxu0 0.0
    %893 = vmatprep.mubr.f32.mxu0 0.0
    %894 = vmatmul.mubr.f32.gmra.mrb[0].mxu0 %v827
    %v895 = vpop.f32.mrb[0].mxu0
    %v896 = vadd.f32 0.0, %v895
    %v897 = vpop.f32.mrb[0].mxu0
    %898 = vdwg.mxu0
    %v900 = vrot.slane %v896, 4
    %v902 = vadd.f32 %v719, %v900
    %v903 = vxor.u32 %v902, 2147483648
    %v904 = vmul.f32 %v903, 1.442695
    %v905 = vpow.pop %v904
    %v906 = vadd.f32 %v905, 1.0
    %v907 = vrcp.pop %v906
    %v908 = vmul.f32 1.0, %v907
    %v909 = vtanh.pop %v902
    %v911 = vrot.slane %v817, 4
    %v913 = vmul.f32 %v908, %v911
    %915 = vrot.lane.b32.xlu0 %v909, 64
    %v916 = vpop.permute.xlu0 %915
    %v918 = vmul.f32 %v908, %v916
    %920 = vrot.lane.b32.xlu0 %v918, 32
    %v921 = vpop.permute.xlu0 %920
    %v923 = vadd.f32 %v913, %v921
    %v924 = vtanh.pop %v923
    %926 = vrot.lane.b32.xlu0 %v924, 64
    %v927 = vpop.permute.xlu0 %926
    %v929 = vmul.f32 %v908, %v927
    %v931 = vrot.slane %v276, 4
    %v933 = vsel %vm59, %v291, %v931
    %v935 = vrot.slane %v929, 4
    %936 = vrot.lane.b32.xlu0 %v935, 32
    %v937 = vpop.permute.xlu0 %936
    %v938 = vsel %vm196, %v937, 0
    %940 = vmatprep.subr.mxu0 0.0
    %941 = vmatpush1.msra.mxu0 %v185
    %942 = vmatprep.subr.mxu0 0.0
    %943 = vmatpush1.msra.mxu0 %v186
    %944 = vmatprep.subr.mxu0 0.0
    %945 = vmatpush1.msra.mxu0 %v187
    %946 = vmatprep.subr.mxu0 0.0
    %947 = vmatpush1.msra.mxu0 %v188
    %948 = vmatprep.subr.mxu0 0.0
    %949 = vmatpush1.msra.mxu0 0.0
    %950 = vmatprep.subr.mxu0 0.0
    %951 = vmatpush1.msra.mxu0 0.0
    %952 = vmatprep.subr.mxu0 0.0
    %953 = vmatpush1.msra.mxu0 0.0
    %954 = vmatprep.subr.mxu0 0.0
    %955 = vmatpush1.msra.mxu0 0.0
    %956 = vmatprep.subr.mxu0 0.0
    %957 = vmatpush1.msra.mxu0 0.0
    %958 = vmatprep.subr.mxu0 0.0
    %959 = vmatpush1.msra.mxu0 0.0
    %960 = vmatprep.subr.mxu0 0.0
    %961 = vmatpush1.msra.mxu0 0.0
    %962 = vmatprep.subr.mxu0 0.0
    %963 = vmatpush1.msra.mxu0 0.0
    %964 = vmatprep.subr.mxu0 0.0
    %965 = vmatpush1.msra.mxu0 0.0
    %966 = vmatprep.subr.mxu0 0.0
    %967 = vmatpush1.msra.mxu0 0.0
    %968 = vmatprep.subr.mxu0 0.0
    %969 = vmatpush1.msra.mxu0 0.0
    %970 = vmatprep.subr.mxu0 0.0
    %971 = vmatpush1.msra.mxu0 0.0
    %972 = vmatprep.subr.mxu0 0.0
    %973 = vmatpush1.msra.mxu0 0.0
    %974 = vmatprep.subr.mxu0 0.0
    %975 = vmatpush1.msra.mxu0 0.0
    %976 = vmatprep.subr.mxu0 0.0
    %977 = vmatpush1.msra.mxu0 0.0
    %978 = vmatprep.subr.mxu0 0.0
    %979 = vmatpush1.msra.mxu0 0.0
    %980 = vmatprep.subr.mxu0 0.0
    %981 = vmatpush1.msra.mxu0 0.0
    %982 = vmatprep.subr.mxu0 0.0
    %983 = vmatpush1.msra.mxu0 0.0
    %984 = vmatprep.subr.mxu0 0.0
    %985 = vmatpush1.msra.mxu0 0.0
    %986 = vmatprep.subr.mxu0 0.0
    %987 = vmatpush1.msra.mxu0 0.0
    %988 = vmatprep.subr.mxu0 0.0
    %989 = vmatpush1.msra.mxu0 0.0
    %990 = vmatprep.subr.mxu0 0.0
    %991 = vmatpush1.msra.mxu0 0.0
    %992 = vmatprep.subr.mxu0 0.0
    %993 = vmatpush1.msra.mxu0 0.0
    %994 = vmatprep.subr.mxu0 0.0
    %995 = vmatpush1.msra.mxu0 0.0
    %996 = vmatprep.subr.mxu0 0.0
    %997 = vmatpush1.msra.mxu0 0.0
    %998 = vmatprep.subr.mxu0 0.0
    %999 = vmatpush1.msra.mxu0 0.0
    %1000 = vmatprep.subr.mxu0 0.0
    %1001 = vmatpush1.msra.mxu0 0.0
    %1002 = vmatprep.subr.mxu0 0.0
    %1003 = vmatpush1.msra.mxu0 0.0
    %1004 = vmatprep.mubr.f32.mxu0 0.0
    %1005 = vmatmul.mubr.f32.gmra.mrb[0].mxu0 %v938
    %v1006 = vpop.f32.mrb[0].mxu0
    %v1007 = vadd.f32 0.0, %v1006
    %v1008 = vpop.f32.mrb[0].mxu0
    %1009 = vdwg.mxu0
    %v1010 = vadd.f32 %v933, %v1007
    %v1011 = vxor.u32 %v1010, 2147483648
    %v1012 = vmul.f32 %v1011, 1.442695
    %v1013 = vpow.pop %v1012
    %v1014 = vadd.f32 %v1013, 1.0
    %v1015 = vrcp.pop %v1014
    %v1016 = vmul.f32 1.0, %v1015
    %v1017 = vtanh.pop %v1010
    %v1019 = vrot.slane %v923, 4
    %v1021 = vmul.f32 %v1016, %v1019
    %1023 = vrot.lane.b32.xlu0 %v1017, 64
    %v1024 = vpop.permute.xlu0 %1023
    %v1026 = vmul.f32 %v1016, %v1024
    %1028 = vrot.lane.b32.xlu0 %v1026, 32
    %v1029 = vpop.permute.xlu0 %1028
    %v1031 = vadd.f32 %v1021, %v1029
    %v1032 = vtanh.pop %v1031
    %1034 = vrot.lane.b32.xlu0 %v1032, 64
    %v1035 = vpop.permute.xlu0 %1034
    %v1037 = vmul.f32 %v1016, %v1035
    %1039 = vrot.lane.b32.xlu0 %v1037, 32
    %v1040 = vpop.permute.xlu0 %1039
    %v1041 = vsel %vm196, %v1040, 0
    %1043 = vmatprep.subr.mxu0 0.0
    %1044 = vmatpush1.msra.mxu0 %v185
    %1045 = vmatprep.subr.mxu0 0.0
    %1046 = vmatpush1.msra.mxu0 %v186
    %1047 = vmatprep.subr.mxu0 0.0
    %1048 = vmatpush1.msra.mxu0 %v187
    %1049 = vmatprep.subr.mxu0 0.0
    %1050 = vmatpush1.msra.mxu0 %v188
    %1051 = vmatprep.subr.mxu0 0.0
    %1052 = vmatpush1.msra.mxu0 0.0
    %1053 = vmatprep.subr.mxu0 0.0
    %1054 = vmatpush1.msra.mxu0 0.0
    %1055 = vmatprep.subr.mxu0 0.0
    %1056 = vmatpush1.msra.mxu0 0.0
    %1057 = vmatprep.subr.mxu0 0.0
    %1058 = vmatpush1.msra.mxu0 0.0
    %1059 = vmatprep.subr.mxu0 0.0
    %1060 = vmatpush1.msra.mxu0 0.0
    %1061 = vmatprep.subr.mxu0 0.0
    %1062 = vmatpush1.msra.mxu0 0.0
    %1063 = vmatprep.subr.mxu0 0.0
    %1064 = vmatpush1.msra.mxu0 0.0
    %1065 = vmatprep.subr.mxu0 0.0
    %1066 = vmatpush1.msra.mxu0 0.0
    %1067 = vmatprep.subr.mxu0 0.0
    %1068 = vmatpush1.msra.mxu0 0.0
    %1069 = vmatprep.subr.mxu0 0.0
    %1070 = vmatpush1.msra.mxu0 0.0
    %1071 = vmatprep.subr.mxu0 0.0
    %1072 = vmatpush1.msra.mxu0 0.0
    %1073 = vmatprep.subr.mxu0 0.0
    %1074 = vmatpush1.msra.mxu0 0.0
    %1075 = vmatprep.subr.mxu0 0.0
    %1076 = vmatpush1.msra.mxu0 0.0
    %1077 = vmatprep.subr.mxu0 0.0
    %1078 = vmatpush1.msra.mxu0 0.0
    %1079 = vmatprep.subr.mxu0 0.0
    %1080 = vmatpush1.msra.mxu0 0.0
    %1081 = vmatprep.subr.mxu0 0.0
    %1082 = vmatpush1.msra.mxu0 0.0
    %1083 = vmatprep.subr.mxu0 0.0
    %1084 = vmatpush1.msra.mxu0 0.0
    %1085 = vmatprep.subr.mxu0 0.0
    %1086 = vmatpush1.msra.mxu0 0.0
    %1087 = vmatprep.subr.mxu0 0.0
    %1088 = vmatpush1.msra.mxu0 0.0
    %1089 = vmatprep.subr.mxu0 0.0
    %1090 = vmatpush1.msra.mxu0 0.0
    %1091 = vmatprep.subr.mxu0 0.0
    %1092 = vmatpush1.msra.mxu0 0.0
    %1093 = vmatprep.subr.mxu0 0.0
    %1094 = vmatpush1.msra.mxu0 0.0
    %1095 = vmatprep.subr.mxu0 0.0
    %1096 = vmatpush1.msra.mxu0 0.0
    %1097 = vmatprep.subr.mxu0 0.0
    %1098 = vmatpush1.msra.mxu0 0.0
    %1099 = vmatprep.subr.mxu0 0.0
    %1100 = vmatpush1.msra.mxu0 0.0
    %1101 = vmatprep.subr.mxu0 0.0
    %1102 = vmatpush1.msra.mxu0 0.0
    %1103 = vmatprep.subr.mxu0 0.0
    %1104 = vmatpush1.msra.mxu0 0.0
    %1105 = vmatprep.subr.mxu0 0.0
    %1106 = vmatpush1.msra.mxu0 0.0
    %1107 = vmatprep.mubr.f32.mxu0 0.0
    %1108 = vmatmul.mubr.f32.gmra.mrb[0].mxu0 %v1041
    %v1109 = vpop.f32.mrb[0].mxu0
    %v1110 = vadd.f32 0.0, %v1109
    %v1111 = vpop.f32.mrb[0].mxu0
    %1112 = vdwg.mxu0
    %v1114 = vrot.slane %v1110, 4
    %v1116 = vadd.f32 %v933, %v1114
    %v1117 = vxor.u32 %v1116, 2147483648
    %v1118 = vmul.f32 %v1117, 1.442695
    %v1119 = vpow.pop %v1118
    %v1120 = vadd.f32 %v1119, 1.0
    %v1121 = vrcp.pop %v1120
    %v1122 = vmul.f32 1.0, %v1121
    %v1123 = vtanh.pop %v1116
    %v1125 = vrot.slane %v1031, 4
    %v1127 = vmul.f32 %v1122, %v1125
    %1129 = vrot.lane.b32.xlu0 %v1123, 64
    %v1130 = vpop.permute.xlu0 %1129
    %v1132 = vmul.f32 %v1122, %v1130
    %1134 = vrot.lane.b32.xlu0 %v1132, 32
    %v1135 = vpop.permute.xlu0 %1134
    %v1137 = vadd.f32 %v1127, %v1135
    %v1138 = vtanh.pop %v1137
    %1140 = vrot.lane.b32.xlu0 %v1138, 64
    %v1141 = vpop.permute.xlu0 %1140
    %v1143 = vmul.f32 %v1122, %v1141
    %v1146 = vrot.slane %v1143, 4
    %1147 = vrot.lane.b32.xlu0 %v1146, 32
    %v1148 = vpop.permute.xlu0 %1147
    %vm1150 = vcmask 130048
    %v1151 = vsel %vm1150, %v398, %v1148
    %1152 = vrot.lane.b32.xlu0 %v501, 32
    %v1153 = vpop.permute.xlu0 %1152
    %v1155 = vrot.slane %v1037, 4
    %1156 = vrot.lane.b32.xlu0 %v1155, 32
    %v1157 = vpop.permute.xlu0 %1156
    %v1159 = vsel %vm1150, %v1153, %v1157
    %v1162 = vsel %vm1150, %v612, %v937
    %1163 = vrot.lane.b32.xlu0 %v715, 32
    %v1164 = vpop.permute.xlu0 %1163
    %v1166 = vrot.slane %v823, 4
    %1167 = vrot.lane.b32.xlu0 %v1166, 32
    %v1168 = vpop.permute.xlu0 %1167
    %v1170 = vsel %vm1150, %v1164, %v1168
    %v1173 = vsel %vm1150, %v826, %v723
    %1174 = vrot.lane.b32.xlu0 %v929, 32
    %v1175 = vpop.permute.xlu0 %1174
    %v1177 = vrot.slane %v609, 4
    %1178 = vrot.lane.b32.xlu0 %v1177, 32
    %v1179 = vpop.permute.xlu0 %1178
    %v1181 = vsel %vm1150, %v1175, %v1179
    %v1184 = vsel %vm1150, %v1040, %v509
    %1185 = vrot.lane.b32.xlu0 %v1143, 32
    %v1186 = vpop.permute.xlu0 %1185
    %v1188 = vrot.slane %v395, 4
    %1189 = vrot.lane.b32.xlu0 %v1188, 32
    %v1190 = vpop.permute.xlu0 %1189
    %v1192 = vsel %vm1150, %v1186, %v1190
    %vm1193 = vcmask 1043456
    %v1194 = vsel %vm1193, %v1151, %v1159
    %v1195 = vsel %vm1193, %v1162, %v1170
    %v1196 = vsel %vm1193, %v1173, %v1181
    %v1197 = vsel %vm1193, %v1184, %v1192
    %v1198 = vld [vmem:[%s6] sm:$0xff]
    %v1199 = vld [vmem:[%s6 + $0x8] sm:$0xff]
    %v1200 = vld [vmem:[%s6 + $0x10] sm:$0xff]
    %v1201 = vld [vmem:[%s6 + $0x18] sm:$0xff]
    %v1202 = vld [vmem:[%s7] sm:$0xff]
    %v1203 = vld [vmem:[%s7 + $0x8] sm:$0xff]
    %v1204 = vld [vmem:[%s7 + $0x10] sm:$0xff]
    %v1205 = vld [vmem:[%s7 + $0x18] sm:$0xff]
    %v1206 = vld [vmem:[%s8] sm:$0x1]
    %v1208 = vlaneseq
    %v1209 = vshrl.u32 %v1208, 7
    %v1210 = vsub.s32 0, %v1209
    %v1211 = vrot.slane %v1206, %v1210
    %v1214 = vsel %vm196, %v1194, 0
    %v1217 = vsel %vm196, %v1195, 0
    %v1220 = vsel %vm196, %v1196, 0
    %v1223 = vsel %vm196, %v1197, 0
    %1225 = vmatprep.subr.mxu0 0.0
    %1226 = vmatpush1.msra.mxu0 %v1198
    %1227 = vmatprep.subr.mxu0 0.0
    %1228 = vmatpush1.msra.mxu0 %v1199
    %1229 = vmatprep.subr.mxu0 0.0
    %1230 = vmatpush1.msra.mxu0 %v1200
    %1231 = vmatprep.subr.mxu0 0.0
    %1232 = vmatpush1.msra.mxu0 %v1201
    %1233 = vmatprep.subr.mxu0 0.0
    %1234 = vmatpush1.msra.mxu0 0.0
    %1235 = vmatprep.subr.mxu0 0.0
    %1236 = vmatpush1.msra.mxu0 0.0
    %1237 = vmatprep.subr.mxu0 0.0
    %1238 = vmatpush1.msra.mxu0 0.0
    %1239 = vmatprep.subr.mxu0 0.0
    %1240 = vmatpush1.msra.mxu0 0.0
    %1241 = vmatprep.subr.mxu0 0.0
    %1242 = vmatpush1.msra.mxu0 0.0
    %1243 = vmatprep.subr.mxu0 0.0
    %1244 = vmatpush1.msra.mxu0 0.0
    %1245 = vmatprep.subr.mxu0 0.0
    %1246 = vmatpush1.msra.mxu0 0.0
    %1247 = vmatprep.subr.mxu0 0.0
    %1248 = vmatpush1.msra.mxu0 0.0
    %1249 = vmatprep.subr.mxu0 0.0
    %1250 = vmatpush1.msra.mxu0 0.0
    %1251 = vmatprep.subr.mxu0 0.0
    %1252 = vmatpush1.msra.mxu0 0.0
    %1253 = vmatprep.subr.mxu0 0.0
    %1254 = vmatpush1.msra.mxu0 0.0
    %1255 = vmatprep.subr.mxu0 0.0
    %1256 = vmatpush1.msra.mxu0 0.0
    %1257 = vmatprep.subr.mxu0 0.0
    %1258 = vmatpush1.msra.mxu0 0.0
    %1259 = vmatprep.subr.mxu0 0.0
    %1260 = vmatpush1.msra.mxu0 0.0
    %1261 = vmatprep.subr.mxu0 0.0
    %1262 = vmatpush1.msra.mxu0 0.0
    %1263 = vmatprep.subr.mxu0 0.0
    %1264 = vmatpush1.msra.mxu0 0.0
    %1265 = vmatprep.subr.mxu0 0.0
    %1266 = vmatpush1.msra.mxu0 0.0
    %1267 = vmatprep.subr.mxu0 0.0
    %1268 = vmatpush1.msra.mxu0 0.0
    %1269 = vmatprep.subr.mxu0 0.0
    %1270 = vmatpush1.msra.mxu0 0.0
    %1271 = vmatprep.subr.mxu0 0.0
    %1272 = vmatpush1.msra.mxu0 0.0
    %1273 = vmatprep.subr.mxu0 0.0
    %1274 = vmatpush1.msra.mxu0 0.0
    %1275 = vmatprep.subr.mxu0 0.0
    %1276 = vmatpush1.msra.mxu0 0.0
    %1277 = vmatprep.subr.mxu0 0.0
    %1278 = vmatpush1.msra.mxu0 0.0
    %1279 = vmatprep.subr.mxu0 0.0
    %1280 = vmatpush1.msra.mxu0 0.0
    %1281 = vmatprep.subr.mxu0 0.0
    %1282 = vmatpush1.msra.mxu0 0.0
    %1283 = vmatprep.subr.mxu0 0.0
    %1284 = vmatpush1.msra.mxu0 0.0
    %1285 = vmatprep.subr.mxu0 0.0
    %1286 = vmatpush1.msra.mxu0 0.0
    %1287 = vmatprep.subr.mxu0 0.0
    %1288 = vmatpush1.msra.mxu0 0.0
    %1289 = vmatprep.mubr.f32.mxu0 0.0
    %1290 = vmatmul.mubr.f32.gmra.mrb[0].mxu0 %v1214
    %v1291 = vpop.f32.mrb[0].mxu0
    %v1292 = vadd.f32 %v1211, %v1291
    %v1293 = vpop.f32.mrb[0].mxu0
    %1294 = vmatprep.mubr.f32.mxu0 0.0
    %1295 = vmatmul.mubr.f32.gmra.mrb[0].mxu0 %v1217
    %v1296 = vpop.f32.mrb[0].mxu0
    %v1297 = vadd.f32 %v1211, %v1296
    %v1298 = vpop.f32.mrb[0].mxu0
    %1299 = vmatprep.mubr.f32.mxu0 0.0
    %1300 = vmatmul.mubr.f32.gmra.mrb[0].mxu0 %v1220
    %v1301 = vpop.f32.mrb[0].mxu0
    %v1302 = vadd.f32 %v1211, %v1301
    %v1303 = vpop.f32.mrb[0].mxu0
    %1304 = vmatprep.mubr.f32.mxu0 0.0
    %1305 = vmatmul.mubr.f32.gmra.mrb[0].mxu0 %v1223
    %v1306 = vpop.f32.mrb[0].mxu0
    %v1307 = vadd.f32 %v1211, %v1306
    %v1308 = vpop.f32.mrb[0].mxu0
    %1309 = vdwg.mxu0
    %v1311 = vrot.slane %v1307, 4
    %v1313 = vsel %vm59, %v1292, %v1311
    %1314 = vmatprep.subr.mxu0 0.0
    %1315 = vmatpush1.msra.mxu0 %v1202
    %1316 = vmatprep.subr.mxu0 0.0
    %1317 = vmatpush1.msra.mxu0 %v1203
    %1318 = vmatprep.subr.mxu0 0.0
    %1319 = vmatpush1.msra.mxu0 %v1204
    %1320 = vmatprep.subr.mxu0 0.0
    %1321 = vmatpush1.msra.mxu0 %v1205
    %1322 = vmatprep.subr.mxu0 0.0
    %1323 = vmatpush1.msra.mxu0 0.0
    %1324 = vmatprep.subr.mxu0 0.0
    %1325 = vmatpush1.msra.mxu0 0.0
    %1326 = vmatprep.subr.mxu0 0.0
    %1327 = vmatpush1.msra.mxu0 0.0
    %1328 = vmatprep.subr.mxu0 0.0
    %1329 = vmatpush1.msra.mxu0 0.0
    %1330 = vmatprep.subr.mxu0 0.0
    %1331 = vmatpush1.msra.mxu0 0.0
    %1332 = vmatprep.subr.mxu0 0.0
    %1333 = vmatpush1.msra.mxu0 0.0
    %1334 = vmatprep.subr.mxu0 0.0
    %1335 = vmatpush1.msra.mxu0 0.0
    %1336 = vmatprep.subr.mxu0 0.0
    %1337 = vmatpush1.msra.mxu0 0.0
    %1338 = vmatprep.subr.mxu0 0.0
    %1339 = vmatpush1.msra.mxu0 0.0
    %1340 = vmatprep.subr.mxu0 0.0
    %1341 = vmatpush1.msra.mxu0 0.0
    %1342 = vmatprep.subr.mxu0 0.0
    %1343 = vmatpush1.msra.mxu0 0.0
    %1344 = vmatprep.subr.mxu0 0.0
    %1345 = vmatpush1.msra.mxu0 0.0
    %1346 = vmatprep.subr.mxu0 0.0
    %1347 = vmatpush1.msra.mxu0 0.0
    %1348 = vmatprep.subr.mxu0 0.0
    %1349 = vmatpush1.msra.mxu0 0.0
    %1350 = vmatprep.subr.mxu0 0.0
    %1351 = vmatpush1.msra.mxu0 0.0
    %1352 = vmatprep.subr.mxu0 0.0
    %1353 = vmatpush1.msra.mxu0 0.0
    %1354 = vmatprep.subr.mxu0 0.0
    %1355 = vmatpush1.msra.mxu0 0.0
    %1356 = vmatprep.subr.mxu0 0.0
    %1357 = vmatpush1.msra.mxu0 0.0
    %1358 = vmatprep.subr.mxu0 0.0
    %1359 = vmatpush1.msra.mxu0 0.0
    %1360 = vmatprep.subr.mxu0 0.0
    %1361 = vmatpush1.msra.mxu0 0.0
    %1362 = vmatprep.subr.mxu0 0.0
    %1363 = vmatpush1.msra.mxu0 0.0
    %1364 = vmatprep.subr.mxu0 0.0
    %1365 = vmatpush1.msra.mxu0 0.0
    %1366 = vmatprep.subr.mxu0 0.0
    %1367 = vmatpush1.msra.mxu0 0.0
    %1368 = vmatprep.subr.mxu0 0.0
    %1369 = vmatpush1.msra.mxu0 0.0
    %1370 = vmatprep.subr.mxu0 0.0
    %1371 = vmatpush1.msra.mxu0 0.0
    %1372 = vmatprep.subr.mxu0 0.0
    %1373 = vmatpush1.msra.mxu0 0.0
    %1374 = vmatprep.subr.mxu0 0.0
    %1375 = vmatpush1.msra.mxu0 0.0
    %1376 = vmatprep.subr.mxu0 0.0
    %1377 = vmatpush1.msra.mxu0 0.0
    %1378 = vmatprep.mubr.f32.mxu0 0.0
    %1379 = vmatmul.mubr.f32.gmra.mrb[0].mxu0 %v299
    %v1380 = vpop.f32.mrb[0].mxu0
    %v1381 = vadd.f32 0.0, %v1380
    %v1382 = vpop.f32.mrb[0].mxu0
    %1383 = vdwg.mxu0
    %v1384 = vadd.f32 %v1313, %v1381
    %v1385 = vxor.u32 %v1384, 2147483648
    %v1386 = vmul.f32 %v1385, 1.442695
    %v1387 = vpow.pop %v1386
    %v1388 = vadd.f32 %v1387, 1.0
    %v1389 = vrcp.pop %v1388
    %v1390 = vmul.f32 1.0, %v1389
    %v1391 = vtanh.pop %v1384
    %v1392 = vmul.f32 %v1390, 0.0
    %1394 = vrot.lane.b32.xlu0 %v1391, 64
    %v1395 = vpop.permute.xlu0 %1394
    %v1397 = vmul.f32 %v1390, %v1395
    %1399 = vrot.lane.b32.xlu0 %v1397, 32
    %v1400 = vpop.permute.xlu0 %1399
    %v1402 = vadd.f32 %v1392, %v1400
    %v1403 = vtanh.pop %v1402
    %1405 = vrot.lane.b32.xlu0 %v1403, 64
    %v1406 = vpop.permute.xlu0 %1405
    %v1408 = vmul.f32 %v1390, %v1406
    %1410 = vrot.lane.b32.xlu0 %v1408, 32
    %v1411 = vpop.permute.xlu0 %1410
    %v1412 = vsel %vm196, %v1411, 0
    %1414 = vmatprep.subr.mxu0 0.0
    %1415 = vmatpush1.msra.mxu0 %v1202
    %1416 = vmatprep.subr.mxu0 0.0
    %1417 = vmatpush1.msra.mxu0 %v1203
    %1418 = vmatprep.subr.mxu0 0.0
    %1419 = vmatpush1.msra.mxu0 %v1204
    %1420 = vmatprep.subr.mxu0 0.0
    %1421 = vmatpush1.msra.mxu0 %v1205
    %1422 = vmatprep.subr.mxu0 0.0
    %1423 = vmatpush1.msra.mxu0 0.0
    %1424 = vmatprep.subr.mxu0 0.0
    %1425 = vmatpush1.msra.mxu0 0.0
    %1426 = vmatprep.subr.mxu0 0.0
    %1427 = vmatpush1.msra.mxu0 0.0
    %1428 = vmatprep.subr.mxu0 0.0
    %1429 = vmatpush1.msra.mxu0 0.0
    %1430 = vmatprep.subr.mxu0 0.0
    %1431 = vmatpush1.msra.mxu0 0.0
    %1432 = vmatprep.subr.mxu0 0.0
    %1433 = vmatpush1.msra.mxu0 0.0
    %1434 = vmatprep.subr.mxu0 0.0
    %1435 = vmatpush1.msra.mxu0 0.0
    %1436 = vmatprep.subr.mxu0 0.0
    %1437 = vmatpush1.msra.mxu0 0.0
    %1438 = vmatprep.subr.mxu0 0.0
    %1439 = vmatpush1.msra.mxu0 0.0
    %1440 = vmatprep.subr.mxu0 0.0
    %1441 = vmatpush1.msra.mxu0 0.0
    %1442 = vmatprep.subr.mxu0 0.0
    %1443 = vmatpush1.msra.mxu0 0.0
    %1444 = vmatprep.subr.mxu0 0.0
    %1445 = vmatpush1.msra.mxu0 0.0
    %1446 = vmatprep.subr.mxu0 0.0
    %1447 = vmatpush1.msra.mxu0 0.0
    %1448 = vmatprep.subr.mxu0 0.0
    %1449 = vmatpush1.msra.mxu0 0.0
    %1450 = vmatprep.subr.mxu0 0.0
    %1451 = vmatpush1.msra.mxu0 0.0
    %1452 = vmatprep.subr.mxu0 0.0
    %1453 = vmatpush1.msra.mxu0 0.0
    %1454 = vmatprep.subr.mxu0 0.0
    %1455 = vmatpush1.msra.mxu0 0.0
    %1456 = vmatprep.subr.mxu0 0.0
    %1457 = vmatpush1.msra.mxu0 0.0
    %1458 = vmatprep.subr.mxu0 0.0
    %1459 = vmatpush1.msra.mxu0 0.0
    %1460 = vmatprep.subr.mxu0 0.0
    %1461 = vmatpush1.msra.mxu0 0.0
    %1462 = vmatprep.subr.mxu0 0.0
    %1463 = vmatpush1.msra.mxu0 0.0
    %1464 = vmatprep.subr.mxu0 0.0
    %1465 = vmatpush1.msra.mxu0 0.0
    %1466 = vmatprep.subr.mxu0 0.0
    %1467 = vmatpush1.msra.mxu0 0.0
    %1468 = vmatprep.subr.mxu0 0.0
    %1469 = vmatpush1.msra.mxu0 0.0
    %1470 = vmatprep.subr.mxu0 0.0
    %1471 = vmatpush1.msra.mxu0 0.0
    %1472 = vmatprep.subr.mxu0 0.0
    %1473 = vmatpush1.msra.mxu0 0.0
    %1474 = vmatprep.subr.mxu0 0.0
    %1475 = vmatpush1.msra.mxu0 0.0
    %1476 = vmatprep.subr.mxu0 0.0
    %1477 = vmatpush1.msra.mxu0 0.0
    %1478 = vmatprep.mubr.f32.mxu0 0.0
    %1479 = vmatmul.mubr.f32.gmra.mrb[0].mxu0 %v1412
    %v1480 = vpop.f32.mrb[0].mxu0
    %v1481 = vadd.f32 0.0, %v1480
    %v1482 = vpop.f32.mrb[0].mxu0
    %1483 = vdwg.mxu0
    %v1485 = vrot.slane %v1481, 4
    %v1487 = vadd.f32 %v1313, %v1485
    %v1488 = vxor.u32 %v1487, 2147483648
    %v1489 = vmul.f32 %v1488, 1.442695
    %v1490 = vpow.pop %v1489
    %v1491 = vadd.f32 %v1490, 1.0
    %v1492 = vrcp.pop %v1491
    %v1493 = vmul.f32 1.0, %v1492
    %v1494 = vtanh.pop %v1487
    %v1496 = vrot.slane %v1402, 4
    %v1498 = vmul.f32 %v1493, %v1496
    %1500 = vrot.lane.b32.xlu0 %v1494, 64
    %v1501 = vpop.permute.xlu0 %1500
    %v1503 = vmul.f32 %v1493, %v1501
    %1505 = vrot.lane.b32.xlu0 %v1503, 32
    %v1506 = vpop.permute.xlu0 %1505
    %v1508 = vadd.f32 %v1498, %v1506
    %v1509 = vtanh.pop %v1508
    %1511 = vrot.lane.b32.xlu0 %v1509, 64
    %v1512 = vpop.permute.xlu0 %1511
    %v1514 = vmul.f32 %v1493, %v1512
    %v1516 = vrot.slane %v1302, 4
    %v1518 = vsel %vm59, %v1297, %v1516
    %v1520 = vrot.slane %v1514, 4
    %1521 = vrot.lane.b32.xlu0 %v1520, 32
    %v1522 = vpop.permute.xlu0 %1521
    %v1523 = vsel %vm196, %v1522, 0
    %1525 = vmatprep.subr.mxu0 0.0
    %1526 = vmatpush1.msra.mxu0 %v1202
    %1527 = vmatprep.subr.mxu0 0.0
    %1528 = vmatpush1.msra.mxu0 %v1203
    %1529 = vmatprep.subr.mxu0 0.0
    %1530 = vmatpush1.msra.mxu0 %v1204
    %1531 = vmatprep.subr.mxu0 0.0
    %1532 = vmatpush1.msra.mxu0 %v1205
    %1533 = vmatprep.subr.mxu0 0.0
    %1534 = vmatpush1.msra.mxu0 0.0
    %1535 = vmatprep.subr.mxu0 0.0
    %1536 = vmatpush1.msra.mxu0 0.0
    %1537 = vmatprep.subr.mxu0 0.0
    %1538 = vmatpush1.msra.mxu0 0.0
    %1539 = vmatprep.subr.mxu0 0.0
    %1540 = vmatpush1.msra.mxu0 0.0
    %1541 = vmatprep.subr.mxu0 0.0
    %1542 = vmatpush1.msra.mxu0 0.0
    %1543 = vmatprep.subr.mxu0 0.0
    %1544 = vmatpush1.msra.mxu0 0.0
    %1545 = vmatprep.subr.mxu0 0.0
    %1546 = vmatpush1.msra.mxu0 0.0
    %1547 = vmatprep.subr.mxu0 0.0
    %1548 = vmatpush1.msra.mxu0 0.0
    %1549 = vmatprep.subr.mxu0 0.0
    %1550 = vmatpush1.msra.mxu0 0.0
    %1551 = vmatprep.subr.mxu0 0.0
    %1552 = vmatpush1.msra.mxu0 0.0
    %1553 = vmatprep.subr.mxu0 0.0
    %1554 = vmatpush1.msra.mxu0 0.0
    %1555 = vmatprep.subr.mxu0 0.0
    %1556 = vmatpush1.msra.mxu0 0.0
    %1557 = vmatprep.subr.mxu0 0.0
    %1558 = vmatpush1.msra.mxu0 0.0
    %1559 = vmatprep.subr.mxu0 0.0
    %1560 = vmatpush1.msra.mxu0 0.0
    %1561 = vmatprep.subr.mxu0 0.0
    %1562 = vmatpush1.msra.mxu0 0.0
    %1563 = vmatprep.subr.mxu0 0.0
    %1564 = vmatpush1.msra.mxu0 0.0
    %1565 = vmatprep.subr.mxu0 0.0
    %1566 = vmatpush1.msra.mxu0 0.0
    %1567 = vmatprep.subr.mxu0 0.0
    %1568 = vmatpush1.msra.mxu0 0.0
    %1569 = vmatprep.subr.mxu0 0.0
    %1570 = vmatpush1.msra.mxu0 0.0
    %1571 = vmatprep.subr.mxu0 0.0
    %1572 = vmatpush1.msra.mxu0 0.0
    %1573 = vmatprep.subr.mxu0 0.0
    %1574 = vmatpush1.msra.mxu0 0.0
    %1575 = vmatprep.subr.mxu0 0.0
    %1576 = vmatpush1.msra.mxu0 0.0
    %1577 = vmatprep.subr.mxu0 0.0
    %1578 = vmatpush1.msra.mxu0 0.0
    %1579 = vmatprep.subr.mxu0 0.0
    %1580 = vmatpush1.msra.mxu0 0.0
    %1581 = vmatprep.subr.mxu0 0.0
    %1582 = vmatpush1.msra.mxu0 0.0
    %1583 = vmatprep.subr.mxu0 0.0
    %1584 = vmatpush1.msra.mxu0 0.0
    %1585 = vmatprep.subr.mxu0 0.0
    %1586 = vmatpush1.msra.mxu0 0.0
    %1587 = vmatprep.subr.mxu0 0.0
    %1588 = vmatpush1.msra.mxu0 0.0
    %1589 = vmatprep.mubr.f32.mxu0 0.0
    %1590 = vmatmul.mubr.f32.gmra.mrb[0].mxu0 %v1523
    %v1591 = vpop.f32.mrb[0].mxu0
    %v1592 = vadd.f32 0.0, %v1591
    %v1593 = vpop.f32.mrb[0].mxu0
    %1594 = vdwg.mxu0
    %v1595 = vadd.f32 %v1518, %v1592
    %v1596 = vxor.u32 %v1595, 2147483648
    %v1597 = vmul.f32 %v1596, 1.442695
    %v1598 = vpow.pop %v1597
    %v1599 = vadd.f32 %v1598, 1.0
    %v1600 = vrcp.pop %v1599
    %v1601 = vmul.f32 1.0, %v1600
    %v1602 = vtanh.pop %v1595
    %v1604 = vrot.slane %v1508, 4
    %v1606 = vmul.f32 %v1601, %v1604
    %1608 = vrot.lane.b32.xlu0 %v1602, 64
    %v1609 = vpop.permute.xlu0 %1608
    %v1611 = vmul.f32 %v1601, %v1609
    %1613 = vrot.lane.b32.xlu0 %v1611, 32
    %v1614 = vpop.permute.xlu0 %1613
    %v1616 = vadd.f32 %v1606, %v1614
    %v1617 = vtanh.pop %v1616
    %1619 = vrot.lane.b32.xlu0 %v1617, 64
    %v1620 = vpop.permute.xlu0 %1619
    %v1622 = vmul.f32 %v1601, %v1620
    %1624 = vrot.lane.b32.xlu0 %v1622, 32
    %v1625 = vpop.permute.xlu0 %1624
    %v1626 = vsel %vm196, %v1625, 0
    %1628 = vmatprep.subr.mxu0 0.0
    %1629 = vmatpush1.msra.mxu0 %v1202
    %1630 = vmatprep.subr.mxu0 0.0
    %1631 = vmatpush1.msra.mxu0 %v1203
    %1632 = vmatprep.subr.mxu0 0.0
    %1633 = vmatpush1.msra.mxu0 %v1204
    %1634 = vmatprep.subr.mxu0 0.0
    %1635 = vmatpush1.msra.mxu0 %v1205
    %1636 = vmatprep.subr.mxu0 0.0
    %1637 = vmatpush1.msra.mxu0 0.0
    %1638 = vmatprep.subr.mxu0 0.0
    %1639 = vmatpush1.msra.mxu0 0.0
    %1640 = vmatprep.subr.mxu0 0.0
    %1641 = vmatpush1.msra.mxu0 0.0
    %1642 = vmatprep.subr.mxu0 0.0
    %1643 = vmatpush1.msra.mxu0 0.0
    %1644 = vmatprep.subr.mxu0 0.0
    %1645 = vmatpush1.msra.mxu0 0.0
    %1646 = vmatprep.subr.mxu0 0.0
    %1647 = vmatpush1.msra.mxu0 0.0
    %1648 = vmatprep.subr.mxu0 0.0
    %1649 = vmatpush1.msra.mxu0 0.0
    %1650 = vmatprep.subr.mxu0 0.0
    %1651 = vmatpush1.msra.mxu0 0.0
    %1652 = vmatprep.subr.mxu0 0.0
    %1653 = vmatpush1.msra.mxu0 0.0
    %1654 = vmatprep.subr.mxu0 0.0
    %1655 = vmatpush1.msra.mxu0 0.0
    %1656 = vmatprep.subr.mxu0 0.0
    %1657 = vmatpush1.msra.mxu0 0.0
    %1658 = vmatprep.subr.mxu0 0.0
    %1659 = vmatpush1.msra.mxu0 0.0
    %1660 = vmatprep.subr.mxu0 0.0
    %1661 = vmatpush1.msra.mxu0 0.0
    %1662 = vmatprep.subr.mxu0 0.0
    %1663 = vmatpush1.msra.mxu0 0.0
    %1664 = vmatprep.subr.mxu0 0.0
    %1665 = vmatpush1.msra.mxu0 0.0
    %1666 = vmatprep.subr.mxu0 0.0
    %1667 = vmatpush1.msra.mxu0 0.0
    %1668 = vmatprep.subr.mxu0 0.0
    %1669 = vmatpush1.msra.mxu0 0.0
    %1670 = vmatprep.subr.mxu0 0.0
    %1671 = vmatpush1.msra.mxu0 0.0
    %1672 = vmatprep.subr.mxu0 0.0
    %1673 = vmatpush1.msra.mxu0 0.0
    %1674 = vmatprep.subr.mxu0 0.0
    %1675 = vmatpush1.msra.mxu0 0.0
    %1676 = vmatprep.subr.mxu0 0.0
    %1677 = vmatpush1.msra.mxu0 0.0
    %1678 = vmatprep.subr.mxu0 0.0
    %1679 = vmatpush1.msra.mxu0 0.0
    %1680 = vmatprep.subr.mxu0 0.0
    %1681 = vmatpush1.msra.mxu0 0.0
    %1682 = vmatprep.subr.mxu0 0.0
    %1683 = vmatpush1.msra.mxu0 0.0
    %1684 = vmatprep.subr.mxu0 0.0
    %1685 = vmatpush1.msra.mxu0 0.0
    %1686 = vmatprep.subr.mxu0 0.0
    %1687 = vmatpush1.msra.mxu0 0.0
    %1688 = vmatprep.subr.mxu0 0.0
    %1689 = vmatpush1.msra.mxu0 0.0
    %1690 = vmatprep.subr.mxu0 0.0
    %1691 = vmatpush1.msra.mxu0 0.0
    %1692 = vmatprep.mubr.f32.mxu0 0.0
    %1693 = vmatmul.mubr.f32.gmra.mrb[0].mxu0 %v1626
    %v1694 = vpop.f32.mrb[0].mxu0
    %v1695 = vadd.f32 0.0, %v1694
    %v1696 = vpop.f32.mrb[0].mxu0
    %1697 = vdwg.mxu0
    %v1699 = vrot.slane %v1695, 4
    %v1701 = vadd.f32 %v1518, %v1699
    %v1702 = vxor.u32 %v1701, 2147483648
    %v1703 = vmul.f32 %v1702, 1.442695
    %v1704 = vpow.pop %v1703
    %v1705 = vadd.f32 %v1704, 1.0
    %v1706 = vrcp.pop %v1705
    %v1707 = vmul.f32 1.0, %v1706
    %v1708 = vtanh.pop %v1701
    %v1710 = vrot.slane %v1616, 4
    %v1712 = vmul.f32 %v1707, %v1710
    %1714 = vrot.lane.b32.xlu0 %v1708, 64
    %v1715 = vpop.permute.xlu0 %1714
    %v1717 = vmul.f32 %v1707, %v1715
    %1719 = vrot.lane.b32.xlu0 %v1717, 32
    %v1720 = vpop.permute.xlu0 %1719
    %v1722 = vadd.f32 %v1712, %v1720
    %v1723 = vtanh.pop %v1722
    %1725 = vrot.lane.b32.xlu0 %v1723, 64
    %v1726 = vpop.permute.xlu0 %1725
    %v1728 = vmul.f32 %v1707, %v1726
    %v1730 = vrot.slane %v1297, 4
    %v1732 = vsel %vm59, %v1302, %v1730
    %v1734 = vrot.slane %v1728, 4
    %1735 = vrot.lane.b32.xlu0 %v1734, 32
    %v1736 = vpop.permute.xlu0 %1735
    %v1737 = vsel %vm196, %v1736, 0
    %1739 = vmatprep.subr.mxu0 0.0
    %1740 = vmatpush1.msra.mxu0 %v1202
    %1741 = vmatprep.subr.mxu0 0.0
    %1742 = vmatpush1.msra.mxu0 %v1203
    %1743 = vmatprep.subr.mxu0 0.0
    %1744 = vmatpush1.msra.mxu0 %v1204
    %1745 = vmatprep.subr.mxu0 0.0
    %1746 = vmatpush1.msra.mxu0 %v1205
    %1747 = vmatprep.subr.mxu0 0.0
    %1748 = vmatpush1.msra.mxu0 0.0
    %1749 = vmatprep.subr.mxu0 0.0
    %1750 = vmatpush1.msra.mxu0 0.0
    %1751 = vmatprep.subr.mxu0 0.0
    %1752 = vmatpush1.msra.mxu0 0.0
    %1753 = vmatprep.subr.mxu0 0.0
    %1754 = vmatpush1.msra.mxu0 0.0
    %1755 = vmatprep.subr.mxu0 0.0
    %1756 = vmatpush1.msra.mxu0 0.0
    %1757 = vmatprep.subr.mxu0 0.0
    %1758 = vmatpush1.msra.mxu0 0.0
    %1759 = vmatprep.subr.mxu0 0.0
    %1760 = vmatpush1.msra.mxu0 0.0
    %1761 = vmatprep.subr.mxu0 0.0
    %1762 = vmatpush1.msra.mxu0 0.0
    %1763 = vmatprep.subr.mxu0 0.0
    %1764 = vmatpush1.msra.mxu0 0.0
    %1765 = vmatprep.subr.mxu0 0.0
    %1766 = vmatpush1.msra.mxu0 0.0
    %1767 = vmatprep.subr.mxu0 0.0
    %1768 = vmatpush1.msra.mxu0 0.0
    %1769 = vmatprep.subr.mxu0 0.0
    %1770 = vmatpush1.msra.mxu0 0.0
    %1771 = vmatprep.subr.mxu0 0.0
    %1772 = vmatpush1.msra.mxu0 0.0
    %1773 = vmatprep.subr.mxu0 0.0
    %1774 = vmatpush1.msra.mxu0 0.0
    %1775 = vmatprep.subr.mxu0 0.0
    %1776 = vmatpush1.msra.mxu0 0.0
    %1777 = vmatprep.subr.mxu0 0.0
    %1778 = vmatpush1.msra.mxu0 0.0
    %1779 = vmatprep.subr.mxu0 0.0
    %1780 = vmatpush1.msra.mxu0 0.0
    %1781 = vmatprep.subr.mxu0 0.0
    %1782 = vmatpush1.msra.mxu0 0.0
    %1783 = vmatprep.subr.mxu0 0.0
    %1784 = vmatpush1.msra.mxu0 0.0
    %1785 = vmatprep.subr.mxu0 0.0
    %1786 = vmatpush1.msra.mxu0 0.0
    %1787 = vmatprep.subr.mxu0 0.0
    %1788 = vmatpush1.msra.mxu0 0.0
    %1789 = vmatprep.subr.mxu0 0.0
    %1790 = vmatpush1.msra.mxu0 0.0
    %1791 = vmatprep.subr.mxu0 0.0
    %1792 = vmatpush1.msra.mxu0 0.0
    %1793 = vmatprep.subr.mxu0 0.0
    %1794 = vmatpush1.msra.mxu0 0.0
    %1795 = vmatprep.subr.mxu0 0.0
    %1796 = vmatpush1.msra.mxu0 0.0
    %1797 = vmatprep.subr.mxu0 0.0
    %1798 = vmatpush1.msra.mxu0 0.0
    %1799 = vmatprep.subr.mxu0 0.0
    %1800 = vmatpush1.msra.mxu0 0.0
    %1801 = vmatprep.subr.mxu0 0.0
    %1802 = vmatpush1.msra.mxu0 0.0
    %1803 = vmatprep.mubr.f32.mxu0 0.0
    %1804 = vmatmul.mubr.f32.gmra.mrb[0].mxu0 %v1737
    %v1805 = vpop.f32.mrb[0].mxu0
    %v1806 = vadd.f32 0.0, %v1805
    %v1807 = vpop.f32.mrb[0].mxu0
    %1808 = vdwg.mxu0
    %v1809 = vadd.f32 %v1732, %v1806
    %v1810 = vxor.u32 %v1809, 2147483648
    %v1811 = vmul.f32 %v1810, 1.442695
    %v1812 = vpow.pop %v1811
    %v1813 = vadd.f32 %v1812, 1.0
    %v1814 = vrcp.pop %v1813
    %v1815 = vmul.f32 1.0, %v1814
    %v1816 = vtanh.pop %v1809
    %v1818 = vrot.slane %v1722, 4
    %v1820 = vmul.f32 %v1815, %v1818
    %1822 = vrot.lane.b32.xlu0 %v1816, 64
    %v1823 = vpop.permute.xlu0 %1822
    %v1825 = vmul.f32 %v1815, %v1823
    %1827 = vrot.lane.b32.xlu0 %v1825, 32
    %v1828 = vpop.permute.xlu0 %1827
    %v1830 = vadd.f32 %v1820, %v1828
    %v1831 = vtanh.pop %v1830
    %1833 = vrot.lane.b32.xlu0 %v1831, 64
    %v1834 = vpop.permute.xlu0 %1833
    %v1836 = vmul.f32 %v1815, %v1834
    %1838 = vrot.lane.b32.xlu0 %v1836, 32
    %v1839 = vpop.permute.xlu0 %1838
    %v1840 = vsel %vm196, %v1839, 0
    %1842 = vmatprep.subr.mxu0 0.0
    %1843 = vmatpush1.msra.mxu0 %v1202
    %1844 = vmatprep.subr.mxu0 0.0
    %1845 = vmatpush1.msra.mxu0 %v1203
    %1846 = vmatprep.subr.mxu0 0.0
    %1847 = vmatpush1.msra.mxu0 %v1204
    %1848 = vmatprep.subr.mxu0 0.0
    %1849 = vmatpush1.msra.mxu0 %v1205
    %1850 = vmatprep.subr.mxu0 0.0
    %1851 = vmatpush1.msra.mxu0 0.0
    %1852 = vmatprep.subr.mxu0 0.0
    %1853 = vmatpush1.msra.mxu0 0.0
    %1854 = vmatprep.subr.mxu0 0.0
    %1855 = vmatpush1.msra.mxu0 0.0
    %1856 = vmatprep.subr.mxu0 0.0
    %1857 = vmatpush1.msra.mxu0 0.0
    %1858 = vmatprep.subr.mxu0 0.0
    %1859 = vmatpush1.msra.mxu0 0.0
    %1860 = vmatprep.subr.mxu0 0.0
    %1861 = vmatpush1.msra.mxu0 0.0
    %1862 = vmatprep.subr.mxu0 0.0
    %1863 = vmatpush1.msra.mxu0 0.0
    %1864 = vmatprep.subr.mxu0 0.0
    %1865 = vmatpush1.msra.mxu0 0.0
    %1866 = vmatprep.subr.mxu0 0.0
    %1867 = vmatpush1.msra.mxu0 0.0
    %1868 = vmatprep.subr.mxu0 0.0
    %1869 = vmatpush1.msra.mxu0 0.0
    %1870 = vmatprep.subr.mxu0 0.0
    %1871 = vmatpush1.msra.mxu0 0.0
    %1872 = vmatprep.subr.mxu0 0.0
    %1873 = vmatpush1.msra.mxu0 0.0
    %1874 = vmatprep.subr.mxu0 0.0
    %1875 = vmatpush1.msra.mxu0 0.0
    %1876 = vmatprep.subr.mxu0 0.0
    %1877 = vmatpush1.msra.mxu0 0.0
    %1878 = vmatprep.subr.mxu0 0.0
    %1879 = vmatpush1.msra.mxu0 0.0
    %1880 = vmatprep.subr.mxu0 0.0
    %1881 = vmatpush1.msra.mxu0 0.0
    %1882 = vmatprep.subr.mxu0 0.0
    %1883 = vmatpush1.msra.mxu0 0.0
    %1884 = vmatprep.subr.mxu0 0.0
    %1885 = vmatpush1.msra.mxu0 0.0
    %1886 = vmatprep.subr.mxu0 0.0
    %1887 = vmatpush1.msra.mxu0 0.0
    %1888 = vmatprep.subr.mxu0 0.0
    %1889 = vmatpush1.msra.mxu0 0.0
    %1890 = vmatprep.subr.mxu0 0.0
    %1891 = vmatpush1.msra.mxu0 0.0
    %1892 = vmatprep.subr.mxu0 0.0
    %1893 = vmatpush1.msra.mxu0 0.0
    %1894 = vmatprep.subr.mxu0 0.0
    %1895 = vmatpush1.msra.mxu0 0.0
    %1896 = vmatprep.subr.mxu0 0.0
    %1897 = vmatpush1.msra.mxu0 0.0
    %1898 = vmatprep.subr.mxu0 0.0
    %1899 = vmatpush1.msra.mxu0 0.0
    %1900 = vmatprep.subr.mxu0 0.0
    %1901 = vmatpush1.msra.mxu0 0.0
    %1902 = vmatprep.subr.mxu0 0.0
    %1903 = vmatpush1.msra.mxu0 0.0
    %1904 = vmatprep.subr.mxu0 0.0
    %1905 = vmatpush1.msra.mxu0 0.0
    %1906 = vmatprep.mubr.f32.mxu0 0.0
    %1907 = vmatmul.mubr.f32.gmra.mrb[0].mxu0 %v1840
    %v1908 = vpop.f32.mrb[0].mxu0
    %v1909 = vadd.f32 0.0, %v1908
    %v1910 = vpop.f32.mrb[0].mxu0
    %1911 = vdwg.mxu0
    %v1913 = vrot.slane %v1909, 4
    %v1915 = vadd.f32 %v1732, %v1913
    %v1916 = vxor.u32 %v1915, 2147483648
    %v1917 = vmul.f32 %v1916, 1.442695
    %v1918 = vpow.pop %v1917
    %v1919 = vadd.f32 %v1918, 1.0
    %v1920 = vrcp.pop %v1919
    %v1921 = vmul.f32 1.0, %v1920
    %v1922 = vtanh.pop %v1915
    %v1924 = vrot.slane %v1830, 4
    %v1926 = vmul.f32 %v1921, %v1924
    %1928 = vrot.lane.b32.xlu0 %v1922, 64
    %v1929 = vpop.permute.xlu0 %1928
    %v1931 = vmul.f32 %v1921, %v1929
    %1933 = vrot.lane.b32.xlu0 %v1931, 32
    %v1934 = vpop.permute.xlu0 %1933
    %v1936 = vadd.f32 %v1926, %v1934
    %v1937 = vtanh.pop %v1936
    %1939 = vrot.lane.b32.xlu0 %v1937, 64
    %v1940 = vpop.permute.xlu0 %1939
    %v1942 = vmul.f32 %v1921, %v1940
    %v1944 = vrot.slane %v1292, 4
    %v1946 = vsel %vm59, %v1307, %v1944
    %v1948 = vrot.slane %v1942, 4
    %1949 = vrot.lane.b32.xlu0 %v1948, 32
    %v1950 = vpop.permute.xlu0 %1949
    %v1951 = vsel %vm196, %v1950, 0
    %1953 = vmatprep.subr.mxu0 0.0
    %1954 = vmatpush1.msra.mxu0 %v1202
    %1955 = vmatprep.subr.mxu0 0.0
    %1956 = vmatpush1.msra.mxu0 %v1203
    %1957 = vmatprep.subr.mxu0 0.0
    %1958 = vmatpush1.msra.mxu0 %v1204
    %1959 = vmatprep.subr.mxu0 0.0
    %1960 = vmatpush1.msra.mxu0 %v1205
    %1961 = vmatprep.subr.mxu0 0.0
    %1962 = vmatpush1.msra.mxu0 0.0
    %1963 = vmatprep.subr.mxu0 0.0
    %1964 = vmatpush1.msra.mxu0 0.0
    %1965 = vmatprep.subr.mxu0 0.0
    %1966 = vmatpush1.msra.mxu0 0.0
    %1967 = vmatprep.subr.mxu0 0.0
    %1968 = vmatpush1.msra.mxu0 0.0
    %1969 = vmatprep.subr.mxu0 0.0
    %1970 = vmatpush1.msra.mxu0 0.0
    %1971 = vmatprep.subr.mxu0 0.0
    %1972 = vmatpush1.msra.mxu0 0.0
    %1973 = vmatprep.subr.mxu0 0.0
    %1974 = vmatpush1.msra.mxu0 0.0
    %1975 = vmatprep.subr.mxu0 0.0
    %1976 = vmatpush1.msra.mxu0 0.0
    %1977 = vmatprep.subr.mxu0 0.0
    %1978 = vmatpush1.msra.mxu0 0.0
    %1979 = vmatprep.subr.mxu0 0.0
    %1980 = vmatpush1.msra.mxu0 0.0
    %1981 = vmatprep.subr.mxu0 0.0
    %1982 = vmatpush1.msra.mxu0 0.0
    %1983 = vmatprep.subr.mxu0 0.0
    %1984 = vmatpush1.msra.mxu0 0.0
    %1985 = vmatprep.subr.mxu0 0.0
    %1986 = vmatpush1.msra.mxu0 0.0
    %1987 = vmatprep.subr.mxu0 0.0
    %1988 = vmatpush1.msra.mxu0 0.0
    %1989 = vmatprep.subr.mxu0 0.0
    %1990 = vmatpush1.msra.mxu0 0.0
    %1991 = vmatprep.subr.mxu0 0.0
    %1992 = vmatpush1.msra.mxu0 0.0
    %1993 = vmatprep.subr.mxu0 0.0
    %1994 = vmatpush1.msra.mxu0 0.0
    %1995 = vmatprep.subr.mxu0 0.0
    %1996 = vmatpush1.msra.mxu0 0.0
    %1997 = vmatprep.subr.mxu0 0.0
    %1998 = vmatpush1.msra.mxu0 0.0
    %1999 = vmatprep.subr.mxu0 0.0
    %2000 = vmatpush1.msra.mxu0 0.0
    %2001 = vmatprep.subr.mxu0 0.0
    %2002 = vmatpush1.msra.mxu0 0.0
    %2003 = vmatprep.subr.mxu0 0.0
    %2004 = vmatpush1.msra.mxu0 0.0
    %2005 = vmatprep.subr.mxu0 0.0
    %2006 = vmatpush1.msra.mxu0 0.0
    %2007 = vmatprep.subr.mxu0 0.0
    %2008 = vmatpush1.msra.mxu0 0.0
    %2009 = vmatprep.subr.mxu0 0.0
    %2010 = vmatpush1.msra.mxu0 0.0
    %2011 = vmatprep.subr.mxu0 0.0
    %2012 = vmatpush1.msra.mxu0 0.0
    %2013 = vmatprep.subr.mxu0 0.0
    %2014 = vmatpush1.msra.mxu0 0.0
    %2015 = vmatprep.subr.mxu0 0.0
    %2016 = vmatpush1.msra.mxu0 0.0
    %2017 = vmatprep.mubr.f32.mxu0 0.0
    %2018 = vmatmul.mubr.f32.gmra.mrb[0].mxu0 %v1951
    %v2019 = vpop.f32.mrb[0].mxu0
    %v2020 = vadd.f32 0.0, %v2019
    %v2021 = vpop.f32.mrb[0].mxu0
    %2022 = vdwg.mxu0
    %v2023 = vadd.f32 %v1946, %v2020
    %v2024 = vxor.u32 %v2023, 2147483648
    %v2025 = vmul.f32 %v2024, 1.442695
    %v2026 = vpow.pop %v2025
    %v2027 = vadd.f32 %v2026, 1.0
    %v2028 = vrcp.pop %v2027
    %v2029 = vmul.f32 1.0, %v2028
    %v2030 = vtanh.pop %v2023
    %v2032 = vrot.slane %v1936, 4
    %v2034 = vmul.f32 %v2029, %v2032
    %2036 = vrot.lane.b32.xlu0 %v2030, 64
    %v2037 = vpop.permute.xlu0 %2036
    %v2039 = vmul.f32 %v2029, %v2037
    %2041 = vrot.lane.b32.xlu0 %v2039, 32
    %v2042 = vpop.permute.xlu0 %2041
    %v2044 = vadd.f32 %v2034, %v2042
    %v2045 = vtanh.pop %v2044
    %2047 = vrot.lane.b32.xlu0 %v2045, 64
    %v2048 = vpop.permute.xlu0 %2047
    %v2050 = vmul.f32 %v2029, %v2048
    %2052 = vrot.lane.b32.xlu0 %v2050, 32
    %v2053 = vpop.permute.xlu0 %2052
    %v2054 = vsel %vm196, %v2053, 0
    %2056 = vmatprep.subr.mxu0 0.0
    %2057 = vmatpush1.msra.mxu0 %v1202
    %2058 = vmatprep.subr.mxu0 0.0
    %2059 = vmatpush1.msra.mxu0 %v1203
    %2060 = vmatprep.subr.mxu0 0.0
    %2061 = vmatpush1.msra.mxu0 %v1204
    %2062 = vmatprep.subr.mxu0 0.0
    %2063 = vmatpush1.msra.mxu0 %v1205
    %2064 = vmatprep.subr.mxu0 0.0
    %2065 = vmatpush1.msra.mxu0 0.0
    %2066 = vmatprep.subr.mxu0 0.0
    %2067 = vmatpush1.msra.mxu0 0.0
    %2068 = vmatprep.subr.mxu0 0.0
    %2069 = vmatpush1.msra.mxu0 0.0
    %2070 = vmatprep.subr.mxu0 0.0
    %2071 = vmatpush1.msra.mxu0 0.0
    %2072 = vmatprep.subr.mxu0 0.0
    %2073 = vmatpush1.msra.mxu0 0.0
    %2074 = vmatprep.subr.mxu0 0.0
    %2075 = vmatpush1.msra.mxu0 0.0
    %2076 = vmatprep.subr.mxu0 0.0
    %2077 = vmatpush1.msra.mxu0 0.0
    %2078 = vmatprep.subr.mxu0 0.0
    %2079 = vmatpush1.msra.mxu0 0.0
    %2080 = vmatprep.subr.mxu0 0.0
    %2081 = vmatpush1.msra.mxu0 0.0
    %2082 = vmatprep.subr.mxu0 0.0
    %2083 = vmatpush1.msra.mxu0 0.0
    %2084 = vmatprep.subr.mxu0 0.0
    %2085 = vmatpush1.msra.mxu0 0.0
    %2086 = vmatprep.subr.mxu0 0.0
    %2087 = vmatpush1.msra.mxu0 0.0
    %2088 = vmatprep.subr.mxu0 0.0
    %2089 = vmatpush1.msra.mxu0 0.0
    %2090 = vmatprep.subr.mxu0 0.0
    %2091 = vmatpush1.msra.mxu0 0.0
    %2092 = vmatprep.subr.mxu0 0.0
    %2093 = vmatpush1.msra.mxu0 0.0
    %2094 = vmatprep.subr.mxu0 0.0
    %2095 = vmatpush1.msra.mxu0 0.0
    %2096 = vmatprep.subr.mxu0 0.0
    %2097 = vmatpush1.msra.mxu0 0.0
    %2098 = vmatprep.subr.mxu0 0.0
    %2099 = vmatpush1.msra.mxu0 0.0
    %2100 = vmatprep.subr.mxu0 0.0
    %2101 = vmatpush1.msra.mxu0 0.0
    %2102 = vmatprep.subr.mxu0 0.0
    %2103 = vmatpush1.msra.mxu0 0.0
    %2104 = vmatprep.subr.mxu0 0.0
    %2105 = vmatpush1.msra.mxu0 0.0
    %2106 = vmatprep.subr.mxu0 0.0
    %2107 = vmatpush1.msra.mxu0 0.0
    %2108 = vmatprep.subr.mxu0 0.0
    %2109 = vmatpush1.msra.mxu0 0.0
    %2110 = vmatprep.subr.mxu0 0.0
    %2111 = vmatpush1.msra.mxu0 0.0
    %2112 = vmatprep.subr.mxu0 0.0
    %2113 = vmatpush1.msra.mxu0 0.0
    %2114 = vmatprep.subr.mxu0 0.0
    %2115 = vmatpush1.msra.mxu0 0.0
    %2116 = vmatprep.subr.mxu0 0.0
    %2117 = vmatpush1.msra.mxu0 0.0
    %2118 = vmatprep.subr.mxu0 0.0
    %2119 = vmatpush1.msra.mxu0 0.0
    %2120 = vmatprep.mubr.f32.mxu0 0.0
    %2121 = vmatmul.mubr.f32.gmra.mrb[0].mxu0 %v2054
    %v2122 = vpop.f32.mrb[0].mxu0
    %v2123 = vadd.f32 0.0, %v2122
    %v2124 = vpop.f32.mrb[0].mxu0
    %2125 = vdwg.mxu0
    %v2127 = vrot.slane %v2123, 4
    %v2129 = vadd.f32 %v1946, %v2127
    %v2130 = vxor.u32 %v2129, 2147483648
    %v2131 = vmul.f32 %v2130, 1.442695
    %v2132 = vpow.pop %v2131
    %v2133 = vadd.f32 %v2132, 1.0
    %v2134 = vrcp.pop %v2133
    %v2135 = vmul.f32 1.0, %v2134
    %v2136 = vtanh.pop %v2129
    %v2138 = vrot.slane %v2044, 4
    %v2140 = vmul.f32 %v2135, %v2138
    %2142 = vrot.lane.b32.xlu0 %v2136, 64
    %v2143 = vpop.permute.xlu0 %2142
    %v2145 = vmul.f32 %v2135, %v2143
    %2147 = vrot.lane.b32.xlu0 %v2145, 32
    %v2148 = vpop.permute.xlu0 %2147
    %v2150 = vadd.f32 %v2140, %v2148
    %v2151 = vtanh.pop %v2150
    %2153 = vrot.lane.b32.xlu0 %v2151, 64
    %v2154 = vpop.permute.xlu0 %2153
    %v2156 = vmul.f32 %v2135, %v2154
    %v2157 = vrot.slane %v1408, 4
    %2158 = vrot.lane.b32.xlu0 %v2157, 112
    %v2159 = vpop.permute.xlu0 %2158
    %v2161 = vadd.f32 %v2156, %v2159
    %v2162 = vld [vmem:[%s9] sm:$0xff]
    %v2163 = vld [vmem:[%s9 + $0x8] sm:$0xff]
    %v2164 = vld [vmem:[%s10] sm:$0x1]
    %v2166 = vlaneseq
    %v2167 = vshrl.u32 %v2166, 7
    %v2168 = vsub.s32 0, %v2167
    %v2169 = vrot.slane %v2164, %v2168
    %v2172 = vrot.slane %v2161, 4
    %2173 = vrot.lane.b32.xlu0 %v2172, 32
    %v2174 = vpop.permute.xlu0 %2173
    %v2175 = vsel %vm1150, %v2174, 0
    %2177 = vmatprep.subr.mxu0 0.0
    %2178 = vmatpush1.msra.mxu0 %v2162
    %2179 = vmatprep.subr.mxu0 0.0
    %2180 = vmatpush1.msra.mxu0 %v2163
    %2181 = vmatprep.subr.mxu0 0.0
    %2182 = vmatpush1.msra.mxu0 0.0
    %2183 = vmatprep.subr.mxu0 0.0
    %2184 = vmatpush1.msra.mxu0 0.0
    %2185 = vmatprep.subr.mxu0 0.0
    %2186 = vmatpush1.msra.mxu0 0.0
    %2187 = vmatprep.subr.mxu0 0.0
    %2188 = vmatpush1.msra.mxu0 0.0
    %2189 = vmatprep.subr.mxu0 0.0
    %2190 = vmatpush1.msra.mxu0 0.0
    %2191 = vmatprep.subr.mxu0 0.0
    %2192 = vmatpush1.msra.mxu0 0.0
    %2193 = vmatprep.subr.mxu0 0.0
    %2194 = vmatpush1.msra.mxu0 0.0
    %2195 = vmatprep.subr.mxu0 0.0
    %2196 = vmatpush1.msra.mxu0 0.0
    %2197 = vmatprep.subr.mxu0 0.0
    %2198 = vmatpush1.msra.mxu0 0.0
    %2199 = vmatprep.subr.mxu0 0.0
    %2200 = vmatpush1.msra.mxu0 0.0
    %2201 = vmatprep.subr.mxu0 0.0
    %2202 = vmatpush1.msra.mxu0 0.0
    %2203 = vmatprep.subr.mxu0 0.0
    %2204 = vmatpush1.msra.mxu0 0.0
    %2205 = vmatprep.subr.mxu0 0.0
    %2206 = vmatpush1.msra.mxu0 0.0
    %2207 = vmatprep.subr.mxu0 0.0
    %2208 = vmatpush1.msra.mxu0 0.0
    %2209 = vmatprep.subr.mxu0 0.0
    %2210 = vmatpush1.msra.mxu0 0.0
    %2211 = vmatprep.subr.mxu0 0.0
    %2212 = vmatpush1.msra.mxu0 0.0
    %2213 = vmatprep.subr.mxu0 0.0
    %2214 = vmatpush1.msra.mxu0 0.0
    %2215 = vmatprep.subr.mxu0 0.0
    %2216 = vmatpush1.msra.mxu0 0.0
    %2217 = vmatprep.subr.mxu0 0.0
    %2218 = vmatpush1.msra.mxu0 0.0
    %2219 = vmatprep.subr.mxu0 0.0
    %2220 = vmatpush1.msra.mxu0 0.0
    %2221 = vmatprep.subr.mxu0 0.0
    %2222 = vmatpush1.msra.mxu0 0.0
    %2223 = vmatprep.subr.mxu0 0.0
    %2224 = vmatpush1.msra.mxu0 0.0
    %2225 = vmatprep.subr.mxu0 0.0
    %2226 = vmatpush1.msra.mxu0 0.0
    %2227 = vmatprep.subr.mxu0 0.0
    %2228 = vmatpush1.msra.mxu0 0.0
    %2229 = vmatprep.subr.mxu0 0.0
    %2230 = vmatpush1.msra.mxu0 0.0
    %2231 = vmatprep.subr.mxu0 0.0
    %2232 = vmatpush1.msra.mxu0 0.0
    %2233 = vmatprep.subr.mxu0 0.0
    %2234 = vmatpush1.msra.mxu0 0.0
    %2235 = vmatprep.subr.mxu0 0.0
    %2236 = vmatpush1.msra.mxu0 0.0
    %2237 = vmatprep.subr.mxu0 0.0
    %2238 = vmatpush1.msra.mxu0 0.0
    %2239 = vmatprep.subr.mxu0 0.0
    %2240 = vmatpush1.msra.mxu0 0.0
    %2241 = vmatprep.mubr.f32.mxu0 0.0
    %2242 = vmatmul.mubr.f32.gmra.mrb[0].mxu0 %v2175
    %v2243 = vpop.f32.mrb[0].mxu0
    %v2244 = vadd.f32 %v2169, %v2243
    %v2245 = vpop.f32.mrb[0].mxu0
    %2246 = vdwg.mxu0
    %v2247 = vmax.f32 %v2244, 0.0
    %v2249 = vrot.slane %v2247, 1
    %2250 = vrot.lane.b32.xlu0 %v2249, 32
    %v2251 = vpop.permute.xlu0 %2250
    %v2253 = vsel %vm196, %v2247, %v2251
    %v2255 = vrot.slane %v2253, 1
    %vm2257 = vcmask 1040384
    %v2258 = vsel %vm2257, %v2253, %v2255
    %v2259 = vld [vmem:[%s11] sm:$0xff]
    %v2260 = vld [vmem:[%s11 + $0x8] sm:$0xff]
    %v2261 = vld [vmem:[%s11 + $0x10] sm:$0xff]
    %v2262 = vld [vmem:[%s11 + $0x18] sm:$0xff]
    %v2263 = vld [vmem:[%s11 + $0x20] sm:$0xff]
    %v2264 = vld [vmem:[%s11 + $0x28] sm:$0xff]
    %v2265 = vld [vmem:[%s11 + $0x30] sm:$0xff]
    %v2266 = vld [vmem:[%s11 + $0x38] sm:$0xff]
    %v2267 = vld [vmem:[%s12] sm:$0x1]
    %v2269 = vlaneseq
    %v2270 = vshrl.u32 %v2269, 7
    %v2271 = vsub.s32 0, %v2270
    %v2272 = vrot.slane %v2267, %v2271
    %v2275 = vsel %vm79, %v2258, 0
    %2277 = vmatprep.subr.mxu0 0.0
    %2278 = vmatpush1.msra.mxu0 %v2259
    %2279 = vmatprep.subr.mxu0 0.0
    %2280 = vmatpush1.msra.mxu0 %v2260
    %2281 = vmatprep.subr.mxu0 0.0
    %2282 = vmatpush1.msra.mxu0 %v2261
    %2283 = vmatprep.subr.mxu0 0.0
    %2284 = vmatpush1.msra.mxu0 %v2262
    %2285 = vmatprep.subr.mxu0 0.0
    %2286 = vmatpush1.msra.mxu0 %v2263
    %2287 = vmatprep.subr.mxu0 0.0
    %2288 = vmatpush1.msra.mxu0 %v2264
    %2289 = vmatprep.subr.mxu0 0.0
    %2290 = vmatpush1.msra.mxu0 %v2265
    %2291 = vmatprep.subr.mxu0 0.0
    %2292 = vmatpush1.msra.mxu0 %v2266
    %2293 = vmatprep.subr.mxu0 0.0
    %2294 = vmatpush1.msra.mxu0 0.0
    %2295 = vmatprep.subr.mxu0 0.0
    %2296 = vmatpush1.msra.mxu0 0.0
    %2297 = vmatprep.subr.mxu0 0.0
    %2298 = vmatpush1.msra.mxu0 0.0
    %2299 = vmatprep.subr.mxu0 0.0
    %2300 = vmatpush1.msra.mxu0 0.0
    %2301 = vmatprep.subr.mxu0 0.0
    %2302 = vmatpush1.msra.mxu0 0.0
    %2303 = vmatprep.subr.mxu0 0.0
    %2304 = vmatpush1.msra.mxu0 0.0
    %2305 = vmatprep.subr.mxu0 0.0
    %2306 = vmatpush1.msra.mxu0 0.0
    %2307 = vmatprep.subr.mxu0 0.0
    %2308 = vmatpush1.msra.mxu0 0.0
    %2309 = vmatprep.subr.mxu0 0.0
    %2310 = vmatpush1.msra.mxu0 0.0
    %2311 = vmatprep.subr.mxu0 0.0
    %2312 = vmatpush1.msra.mxu0 0.0
    %2313 = vmatprep.subr.mxu0 0.0
    %2314 = vmatpush1.msra.mxu0 0.0
    %2315 = vmatprep.subr.mxu0 0.0
    %2316 = vmatpush1.msra.mxu0 0.0
    %2317 = vmatprep.subr.mxu0 0.0
    %2318 = vmatpush1.msra.mxu0 0.0
    %2319 = vmatprep.subr.mxu0 0.0
    %2320 = vmatpush1.msra.mxu0 0.0
    %2321 = vmatprep.subr.mxu0 0.0
    %2322 = vmatpush1.msra.mxu0 0.0
    %2323 = vmatprep.subr.mxu0 0.0
    %2324 = vmatpush1.msra.mxu0 0.0
    %2325 = vmatprep.subr.mxu0 0.0
    %2326 = vmatpush1.msra.mxu0 0.0
    %2327 = vmatprep.subr.mxu0 0.0
    %2328 = vmatpush1.msra.mxu0 0.0
    %2329 = vmatprep.subr.mxu0 0.0
    %2330 = vmatpush1.msra.mxu0 0.0
    %2331 = vmatprep.subr.mxu0 0.0
    %2332 = vmatpush1.msra.mxu0 0.0
    %2333 = vmatprep.subr.mxu0 0.0
    %2334 = vmatpush1.msra.mxu0 0.0
    %2335 = vmatprep.subr.mxu0 0.0
    %2336 = vmatpush1.msra.mxu0 0.0
    %2337 = vmatprep.subr.mxu0 0.0
    %2338 = vmatpush1.msra.mxu0 0.0
    %2339 = vmatprep.subr.mxu0 0.0
    %2340 = vmatpush1.msra.mxu0 0.0
    %2341 = vmatprep.mubr.f32.mxu0 0.0
    %2342 = vmatmul.mubr.f32.gmra.mrb[0].mxu0 %v2275
    %v2343 = vpop.f32.mrb[0].mxu0
    %v2344 = vadd.f32 %v2272, %v2343
    %v2345 = vpop.f32.mrb[0].mxu0
    %2346 = vdwg.mxu0
    %vm2347 = vcmask 41984
    %2348 = vst.msk [vmem:[#allocation2] sm:$0x3] %vm2347, %v2344
    // Predicated region
    $region54: #{lstm_jigsaw_forward.1} parent=1 // pred_check
      _
    $region55: #{lstm_jigsaw_forward.1} parent=1 // pred_check_branch
      %2350 = sbr.rel (0) target = $region57
    $region56: #{lstm_jigsaw_forward.1} parent=1 // pred_region
      %s2352 = ssub.s32 32, 32
      %2353 = vsyncadd [#allocation3], %s2352
      %s2355 = sshll.u32 [#allocation2], 4
      %s2356 = int_to_ptr.vmem [resolvable:$true] %s2355
      %2358 = dma.vmem_to_hbm [thread:$0]  %s2356, 32, %s13, [#allocation3]
    $region57: #{lstm_jigsaw_forward.1} parent=1 // pred_fallthru
      _
    // Predicated region
    $region58: #{lstm_jigsaw_forward.1} parent=1 // pred_check
      _
    $region59: #{lstm_jigsaw_forward.1} parent=1 // pred_check_branch
      %2360 = sbr.rel (0) target = $region61
    $region60: #{lstm_jigsaw_forward.1} parent=1 // pred_region
      %2361 = dma.done [#allocation3], 32
    $region61: #{lstm_jigsaw_forward.1} parent=1 // pred_fallthru
      _
    %2362 = vsyncpa [#allocation3], 1

</llo_original>
